<compile_context>
chip_gen: v6e
topology: v6e:2x2x1
jax: 0.10.0
libtpu: 0.0.40
codegen_flags: <defaults>
</compile_context>

<pallas_src>
import functools

import jax
import jax.numpy as jnp
from jax.experimental import pallas as pl
from jax.experimental.pallas import tpu as pltpu


def _round_up(x, m):
    return ((x + m - 1) // m) * m


_COMPILER_PARAMS = pltpu.CompilerParams(
    dimension_semantics=("parallel",),          # M tiles are independent
    vmem_limit_bytes=32 * 1024 * 1024,          # explicit, portable incl. v7x
)


# ---------------------------------------------------------------------------
# Pallas kernel: act(X @ W + b), M-tiled, bf16 operands, f32 epilogue
# ---------------------------------------------------------------------------
def _matmul_bias_act_kernel(x_ref, w_ref, b_ref, o_ref, *, activation):
    acc = jnp.dot(x_ref[...], w_ref[...], preferred_element_type=jnp.float32)
    acc = acc + b_ref[...]                      # (1, N) broadcasts over rows
    if activation == "relu":
        acc = jnp.maximum(acc, 0.0)
    o_ref[...] = acc.astype(o_ref.dtype)


def pallas_linear(x, w, b, *, activation=None, out_dtype=jnp.float32, tm=256):
    """y = act(x @ w + b).  x:(M,K) bf16, w:(K,N) bf16, b:(1,N) f32."""
    M, K = x.shape
    K2, N = w.shape
    assert K == K2, (K, K2)
    tm = min(tm, _round_up(M, 8))               # small M -> single full block
    m_pad = _round_up(M, tm)
    if m_pad != M:
        x = jnp.pad(x, ((0, m_pad - M), (0, 0)))
    kernel = functools.partial(_matmul_bias_act_kernel, activation=activation)
    y = pl.pallas_call(
        kernel,
        out_shape=jax.ShapeDtypeStruct((m_pad, N), out_dtype),
        grid=(m_pad // tm,),
        in_specs=[
            pl.BlockSpec((tm, K), lambda i: (i, 0)),   # row tile of X
            pl.BlockSpec((K, N), lambda i: (0, 0)),    # whole W (small, resident)
            pl.BlockSpec((1, N), lambda i: (0, 0)),    # bias
        ],
        out_specs=pl.BlockSpec((tm, N), lambda i: (i, 0)),
        compiler_params=_COMPILER_PARAMS,
    )(x, w, b)
    return y[:M] if m_pad != M else y


# ---------------------------------------------------------------------------
# Pallas kernel: fused fc1 + ReLU + fc2 + softmax head
# ---------------------------------------------------------------------------
def _head_kernel(x_ref, w1_ref, b1_ref, w2_ref, b2_ref, o_ref):
    h = jnp.dot(x_ref[...], w1_ref[...], preferred_element_type=jnp.float32)
    h = jnp.maximum(h + b1_ref[...], 0.0)
    logits = jnp.dot(h.astype(w2_ref.dtype), w2_ref[...],
                     preferred_element_type=jnp.float32)
    logits = logits + b2_ref[...]               # padded action cols carry -1e30
    m = jnp.max(logits, axis=-1, keepdims=True)
    e = jnp.exp(logits - m)
    s = jnp.sum(e, axis=-1, keepdims=True)
    inv = pl.reciprocal(s, approx=True)         # EUP slot
    inv = inv * (2.0 - s * inv)                 # one Newton step -> f32 accurate
    o_ref[...] = (e * inv).astype(o_ref.dtype)


def pallas_head(x, w1, b1, w2, b2, *, tm=256):
    M, K = x.shape
    _, H = w1.shape
    _, NP = w2.shape
    tm = min(tm, _round_up(M, 8))
    m_pad = _round_up(M, tm)
    if m_pad != M:
        x = jnp.pad(x, ((0, m_pad - M), (0, 0)))
    y = pl.pallas_call(
        _head_kernel,
        out_shape=jax.ShapeDtypeStruct((m_pad, NP), jnp.float32),
        grid=(m_pad // tm,),
        in_specs=[
            pl.BlockSpec((tm, K), lambda i: (i, 0)),
            pl.BlockSpec((K, H), lambda i: (0, 0)),
            pl.BlockSpec((1, H), lambda i: (0, 0)),
            pl.BlockSpec((H, NP), lambda i: (0, 0)),
            pl.BlockSpec((1, NP), lambda i: (0, 0)),
        ],
        out_specs=pl.BlockSpec((tm, NP), lambda i: (i, 0)),
        compiler_params=_COMPILER_PARAMS,
    )(x, w1, b1, w2, b2)
    return y[:M] if m_pad != M else y


# ---------------------------------------------------------------------------
# Conv layer = im2col (XLA glue, bf16) + Pallas matmul+bias+ReLU
# ---------------------------------------------------------------------------
def _im2col(x_nhwc, kh, kw, stride):
    n, h, w, c = x_nhwc.shape
    oh = (h - kh) // stride + 1
    ow = (w - kw) // stride + 1
    cols = []
    for i in range(kh):
        for j in range(kw):
            cols.append(
                x_nhwc[:, i:i + stride * oh:stride, j:j + stride * ow:stride, :])
    patches = jnp.stack(cols, axis=3)                 # (n, oh, ow, kh*kw, c)
    return patches.reshape(n * oh * ow, kh * kw * c), oh, ow


def conv2d_relu(x_nhwc, w2d, b, kh, kw, stride):
    """Valid conv + ReLU.  w2d: (kh*kw*cin, cout) bf16, b: (1, cout) f32."""
    n = x_nhwc.shape[0]
    cout = w2d.shape[1]
    patches, oh, ow = _im2col(x_nhwc, kh, kw, stride)
    y = pallas_linear(patches, w2d, b, activation="relu", out_dtype=jnp.bfloat16)
    return y.reshape(n, oh, ow, cout)


# ---------------------------------------------------------------------------
# Parameters (PyTorch-equivalent layout) + one-time repack + forward
# ---------------------------------------------------------------------------
def init_params(key, nb_actions):
    ks = jax.random.split(key, 10)

    def nrm(k, shape, scale):
        return (scale * jax.random.normal(k, shape)).astype(jnp.float32)

    return dict(
        conv1_w=nrm(ks[0], (8, 8, 4, 32), 0.05),   conv1_b=nrm(ks[1], (32,), 0.05),
        conv2_w=nrm(ks[2], (4, 4, 32, 64), 0.05),  conv2_b=nrm(ks[3], (64,), 0.05),
        conv3_w=nrm(ks[4], (3, 3, 64, 64), 0.05),  conv3_b=nrm(ks[5], (64,), 0.05),
        fc1_w=nrm(ks[6], (64 * 6 * 6, 512), 0.02), fc1_b=nrm(ks[7], (512,), 0.02),
        fc2_w=nrm(ks[8], (512, nb_actions), 0.02), fc2_b=nrm(ks[9], (nb_actions,), 0.02),
    )


def prepare_params(params, nb_actions):
    """One-time repack: bf16 matmul weights, (1,N) f32 biases, CHW->NHWC
    flatten permutation folded into fc1_w, fc2 padded to 128 lanes with -1e30
    bias on the padded logit columns (so softmax over real actions is exact)."""
    def conv_pack(w_hwio, b):
        kh, kw, cin, cout = w_hwio.shape
        return (w_hwio.reshape(kh * kw * cin, cout).astype(jnp.bfloat16),
                b.reshape(1, cout).astype(jnp.float32))

    c1w, c1b = conv_pack(params["conv1_w"], params["conv1_b"])
    c2w, c2b = conv_pack(params["conv2_w"], params["conv2_b"])
    c3w, c3b = conv_pack(params["conv3_w"], params["conv3_b"])

    # torch flattens conv3's output as (C,H,W); our activations are NHWC, so
    # permute fc1_w's rows once instead of transposing activations every call.
    fc1_w = (params["fc1_w"].reshape(64, 6, 6, 512)
             .transpose(1, 2, 0, 3).reshape(6 * 6 * 64, 512).astype(jnp.bfloat16))
    fc1_b = params["fc1_b"].reshape(1, 512).astype(jnp.float32)

    n_pad = _round_up(nb_actions, 128)
    fc2_w = jnp.zeros((512, n_pad), jnp.float32)
    fc2_w = fc2_w.at[:, :nb_actions].set(params["fc2_w"]).astype(jnp.bfloat16)
    fc2_b = jnp.full((1, n_pad), -1e30, jnp.float32)
    fc2_b = fc2_b.at[0, :nb_actions].set(params["fc2_b"])

    return dict(conv1_w=c1w, conv1_b=c1b, conv2_w=c2w, conv2_b=c2b,
                conv3_w=c3w, conv3_b=c3b,
                fc1_w=fc1_w, fc1_b=fc1_b, fc2_w=fc2_w, fc2_b=fc2_b)


def cnn_policy_forward(prep, x_nchw, nb_actions):
    n = x_nchw.shape[0]
    x = jnp.transpose(x_nchw, (0, 2, 3, 1)).astype(jnp.bfloat16)         # NCHW->NHWC
    x = conv2d_relu(x, prep["conv1_w"], prep["conv1_b"], 8, 8, 4)        # (N,18,18,32)
    x = conv2d_relu(x, prep["conv2_w"], prep["conv2_b"], 4, 4, 2)        # (N, 8, 8,64)
    x = conv2d_relu(x, prep["conv3_w"], prep["conv3_b"], 3, 3, 1)        # (N, 6, 6,64)
    x = x.reshape(n, 6 * 6 * 64)        # NHWC flatten; permutation folded in fc1_w
    probs = pallas_head(x, prep["fc1_w"], prep["fc1_b"],
                        prep["fc2_w"], prep["fc2_b"])                    # (N, 128)
    return probs[:, :nb_actions]


if __name__ == "__main__":
    nb_actions = 6
    batch = 2
    key = jax.random.PRNGKey(0)
    k_params, k_x = jax.random.split(key)

    params = init_params(k_params, nb_actions)
    prep = prepare_params(params, nb_actions)

    # Smallest spatial input consistent with fc1's 64*6*6 in_features:
    # 76 -(k8,s4)-> 18 -(k4,s2)-> 8 -(k3,s1)-> 6.
    x = jax.random.normal(k_x, (batch, 4, 76, 76), dtype=jnp.float32)

    fwd = jax.jit(functools.partial(cnn_policy_forward, nb_actions=nb_actions))
    probs = jax.block_until_ready(fwd(prep, x))

    assert probs.shape == (batch, nb_actions)
    assert probs.dtype == jnp.float32
    assert bool(jnp.all(probs >= 0.0))
    # softmax rows sum to 1
    assert bool(jnp.allclose(jnp.sum(probs, axis=1), 1.0, atol=1e-5))
    print("KERNEL_OK")
</pallas_src>

<mosaic_0001>
module attributes {stable_mosaic.version = 11 : i64} {
  func.func @_matmul_bias_act_kernel(%arg0: i32, %arg1: memref<256x256xbf16, #tpu.memory_space<vmem>>, %arg2: memref<256x32xbf16, #tpu.memory_space<vmem>>, %arg3: memref<1x32xf32, #tpu.memory_space<vmem>>, %arg4: memref<256x32xbf16, #tpu.memory_space<vmem>>) attributes {dimension_semantics = [#tpu.dimension_semantics<parallel>], iteration_bounds = array<i64: 3>, scalar_prefetch = 0 : i64, scratch_operands = 0 : i64, tpu.core_type = #tpu.core_type<tc>, window_params = [{transform_indices = @transform_0, window_bounds = array<i64: 256, 256>}, {pipeline_mode = #tpu.pipeline_mode<synchronous>, transform_indices = @transform_1, window_bounds = array<i64: 256, 32>}, {pipeline_mode = #tpu.pipeline_mode<synchronous>, transform_indices = @transform_2, window_bounds = array<i64: 1, 32>}, {transform_indices = @transform_3, window_bounds = array<i64: 256, 32>}]} {
    %c0 = arith.constant 0 : index
    %c0_0 = arith.constant 0 : index
    %0 = vector.load %arg1[%c0, %c0_0] : memref<256x256xbf16, #tpu.memory_space<vmem>>, vector<256x256xbf16>
    %c0_1 = arith.constant 0 : index
    %c0_2 = arith.constant 0 : index
    %1 = vector.load %arg2[%c0_1, %c0_2] : memref<256x32xbf16, #tpu.memory_space<vmem>>, vector<256x32xbf16>
    %cst = arith.constant dense<0.000000e+00> : vector<256x32xf32>
    %2 = tpu.matmul %0, %1, %cst {dimension_numbers = #tpu.dot_dimension_numbers<[1], [0], [0], [1], [0, 0, 1, 1], [], []>} : vector<256x256xbf16>, vector<256x32xbf16>, vector<256x32xf32> -> vector<256x32xf32>
    %c0_3 = arith.constant 0 : index
    %c0_4 = arith.constant 0 : index
    %3 = vector.load %arg3[%c0_3, %c0_4] : memref<1x32xf32, #tpu.memory_space<vmem>>, vector<1x32xf32>
    %4 = vector.broadcast %3 : vector<1x32xf32> to vector<256x32xf32>
    %5 = arith.addf %2, %4 : vector<256x32xf32>
    %cst_5 = arith.constant 0.000000e+00 : f32
    %6 = vector.broadcast %cst_5 : f32 to vector<256x32xf32>
    %7 = arith.maximumf %5, %6 : vector<256x32xf32>
    %8 = arith.truncf %7 : vector<256x32xf32> to vector<256x32xbf16>
    %c0_6 = arith.constant 0 : index
    %c0_7 = arith.constant 0 : index
    %9 = vector.load %arg4[%c0_6, %c0_7] : memref<256x32xbf16, #tpu.memory_space<vmem>>, vector<256x32xbf16>
    tpu.vector_store %arg4[%c0_6, %c0_7], %8 {strides = array<i32>} : memref<256x32xbf16, #tpu.memory_space<vmem>>, vector<256x32xbf16>,
    return
  }
  func.func @transform_0(%arg0: i32) -> (i32, i32) {
    %c0_i32 = arith.constant 0 : i32
    %c0_i32_0 = arith.constant 0 : i32
    return %arg0, %c0_i32 : i32, i32
  }
  func.func @transform_1(%arg0: i32) -> (i32, i32) {
    %c0_i32 = arith.constant 0 : i32
    %c0_i32_0 = arith.constant 0 : i32
    %c0_i32_1 = arith.constant 0 : i32
    return %c0_i32, %c0_i32_0 : i32, i32
  }
  func.func @transform_2(%arg0: i32) -> (i32, i32) {
    %c0_i32 = arith.constant 0 : i32
    %c0_i32_0 = arith.constant 0 : i32
    %c0_i32_1 = arith.constant 0 : i32
    return %c0_i32, %c0_i32_0 : i32, i32
  }
  func.func @transform_3(%arg0: i32) -> (i32, i32) {
    %c0_i32 = arith.constant 0 : i32
    %c0_i32_0 = arith.constant 0 : i32
    return %arg0, %c0_i32 : i32, i32
  }
}

module attributes {stable_mosaic.version = 11 : i64} {
  func.func @_matmul_bias_act_kernel(%arg0: i32, %arg1: memref<128x512xbf16, #tpu.memory_space<vmem>>, %arg2: memref<512x64xbf16, #tpu.memory_space<vmem>>, %arg3: memref<1x64xf32, #tpu.memory_space<vmem>>, %arg4: memref<128x64xbf16, #tpu.memory_space<vmem>>) attributes {dimension_semantics = [#tpu.dimension_semantics<parallel>], iteration_bounds = array<i64: 1>, scalar_prefetch = 0 : i64, scratch_operands = 0 : i64, tpu.core_type = #tpu.core_type<tc>, window_params = [{transform_indices = @transform_0, window_bounds = array<i64: 128, 512>}, {pipeline_mode = #tpu.pipeline_mode<synchronous>, transform_indices = @transform_1, window_bounds = array<i64: 512, 64>}, {pipeline_mode = #tpu.pipeline_mode<synchronous>, transform_indices = @transform_2, window_bounds = array<i64: 1, 64>}, {transform_indices = @transform_3, window_bounds = array<i64: 128, 64>}]} {
    %c0 = arith.constant 0 : index
    %c0_0 = arith.constant 0 : index
    %0 = vector.load %arg1[%c0, %c0_0] : memref<128x512xbf16, #tpu.memory_space<vmem>>, vector<128x512xbf16>
    %c0_1 = arith.constant 0 : index
    %c0_2 = arith.constant 0 : index
    %1 = vector.load %arg2[%c0_1, %c0_2] : memref<512x64xbf16, #tpu.memory_space<vmem>>, vector<512x64xbf16>
    %cst = arith.constant dense<0.000000e+00> : vector<128x64xf32>
    %2 = tpu.matmul %0, %1, %cst {dimension_numbers = #tpu.dot_dimension_numbers<[1], [0], [0], [1], [0, 0, 1, 1], [], []>} : vector<128x512xbf16>, vector<512x64xbf16>, vector<128x64xf32> -> vector<128x64xf32>
    %c0_3 = arith.constant 0 : index
    %c0_4 = arith.constant 0 : index
    %3 = vector.load %arg3[%c0_3, %c0_4] : memref<1x64xf32, #tpu.memory_space<vmem>>, vector<1x64xf32>
    %4 = vector.broadcast %3 : vector<1x64xf32> to vector<128x64xf32>
    %5 = arith.addf %2, %4 : vector<128x64xf32>
    %cst_5 = arith.constant 0.000000e+00 : f32
    %6 = vector.broadcast %cst_5 : f32 to vector<128x64xf32>
    %7 = arith.maximumf %5, %6 : vector<128x64xf32>
    %8 = arith.truncf %7 : vector<128x64xf32> to vector<128x64xbf16>
    %c0_6 = arith.constant 0 : index
    %c0_7 = arith.constant 0 : index
    %9 = vector.load %arg4[%c0_6, %c0_7] : memref<128x64xbf16, #tpu.memory_space<vmem>>, vector<128x64xbf16>
    tpu.vector_store %arg4[%c0_6, %c0_7], %8 {strides = array<i32>} : memref<128x64xbf16, #tpu.memory_space<vmem>>, vector<128x64xbf16>,
    return
  }
  func.func @transform_0(%arg0: i32) -> (i32, i32) {
    %c0_i32 = arith.constant 0 : i32
    %c0_i32_0 = arith.constant 0 : i32
    return %arg0, %c0_i32 : i32, i32
  }
  func.func @transform_1(%arg0: i32) -> (i32, i32) {
    %c0_i32 = arith.constant 0 : i32
    %c0_i32_0 = arith.constant 0 : i32
    %c0_i32_1 = arith.constant 0 : i32
    return %c0_i32, %c0_i32_0 : i32, i32
  }
  func.func @transform_2(%arg0: i32) -> (i32, i32) {
    %c0_i32 = arith.constant 0 : i32
    %c0_i32_0 = arith.constant 0 : i32
    %c0_i32_1 = arith.constant 0 : i32
    return %c0_i32, %c0_i32_0 : i32, i32
  }
  func.func @transform_3(%arg0: i32) -> (i32, i32) {
    %c0_i32 = arith.constant 0 : i32
    %c0_i32_0 = arith.constant 0 : i32
    return %arg0, %c0_i32 : i32, i32
  }
}

module attributes {stable_mosaic.version = 11 : i64} {
  func.func @_matmul_bias_act_kernel(%arg0: i32, %arg1: memref<72x576xbf16, #tpu.memory_space<vmem>>, %arg2: memref<576x64xbf16, #tpu.memory_space<vmem>>, %arg3: memref<1x64xf32, #tpu.memory_space<vmem>>, %arg4: memref<72x64xbf16, #tpu.memory_space<vmem>>) attributes {dimension_semantics = [#tpu.dimension_semantics<parallel>], iteration_bounds = array<i64: 1>, scalar_prefetch = 0 : i64, scratch_operands = 0 : i64, tpu.core_type = #tpu.core_type<tc>, window_params = [{transform_indices = @transform_0, window_bounds = array<i64: 72, 576>}, {pipeline_mode = #tpu.pipeline_mode<synchronous>, transform_indices = @transform_1, window_bounds = array<i64: 576, 64>}, {pipeline_mode = #tpu.pipeline_mode<synchronous>, transform_indices = @transform_2, window_bounds = array<i64: 1, 64>}, {transform_indices = @transform_3, window_bounds = array<i64: 72, 64>}]} {
    %c0 = arith.constant 0 : index
    %c0_0 = arith.constant 0 : index
    %0 = vector.load %arg1[%c0, %c0_0] : memref<72x576xbf16, #tpu.memory_space<vmem>>, vector<72x576xbf16>
    %c0_1 = arith.constant 0 : index
    %c0_2 = arith.constant 0 : index
    %1 = vector.load %arg2[%c0_1, %c0_2] : memref<576x64xbf16, #tpu.memory_space<vmem>>, vector<576x64xbf16>
    %cst = arith.constant dense<0.000000e+00> : vector<72x64xf32>
    %2 = tpu.matmul %0, %1, %cst {dimension_numbers = #tpu.dot_dimension_numbers<[1], [0], [0], [1], [0, 0, 1, 1], [], []>} : vector<72x576xbf16>, vector<576x64xbf16>, vector<72x64xf32> -> vector<72x64xf32>
    %c0_3 = arith.constant 0 : index
    %c0_4 = arith.constant 0 : index
    %3 = vector.load %arg3[%c0_3, %c0_4] : memref<1x64xf32, #tpu.memory_space<vmem>>, vector<1x64xf32>
    %4 = vector.broadcast %3 : vector<1x64xf32> to vector<72x64xf32>
    %5 = arith.addf %2, %4 : vector<72x64xf32>
    %cst_5 = arith.constant 0.000000e+00 : f32
    %6 = vector.broadcast %cst_5 : f32 to vector<72x64xf32>
    %7 = arith.maximumf %5, %6 : vector<72x64xf32>
    %8 = arith.truncf %7 : vector<72x64xf32> to vector<72x64xbf16>
    %c0_6 = arith.constant 0 : index
    %c0_7 = arith.constant 0 : index
    %9 = vector.load %arg4[%c0_6, %c0_7] : memref<72x64xbf16, #tpu.memory_space<vmem>>, vector<72x64xbf16>
    tpu.vector_store %arg4[%c0_6, %c0_7], %8 {strides = array<i32>} : memref<72x64xbf16, #tpu.memory_space<vmem>>, vector<72x64xbf16>,
    return
  }
  func.func @transform_0(%arg0: i32) -> (i32, i32) {
    %c0_i32 = arith.constant 0 : i32
    %c0_i32_0 = arith.constant 0 : i32
    return %arg0, %c0_i32 : i32, i32
  }
  func.func @transform_1(%arg0: i32) -> (i32, i32) {
    %c0_i32 = arith.constant 0 : i32
    %c0_i32_0 = arith.constant 0 : i32
    %c0_i32_1 = arith.constant 0 : i32
    return %c0_i32, %c0_i32_0 : i32, i32
  }
  func.func @transform_2(%arg0: i32) -> (i32, i32) {
    %c0_i32 = arith.constant 0 : i32
    %c0_i32_0 = arith.constant 0 : i32
    %c0_i32_1 = arith.constant 0 : i32
    return %c0_i32, %c0_i32_0 : i32, i32
  }
  func.func @transform_3(%arg0: i32) -> (i32, i32) {
    %c0_i32 = arith.constant 0 : i32
    %c0_i32_0 = arith.constant 0 : i32
    return %arg0, %c0_i32 : i32, i32
  }
}

module attributes {stable_mosaic.version = 11 : i64} {
  func.func @_head_kernel(%arg0: i32, %arg1: memref<8x2304xbf16, #tpu.memory_space<vmem>>, %arg2: memref<2304x512xbf16, #tpu.memory_space<vmem>>, %arg3: memref<1x512xf32, #tpu.memory_space<vmem>>, %arg4: memref<512x128xbf16, #tpu.memory_space<vmem>>, %arg5: memref<1x128xf32, #tpu.memory_space<vmem>>, %arg6: memref<8x128xf32, #tpu.memory_space<vmem>>) attributes {dimension_semantics = [#tpu.dimension_semantics<parallel>], iteration_bounds = array<i64: 1>, scalar_prefetch = 0 : i64, scratch_operands = 0 : i64, tpu.core_type = #tpu.core_type<tc>, window_params = [{transform_indices = @transform_0, window_bounds = array<i64: 8, 2304>}, {pipeline_mode = #tpu.pipeline_mode<synchronous>, transform_indices = @transform_1, window_bounds = array<i64: 2304, 512>}, {pipeline_mode = #tpu.pipeline_mode<synchronous>, transform_indices = @transform_2, window_bounds = array<i64: 1, 512>}, {pipeline_mode = #tpu.pipeline_mode<synchronous>, transform_indices = @transform_3, window_bounds = array<i64: 512, 128>}, {pipeline_mode = #tpu.pipeline_mode<synchronous>, transform_indices = @transform_4, window_bounds = array<i64: 1, 128>}, {transform_indices = @transform_5, window_bounds = array<i64: 8, 128>}]} {
    %c0 = arith.constant 0 : index
    %c0_0 = arith.constant 0 : index
    %0 = vector.load %arg1[%c0, %c0_0] : memref<8x2304xbf16, #tpu.memory_space<vmem>>, vector<8x2304xbf16>
    %c0_1 = arith.constant 0 : index
    %c0_2 = arith.constant 0 : index
    %1 = vector.load %arg2[%c0_1, %c0_2] : memref<2304x512xbf16, #tpu.memory_space<vmem>>, vector<2304x512xbf16>
    %cst = arith.constant dense<0.000000e+00> : vector<8x512xf32>
    %2 = tpu.matmul %0, %1, %cst {dimension_numbers = #tpu.dot_dimension_numbers<[1], [0], [0], [1], [0, 0, 1, 1], [], []>} : vector<8x2304xbf16>, vector<2304x512xbf16>, vector<8x512xf32> -> vector<8x512xf32>
    %c0_3 = arith.constant 0 : index
    %c0_4 = arith.constant 0 : index
    %3 = vector.load %arg3[%c0_3, %c0_4] : memref<1x512xf32, #tpu.memory_space<vmem>>, vector<1x512xf32>
    %4 = vector.broadcast %3 : vector<1x512xf32> to vector<8x512xf32>
    %5 = arith.addf %2, %4 : vector<8x512xf32>
    %cst_5 = arith.constant 0.000000e+00 : f32
    %6 = vector.broadcast %cst_5 : f32 to vector<8x512xf32>
    %7 = arith.maximumf %5, %6 : vector<8x512xf32>
    %8 = arith.truncf %7 : vector<8x512xf32> to vector<8x512xbf16>
    %c0_6 = arith.constant 0 : index
    %c0_7 = arith.constant 0 : index
    %9 = vector.load %arg4[%c0_6, %c0_7] : memref<512x128xbf16, #tpu.memory_space<vmem>>, vector<512x128xbf16>
    %cst_8 = arith.constant dense<0.000000e+00> : vector<8x128xf32>
    %10 = tpu.matmul %8, %9, %cst_8 {dimension_numbers = #tpu.dot_dimension_numbers<[1], [0], [0], [1], [0, 0, 1, 1], [], []>} : vector<8x512xbf16>, vector<512x128xbf16>, vector<8x128xf32> -> vector<8x128xf32>
    %c0_9 = arith.constant 0 : index
    %c0_10 = arith.constant 0 : index
    %11 = vector.load %arg5[%c0_9, %c0_10] : memref<1x128xf32, #tpu.memory_space<vmem>>, vector<1x128xf32>
    %12 = vector.broadcast %11 : vector<1x128xf32> to vector<8x128xf32>
    %13 = arith.addf %10, %12 : vector<8x128xf32>
    %cst_11 = arith.constant dense<0xFF800000> : vector<8xf32>
    %14 = vector.multi_reduction <maximumf>, %13, %cst_11 [1] : vector<8x128xf32> to vector<8xf32>
    %15 = vector.shape_cast %14 : vector<8xf32> to vector<8x1xf32>
    %16 = vector.broadcast %15 : vector<8x1xf32> to vector<8x128xf32>
    %17 = arith.subf %13, %16 : vector<8x128xf32>
    %18 = math.exp %17 : vector<8x128xf32>
    %cst_12 = arith.constant dense<0.000000e+00> : vector<8xf32>
    %19 = vector.multi_reduction <add>, %18, %cst_12 [1] : vector<8x128xf32> to vector<8xf32>
    %20 = vector.shape_cast %19 : vector<8xf32> to vector<8x1xf32>
    %21 = tpu.reciprocal %20 {approx = true} : vector<8x1xf32> -> vector<8x1xf32>
    %22 = arith.mulf %20, %21 : vector<8x1xf32>
    %cst_13 = arith.constant 2.000000e+00 : f32
    %23 = vector.broadcast %cst_13 : f32 to vector<8x1xf32>
    %24 = arith.subf %23, %22 : vector<8x1xf32>
    %25 = arith.mulf %21, %24 : vector<8x1xf32>
    %26 = vector.broadcast %25 : vector<8x1xf32> to vector<8x128xf32>
    %27 = arith.mulf %18, %26 : vector<8x128xf32>
    %c0_14 = arith.constant 0 : index
    %c0_15 = arith.constant 0 : index
    %28 = vector.load %arg6[%c0_14, %c0_15] : memref<8x128xf32, #tpu.memory_space<vmem>>, vector<8x128xf32>
    tpu.vector_store %arg6[%c0_14, %c0_15], %27 {strides = array<i32>} : memref<8x128xf32, #tpu.memory_space<vmem>>, vector<8x128xf32>,
    return
  }
  func.func @transform_0(%arg0: i32) -> (i32, i32) {
    %c0_i32 = arith.constant 0 : i32
    %c0_i32_0 = arith.constant 0 : i32
    return %arg0, %c0_i32 : i32, i32
  }
  func.func @transform_1(%arg0: i32) -> (i32, i32) {
    %c0_i32 = arith.constant 0 : i32
    %c0_i32_0 = arith.constant 0 : i32
    %c0_i32_1 = arith.constant 0 : i32
    return %c0_i32, %c0_i32_0 : i32, i32
  }
  func.func @transform_2(%arg0: i32) -> (i32, i32) {
    %c0_i32 = arith.constant 0 : i32
    %c0_i32_0 = arith.constant 0 : i32
    %c0_i32_1 = arith.constant 0 : i32
    return %c0_i32, %c0_i32_0 : i32, i32
  }
  func.func @transform_3(%arg0: i32) -> (i32, i32) {
    %c0_i32 = arith.constant 0 : i32
    %c0_i32_0 = arith.constant 0 : i32
    %c0_i32_1 = arith.constant 0 : i32
    return %c0_i32, %c0_i32_0 : i32, i32
  }
  func.func @transform_4(%arg0: i32) -> (i32, i32) {
    %c0_i32 = arith.constant 0 : i32
    %c0_i32_0 = arith.constant 0 : i32
    %c0_i32_1 = arith.constant 0 : i32
    return %c0_i32, %c0_i32_0 : i32, i32
  }
  func.func @transform_5(%arg0: i32) -> (i32, i32) {
    %c0_i32 = arith.constant 0 : i32
    %c0_i32_0 = arith.constant 0 : i32
    return %arg0, %c0_i32 : i32, i32
  }
}

</mosaic_0001>

<llo_original>
// kernel: cnn_policy_forward.4
$region0: #{cnn_policy_forward.4}
  #allocation0 [shape = 'u32[]', space=smem, size = 0x4, offset = 0x4, fixed_abs, tag = 'smem constant byte address 0x4 - core index']
  #allocation1 [shape = 'u32[144,128]{1,0:T(1,128)}', space=vmem, size = 0x12000, scoped, tag = 'internal scratch']
  %s0 = inlined_call_operand.vmem [shape: bf16[768,256], index: 0, kind: input, shape index: {}]
  %s1 = inlined_call_operand.vmem [shape: bf16[256,32], index: 1, kind: input, shape index: {}]
  %s2 = inlined_call_operand.vmem [shape: f32[1,32], index: 2, kind: input, shape index: {}]
  %s3 = inlined_call_operand.vmem [shape: bf16[768,32], index: 3, kind: output, shape index: {}]
  %s4 = sld [smem:[#allocation0]]
  $region45: #{cnn_policy_forward.4} parent=0
    _
  %s6 = ssub.s32 1, %s4
  %s7 = scalar_select 0, %s6, %s4
  loop: start=0, step=1, limit=5
  $region2: #{cnn_policy_forward.4} parent=0 // loop_pre_header
    _
  $region3: #{cnn_policy_forward.4} parent=0 // loop_header
    %s9 = sphi 0, %s13
    %p10 = scmp.ge.s32.totalorder %s9, 5
    %s19 = sphi 0, %s21
    %s22 = sphi 0, %s19
    %s23 = sphi 0, %s22
    %s39 = sphi 0, %s23
    %s43 = sphi 0, %s43
    %s45 = sphi 0, %s43
    %s46 = sphi 0, %s45
    %s60 = sphi 0, %s46
    %s64 = sphi 0, %s64
    %s66 = sphi 0, %s64
    %s67 = sphi 0, %s66
    %s81 = sphi 0, %s67
    %s87 = sphi 0, %s89
    %s90 = sphi 0, %s87
    %s91 = sphi 0, %s90
    %s107 = sphi 0, %s91
  $region4: #{cnn_policy_forward.4} parent=0 // loop_header_branch
    %12 = sbr.rel (%p10) target = $region8
  $region5: #{cnn_policy_forward.4} parent=0 // loop_body
    %s14 = ssub.s32 %s9, 1
    %s15 = ssub.s32 %s9, 2
    %s16 = sadd.s32 %s9, 1
    %s17 = ssub.s32 %s9, %s16
    %p18 = scmp.eq.s32.totalorder %s17, 0
    %s20 = sadd.s32 %s19, 1
    %s21 = scalar_select %p18, %s19, %s20
    %p24 = pneg %p18
    %p25 = scmp.eq.s32.totalorder %s9, 2
    %p26 = por %p24, %p25
    %p27 = scmp.ne.s32.totalorder %s19, %s22
    %p28 = scmp.eq.s32.totalorder %s9, 0
    %p29 = por %p27, %p28
    %p30 = scmp.ne.s32.totalorder %s19, %s22
    %p31 = scmp.eq.s32.totalorder %s14, 2
    %p32 = por %p30, %p31
    %p33 = scmp.ne.s32.totalorder %s22, %s23
    %p34 = scmp.eq.s32.totalorder %s14, 0
    %p35 = por %p33, %p34
    %p36 = scmp.ne.s32.totalorder %s22, %s23
    %p37 = scmp.eq.s32.totalorder %s15, 2
    %p38 = por %p36, %p37
    %p40 = scmp.ne.s32.totalorder %s23, %s39
    %p41 = scmp.eq.s32.totalorder %s15, 0
    %p42 = por %p40, %p41
    %s44 = sadd.s32 %s43, 1
    %p47 = scmp.eq.s32.totalorder %s9, 2
    %p48 = scmp.ne.s32.totalorder %s43, %s45
    %p49 = scmp.eq.s32.totalorder %s9, 0
    %p50 = por %p48, %p49
    %p51 = scmp.ne.s32.totalorder %s43, %s45
    %p52 = scmp.eq.s32.totalorder %s14, 2
    %p53 = por %p51, %p52
    %p54 = scmp.ne.s32.totalorder %s45, %s46
    %p55 = scmp.eq.s32.totalorder %s14, 0
    %p56 = por %p54, %p55
    %p57 = scmp.ne.s32.totalorder %s45, %s46
    %p58 = scmp.eq.s32.totalorder %s15, 2
    %p59 = por %p57, %p58
    %p61 = scmp.ne.s32.totalorder %s46, %s60
    %p62 = scmp.eq.s32.totalorder %s15, 0
    %p63 = por %p61, %p62
    %s65 = sadd.s32 %s64, 1
    %p68 = scmp.eq.s32.totalorder %s9, 2
    %p69 = scmp.ne.s32.totalorder %s64, %s66
    %p70 = scmp.eq.s32.totalorder %s9, 0
    %p71 = por %p69, %p70
    %p72 = scmp.ne.s32.totalorder %s64, %s66
    %p73 = scmp.eq.s32.totalorder %s14, 2
    %p74 = por %p72, %p73
    %p75 = scmp.ne.s32.totalorder %s66, %s67
    %p76 = scmp.eq.s32.totalorder %s14, 0
    %p77 = por %p75, %p76
    %p78 = scmp.ne.s32.totalorder %s66, %s67
    %p79 = scmp.eq.s32.totalorder %s15, 2
    %p80 = por %p78, %p79
    %p82 = scmp.ne.s32.totalorder %s67, %s81
    %p83 = scmp.eq.s32.totalorder %s15, 0
    %p84 = por %p82, %p83
    %s85 = ssub.s32 %s9, %s16
    %p86 = scmp.eq.s32.totalorder %s85, 0
    %s88 = sadd.s32 %s87, 1
    %s89 = scalar_select %p86, %s87, %s88
    %p92 = pneg %p86
    %p93 = scmp.eq.s32.totalorder %s9, 2
    %p94 = por %p92, %p93
    %p95 = scmp.ne.s32.totalorder %s87, %s90
    %p96 = scmp.eq.s32.totalorder %s9, 0
    %p97 = por %p95, %p96
    %p98 = scmp.ne.s32.totalorder %s87, %s90
    %p99 = scmp.eq.s32.totalorder %s14, 2
    %p100 = por %p98, %p99
    %p101 = scmp.ne.s32.totalorder %s90, %s91
    %p102 = scmp.eq.s32.totalorder %s14, 0
    %p103 = por %p101, %p102
    %p104 = scmp.ne.s32.totalorder %s90, %s91
    %p105 = scmp.eq.s32.totalorder %s15, 2
    %p106 = por %p104, %p105
    %p108 = scmp.ne.s32.totalorder %s91, %s107
    %p109 = scmp.eq.s32.totalorder %s15, 0
    %p110 = por %p108, %p109
    %p111 = scmp.le.s32.totalorder 1, %s9
    %p112 = scmp.lt.s32.totalorder %s9, 4
    %p113 = pnand %p111, %p112
    %p114 = pneg %p113
    // Predicated region
    $region9: #{cnn_policy_forward.4} parent=5 // pred_check
      _
    $region10: #{cnn_policy_forward.4} parent=5 // pred_check_branch
      %116 = sbr.rel (%p113) target = $region12
    $region11: #{cnn_policy_forward.4} parent=5 // pred_region
      %s117 = ssub.s32 %s9, 1
      // Predicated region
      $region13: #{cnn_policy_forward.4} parent=11 // pred_check
        %p118 = pneg %p56
      $region14: #{cnn_policy_forward.4} parent=11 // pred_check_branch
        %120 = sbr.rel (%p118) target = $region16
      $region15: #{cnn_policy_forward.4} parent=11 // pred_region
        _
      $region16: #{cnn_policy_forward.4} parent=11 // pred_fallthru
        _
      // Predicated region
      $region17: #{cnn_policy_forward.4} parent=11 // pred_check
        %p121 = pneg %p77
      $region18: #{cnn_policy_forward.4} parent=11 // pred_check_branch
        %123 = sbr.rel (%p121) target = $region20
      $region19: #{cnn_policy_forward.4} parent=11 // pred_region
        _
      $region20: #{cnn_policy_forward.4} parent=11 // pred_fallthru
        _
    $region12: #{cnn_policy_forward.4} parent=5 // pred_fallthru
      _
    %p124 = scmp.lt.s32.totalorder %s9, 3
    // Predicated region
    $region21: #{cnn_policy_forward.4} parent=5 // pred_check
      %p125 = pneg %p124
    $region22: #{cnn_policy_forward.4} parent=5 // pred_check_branch
      %127 = sbr.rel (%p125) target = $region24
    $region23: #{cnn_policy_forward.4} parent=5 // pred_region
      // Predicated region
      $region25: #{cnn_policy_forward.4} parent=23 // pred_check
        %p128 = pneg %p29
      $region26: #{cnn_policy_forward.4} parent=23 // pred_check_branch
        %130 = sbr.rel (%p128) target = $region28
      $region27: #{cnn_policy_forward.4} parent=23 // pred_region
        %s131 = smul.u32 32, %s9
        %p132 = scmp.lt.s32.totalorder %s131, 95
        %s133 = scalar_select %p132, %s131, 95
        %s134 = smul.addr %s133, 2
        %s135 = smul.addr %s134, 4
        %s136 = scalar_lea.vmem %s0, %s135
        %s137 = smul.u32 32, %s9
      $region28: #{cnn_policy_forward.4} parent=23 // pred_fallthru
        _
    $region24: #{cnn_policy_forward.4} parent=5 // pred_fallthru
      _
    %p138 = scmp.le.s32.totalorder 1, %s9
    %p139 = scmp.lt.s32.totalorder %s9, 4
    %p140 = pnand %p138, %p139
    %p141 = pneg %p140
    // Predicated region
    $region29: #{cnn_policy_forward.4} parent=5 // pred_check
      _
    $region30: #{cnn_policy_forward.4} parent=5 // pred_check_branch
      %143 = sbr.rel (%p140) target = $region32
    $region31: #{cnn_policy_forward.4} parent=5 // pred_region
      %s144 = ssub.s32 %s9, 1
      %s145 = smul.u32 32, %s14
      %p146 = scmp.lt.s32.totalorder %s145, 95
      %s147 = scalar_select %p146, %s145, 95
      %s148 = smul.addr %s147, 2
      %s149 = smul.addr %s148, 4
      %s150 = scalar_lea.vmem %s0, %s149
      %p151 = pneg %p35
      %p152 = pneg %p32
      %p153 = pneg %p56
      %p154 = pneg %p53
      %p155 = pneg %p77
      %p156 = pneg %p74
      %p157 = pneg %p103
      %p158 = pneg %p100
      %s159 = smul.u32 32, %s14
      %p160 = scmp.lt.s32.totalorder %s159, 95
      %s161 = scalar_select %p160, %s159, 95
      %s162 = smul.addr %s161, 4
      %s163 = scalar_lea.vmem %s3, %s162
      %s164 = smul.u32 32, %s14
      %p165 = scmp.lt.s32.totalorder %s164, 95
      %s166 = scalar_select %p165, %s164, 95
      %s167 = smul.addr %s166, 2
      %s168 = smul.addr %s167, 4
      %s169 = scalar_lea.vmem %s0, %s168
      %s170 = smul.u32 32, %s14
      %s171 = smul.u32 32, %s14
      %p172 = scmp.lt.s32.totalorder %s171, 95
      %s173 = scalar_select %p172, %s171, 95
      %s174 = smul.addr %s173, 4
      %s175 = scalar_lea.vmem %s3, %s174
      %s176 = smul.u32 32, %s14
      %v178 = vld [vmem:[%s169] sm:$0xff]
      %v179 = vld [vmem:[%s169 + $0x8] sm:$0xff]
      %v180 = vld [vmem:[%s169 + $0x10] sm:$0xff]
      %v181 = vld [vmem:[%s169 + $0x18] sm:$0xff]
      %v182 = vld [vmem:[%s169 + $0x20] sm:$0xff]
      %v183 = vld [vmem:[%s169 + $0x28] sm:$0xff]
      %v184 = vld [vmem:[%s169 + $0x30] sm:$0xff]
      %v185 = vld [vmem:[%s169 + $0x38] sm:$0xff]
      %v186 = vld [vmem:[%s169 + $0x40] sm:$0xff]
      %v187 = vld [vmem:[%s169 + $0x48] sm:$0xff]
      %v188 = vld [vmem:[%s169 + $0x50] sm:$0xff]
      %v189 = vld [vmem:[%s169 + $0x58] sm:$0xff]
      %v190 = vld [vmem:[%s169 + $0x60] sm:$0xff]
      %v191 = vld [vmem:[%s169 + $0x68] sm:$0xff]
      %v192 = vld [vmem:[%s169 + $0x70] sm:$0xff]
      %v193 = vld [vmem:[%s169 + $0x78] sm:$0xff]
      %v194 = vld [vmem:[%s169 + $0x80] sm:$0xff]
      %v195 = vld [vmem:[%s169 + $0x88] sm:$0xff]
      %v196 = vld [vmem:[%s169 + $0x90] sm:$0xff]
      %v197 = vld [vmem:[%s169 + $0x98] sm:$0xff]
      %v198 = vld [vmem:[%s169 + $0xa0] sm:$0xff]
      %v199 = vld [vmem:[%s169 + $0xa8] sm:$0xff]
      %v200 = vld [vmem:[%s169 + $0xb0] sm:$0xff]
      %v201 = vld [vmem:[%s169 + $0xb8] sm:$0xff]
      %v202 = vld [vmem:[%s169 + $0xc0] sm:$0xff]
      %v203 = vld [vmem:[%s169 + $0xc8] sm:$0xff]
      %v204 = vld [vmem:[%s169 + $0xd0] sm:$0xff]
      %v205 = vld [vmem:[%s169 + $0xd8] sm:$0xff]
      %v206 = vld [vmem:[%s169 + $0xe0] sm:$0xff]
      %v207 = vld [vmem:[%s169 + $0xe8] sm:$0xff]
      %v208 = vld [vmem:[%s169 + $0xf0] sm:$0xff]
      %v209 = vld [vmem:[%s169 + $0xf8] sm:$0xff]
      %v210 = vld [vmem:[%s1] sm:$0xf]
      %v211 = vld [vmem:[%s1 + $0x4] sm:$0xf]
      %v212 = vld [vmem:[%s1 + $0x8] sm:$0xf]
      %v213 = vld [vmem:[%s1 + $0xc] sm:$0xf]
      %v214 = vld [vmem:[%s1 + $0x10] sm:$0xf]
      %v215 = vld [vmem:[%s1 + $0x14] sm:$0xf]
      %v216 = vld [vmem:[%s1 + $0x18] sm:$0xf]
      %v217 = vld [vmem:[%s1 + $0x1c] sm:$0xf]
      %v218 = vld [vmem:[%s1 + $0x20] sm:$0xf]
      %v219 = vld [vmem:[%s1 + $0x24] sm:$0xf]
      %v220 = vld [vmem:[%s1 + $0x28] sm:$0xf]
      %v221 = vld [vmem:[%s1 + $0x2c] sm:$0xf]
      %v222 = vld [vmem:[%s1 + $0x30] sm:$0xf]
      %v223 = vld [vmem:[%s1 + $0x34] sm:$0xf]
      %v224 = vld [vmem:[%s1 + $0x38] sm:$0xf]
      %v225 = vld [vmem:[%s1 + $0x3c] sm:$0xf]
      %v226 = vld [vmem:[%s1 + $0x40] sm:$0xf]
      %v227 = vld [vmem:[%s1 + $0x44] sm:$0xf]
      %v228 = vld [vmem:[%s1 + $0x48] sm:$0xf]
      %v229 = vld [vmem:[%s1 + $0x4c] sm:$0xf]
      %v230 = vld [vmem:[%s1 + $0x50] sm:$0xf]
      %v231 = vld [vmem:[%s1 + $0x54] sm:$0xf]
      %v232 = vld [vmem:[%s1 + $0x58] sm:$0xf]
      %v233 = vld [vmem:[%s1 + $0x5c] sm:$0xf]
      %v234 = vld [vmem:[%s1 + $0x60] sm:$0xf]
      %v235 = vld [vmem:[%s1 + $0x64] sm:$0xf]
      %v236 = vld [vmem:[%s1 + $0x68] sm:$0xf]
      %v237 = vld [vmem:[%s1 + $0x6c] sm:$0xf]
      %v238 = vld [vmem:[%s1 + $0x70] sm:$0xf]
      %v239 = vld [vmem:[%s1 + $0x74] sm:$0xf]
      %v240 = vld [vmem:[%s1 + $0x78] sm:$0xf]
      %v241 = vld [vmem:[%s1 + $0x7c] sm:$0xf]
      %v242 = vld [vmem:[%s2] sm:$0x1]
      %v244 = vlaneseq
      %v245 = vshrl.u32 %v244, 7
      %v246 = vsub.s32 0, %v245
      %v247 = vrot.slane %v242, %v246
      %v281 = vunpack.c.l.b16 %v178
      %v282 = vunpack.c.h.b16 %v178
      %v283 = vunpack.c.l.b16 %v179
      %v284 = vunpack.c.h.b16 %v179
      %v285 = vunpack.c.l.b16 %v180
      %v286 = vunpack.c.h.b16 %v180
      %v287 = vunpack.c.l.b16 %v181
      %v288 = vunpack.c.h.b16 %v181
      %v289 = vunpack.c.l.b16 %v182
      %v290 = vunpack.c.h.b16 %v182
      %v291 = vunpack.c.l.b16 %v183
      %v292 = vunpack.c.h.b16 %v183
      %v293 = vunpack.c.l.b16 %v184
      %v294 = vunpack.c.h.b16 %v184
      %v295 = vunpack.c.l.b16 %v185
      %v296 = vunpack.c.h.b16 %v185
      %v297 = vunpack.c.l.b16 %v186
      %v298 = vunpack.c.h.b16 %v186
      %v299 = vunpack.c.l.b16 %v187
      %v300 = vunpack.c.h.b16 %v187
      %v301 = vunpack.c.l.b16 %v188
      %v302 = vunpack.c.h.b16 %v188
      %v303 = vunpack.c.l.b16 %v189
      %v304 = vunpack.c.h.b16 %v189
      %v305 = vunpack.c.l.b16 %v190
      %v306 = vunpack.c.h.b16 %v190
      %v307 = vunpack.c.l.b16 %v191
      %v308 = vunpack.c.h.b16 %v191
      %v309 = vunpack.c.l.b16 %v192
      %v310 = vunpack.c.h.b16 %v192
      %v311 = vunpack.c.l.b16 %v193
      %v312 = vunpack.c.h.b16 %v193
      %v313 = vunpack.c.l.b16 %v194
      %v314 = vunpack.c.h.b16 %v194
      %v315 = vunpack.c.l.b16 %v195
      %v316 = vunpack.c.h.b16 %v195
      %v317 = vunpack.c.l.b16 %v196
      %v318 = vunpack.c.h.b16 %v196
      %v319 = vunpack.c.l.b16 %v197
      %v320 = vunpack.c.h.b16 %v197
      %v321 = vunpack.c.l.b16 %v198
      %v322 = vunpack.c.h.b16 %v198
      %v323 = vunpack.c.l.b16 %v199
      %v324 = vunpack.c.h.b16 %v199
      %v325 = vunpack.c.l.b16 %v200
      %v326 = vunpack.c.h.b16 %v200
      %v327 = vunpack.c.l.b16 %v201
      %v328 = vunpack.c.h.b16 %v201
      %v329 = vunpack.c.l.b16 %v202
      %v330 = vunpack.c.h.b16 %v202
      %v331 = vunpack.c.l.b16 %v203
      %v332 = vunpack.c.h.b16 %v203
      %v333 = vunpack.c.l.b16 %v204
      %v334 = vunpack.c.h.b16 %v204
      %v335 = vunpack.c.l.b16 %v205
      %v336 = vunpack.c.h.b16 %v205
      %v337 = vunpack.c.l.b16 %v206
      %v338 = vunpack.c.h.b16 %v206
      %v339 = vunpack.c.l.b16 %v207
      %v340 = vunpack.c.h.b16 %v207
      %v341 = vunpack.c.l.b16 %v208
      %v342 = vunpack.c.h.b16 %v208
      %v343 = vunpack.c.l.b16 %v209
      %v344 = vunpack.c.h.b16 %v209
      %v345 = vpack.c.b16 %v283, %v281
      %v346 = vpack.c.b16 %v284, %v282
      %v347 = vpack.c.b16 %v287, %v285
      %v348 = vpack.c.b16 %v288, %v286
      %v349 = vpack.c.b16 %v291, %v289
      %v350 = vpack.c.b16 %v292, %v290
      %v351 = vpack.c.b16 %v295, %v293
      %v352 = vpack.c.b16 %v296, %v294
      %v353 = vpack.c.b16 %v299, %v297
      %v354 = vpack.c.b16 %v300, %v298
      %v355 = vpack.c.b16 %v303, %v301
      %v356 = vpack.c.b16 %v304, %v302
      %v357 = vpack.c.b16 %v307, %v305
      %v358 = vpack.c.b16 %v308, %v306
      %v359 = vpack.c.b16 %v311, %v309
      %v360 = vpack.c.b16 %v312, %v310
      %v361 = vpack.c.b16 %v315, %v313
      %v362 = vpack.c.b16 %v316, %v314
      %v363 = vpack.c.b16 %v319, %v317
      %v364 = vpack.c.b16 %v320, %v318
      %v365 = vpack.c.b16 %v323, %v321
      %v366 = vpack.c.b16 %v324, %v322
      %v367 = vpack.c.b16 %v327, %v325
      %v368 = vpack.c.b16 %v328, %v326
      %v369 = vpack.c.b16 %v331, %v329
      %v370 = vpack.c.b16 %v332, %v330
      %v371 = vpack.c.b16 %v335, %v333
      %v372 = vpack.c.b16 %v336, %v334
      %v373 = vpack.c.b16 %v339, %v337
      %v374 = vpack.c.b16 %v340, %v338
      %v375 = vpack.c.b16 %v343, %v341
      %v376 = vpack.c.b16 %v344, %v342
      %v441 = vunpack.c.l.b16 %v210
      %v442 = vunpack.c.l.b16 %v211
      %v443 = vunpack.c.l.b16 %v212
      %v444 = vunpack.c.l.b16 %v213
      %v445 = vunpack.c.l.b16 %v214
      %v446 = vunpack.c.l.b16 %v215
      %v447 = vunpack.c.l.b16 %v216
      %v448 = vunpack.c.l.b16 %v217
      %v449 = vunpack.c.l.b16 %v218
      %v450 = vunpack.c.l.b16 %v219
      %v451 = vunpack.c.l.b16 %v220
      %v452 = vunpack.c.l.b16 %v221
      %v453 = vunpack.c.l.b16 %v222
      %v454 = vunpack.c.l.b16 %v223
      %v455 = vunpack.c.l.b16 %v224
      %v456 = vunpack.c.l.b16 %v225
      %v457 = vunpack.c.l.b16 %v226
      %v458 = vunpack.c.l.b16 %v227
      %v459 = vunpack.c.l.b16 %v228
      %v460 = vunpack.c.l.b16 %v229
      %v461 = vunpack.c.l.b16 %v230
      %v462 = vunpack.c.l.b16 %v231
      %v463 = vunpack.c.l.b16 %v232
      %v464 = vunpack.c.l.b16 %v233
      %v465 = vunpack.c.l.b16 %v234
      %v466 = vunpack.c.l.b16 %v235
      %v467 = vunpack.c.l.b16 %v236
      %v468 = vunpack.c.l.b16 %v237
      %v469 = vunpack.c.l.b16 %v238
      %v470 = vunpack.c.l.b16 %v239
      %v471 = vunpack.c.l.b16 %v240
      %v472 = vunpack.c.l.b16 %v241
      %v473 = vpack.c.b16 %v442, %v441
      %v474 = vpack.c.b16 %v444, %v443
      %v475 = vpack.c.b16 %v446, %v445
      %v476 = vpack.c.b16 %v448, %v447
      %v477 = vpack.c.b16 %v450, %v449
      %v478 = vpack.c.b16 %v452, %v451
      %v479 = vpack.c.b16 %v454, %v453
      %v480 = vpack.c.b16 %v456, %v455
      %v481 = vpack.c.b16 %v458, %v457
      %v482 = vpack.c.b16 %v460, %v459
      %v483 = vpack.c.b16 %v462, %v461
      %v484 = vpack.c.b16 %v464, %v463
      %v485 = vpack.c.b16 %v466, %v465
      %v486 = vpack.c.b16 %v468, %v467
      %v487 = vpack.c.b16 %v470, %v469
      %v488 = vpack.c.b16 %v472, %v471
      %505 = vmatprep.subr.bf16.mxu0 0
      %506 = vmatpush1.bf16.msra.mxu0 %v480
      %507 = vmatprep.subr.bf16.mxu0 0
      %508 = vmatpush1.bf16.msra.mxu0 %v479
      %509 = vmatprep.subr.bf16.mxu0 0
      %510 = vmatpush1.bf16.msra.mxu0 %v478
      %511 = vmatprep.subr.bf16.mxu0 0
      %512 = vmatpush1.bf16.msra.mxu0 %v477
      %513 = vmatprep.subr.bf16.mxu0 0
      %514 = vmatpush1.bf16.msra.mxu0 %v476
      %515 = vmatprep.subr.bf16.mxu0 0
      %516 = vmatpush1.bf16.msra.mxu0 %v475
      %517 = vmatprep.subr.bf16.mxu0 0
      %518 = vmatpush1.bf16.msra.mxu0 %v474
      %519 = vmatprep.subr.bf16.mxu0 0
      %520 = vmatpush1.bf16.msra.mxu0 %v473
      %521 = vmatprep.subr.bf16.mxu0 0
      %522 = vmatpush2.bf16.msra.mxu0 %v488
      %523 = vmatprep.subr.bf16.mxu0 0
      %524 = vmatpush2.bf16.msra.mxu0 %v487
      %525 = vmatprep.subr.bf16.mxu0 0
      %526 = vmatpush2.bf16.msra.mxu0 %v486
      %527 = vmatprep.subr.bf16.mxu0 0
      %528 = vmatpush2.bf16.msra.mxu0 %v485
      %529 = vmatprep.subr.bf16.mxu0 0
      %530 = vmatpush2.bf16.msra.mxu0 %v484
      %531 = vmatprep.subr.bf16.mxu0 0
      %532 = vmatpush2.bf16.msra.mxu0 %v483
      %533 = vmatprep.subr.bf16.mxu0 0
      %534 = vmatpush2.bf16.msra.mxu0 %v482
      %535 = vmatprep.subr.bf16.mxu0 0
      %536 = vmatpush2.bf16.msra.mxu0 %v481
      %537 = vmatprep.mubr.bf16.mxu0 %v346
      %538 = vmatmul.mubr.bf16.gmra.mxu0 %v345
      %v539 = vpop.f32.mrf.mxu0
      %v540 = vadd.f32 %v247, %v539
      %v541 = vpop.f32.mrf.mxu0
      %v542 = vpop.f32.mrf.mxu0
      %v543 = vadd.f32 %v247, %v542
      %v544 = vpop.f32.mrf.mxu0
      %545 = vmatprep.mubr.bf16.mxu0 %v348
      %546 = vmatmul.mubr.bf16.gmra.mxu0 %v347
      %v547 = vpop.f32.mrf.mxu0
      %v548 = vadd.f32 %v247, %v547
      %v549 = vpop.f32.mrf.mxu0
      %v550 = vpop.f32.mrf.mxu0
      %v551 = vadd.f32 %v247, %v550
      %v552 = vpop.f32.mrf.mxu0
      %553 = vmatprep.mubr.bf16.mxu0 %v350
      %554 = vmatmul.mubr.bf16.gmra.mxu0 %v349
      %v555 = vpop.f32.mrf.mxu0
      %v556 = vadd.f32 %v247, %v555
      %v557 = vpop.f32.mrf.mxu0
      %v558 = vpop.f32.mrf.mxu0
      %v559 = vadd.f32 %v247, %v558
      %v560 = vpop.f32.mrf.mxu0
      %561 = vmatprep.mubr.bf16.mxu0 %v352
      %562 = vmatmul.mubr.bf16.gmra.mxu0 %v351
      %v563 = vpop.f32.mrf.mxu0
      %v564 = vadd.f32 %v247, %v563
      %v565 = vpop.f32.mrf.mxu0
      %v566 = vpop.f32.mrf.mxu0
      %v567 = vadd.f32 %v247, %v566
      %v568 = vpop.f32.mrf.mxu0
      %569 = vmatprep.mubr.bf16.mxu0 %v354
      %570 = vmatmul.mubr.bf16.gmra.mxu0 %v353
      %v571 = vpop.f32.mrf.mxu0
      %v572 = vadd.f32 %v247, %v571
      %v573 = vpop.f32.mrf.mxu0
      %v574 = vpop.f32.mrf.mxu0
      %v575 = vadd.f32 %v247, %v574
      %v576 = vpop.f32.mrf.mxu0
      %577 = vmatprep.mubr.bf16.mxu0 %v356
      %578 = vmatmul.mubr.bf16.gmra.mxu0 %v355
      %v579 = vpop.f32.mrf.mxu0
      %v580 = vadd.f32 %v247, %v579
      %v581 = vpop.f32.mrf.mxu0
      %v582 = vpop.f32.mrf.mxu0
      %v583 = vadd.f32 %v247, %v582
      %v584 = vpop.f32.mrf.mxu0
      %585 = vmatprep.mubr.bf16.mxu0 %v358
      %586 = vmatmul.mubr.bf16.gmra.mxu0 %v357
      %v587 = vpop.f32.mrf.mxu0
      %v588 = vadd.f32 %v247, %v587
      %v589 = vpop.f32.mrf.mxu0
      %v590 = vpop.f32.mrf.mxu0
      %v591 = vadd.f32 %v247, %v590
      %v592 = vpop.f32.mrf.mxu0
      %593 = vmatprep.mubr.bf16.mxu0 %v360
      %594 = vmatmul.mubr.bf16.gmra.mxu0 %v359
      %v595 = vpop.f32.mrf.mxu0
      %v596 = vadd.f32 %v247, %v595
      %v597 = vpop.f32.mrf.mxu0
      %v598 = vpop.f32.mrf.mxu0
      %v599 = vadd.f32 %v247, %v598
      %v600 = vpop.f32.mrf.mxu0
      %601 = vmatprep.mubr.bf16.mxu0 %v362
      %602 = vmatmul.mubr.bf16.gmra.mxu0 %v361
      %v603 = vpop.f32.mrf.mxu0
      %v604 = vadd.f32 %v247, %v603
      %v605 = vpop.f32.mrf.mxu0
      %v606 = vpop.f32.mrf.mxu0
      %v607 = vadd.f32 %v247, %v606
      %v608 = vpop.f32.mrf.mxu0
      %609 = vmatprep.mubr.bf16.mxu0 %v364
      %610 = vmatmul.mubr.bf16.gmra.mxu0 %v363
      %v611 = vpop.f32.mrf.mxu0
      %v612 = vadd.f32 %v247, %v611
      %v613 = vpop.f32.mrf.mxu0
      %v614 = vpop.f32.mrf.mxu0
      %v615 = vadd.f32 %v247, %v614
      %v616 = vpop.f32.mrf.mxu0
      %617 = vmatprep.mubr.bf16.mxu0 %v366
      %618 = vmatmul.mubr.bf16.gmra.mxu0 %v365
      %v619 = vpop.f32.mrf.mxu0
      %v620 = vadd.f32 %v247, %v619
      %v621 = vpop.f32.mrf.mxu0
      %v622 = vpop.f32.mrf.mxu0
      %v623 = vadd.f32 %v247, %v622
      %v624 = vpop.f32.mrf.mxu0
      %625 = vmatprep.mubr.bf16.mxu0 %v368
      %626 = vmatmul.mubr.bf16.gmra.mxu0 %v367
      %v627 = vpop.f32.mrf.mxu0
      %v628 = vadd.f32 %v247, %v627
      %v629 = vpop.f32.mrf.mxu0
      %v630 = vpop.f32.mrf.mxu0
      %v631 = vadd.f32 %v247, %v630
      %v632 = vpop.f32.mrf.mxu0
      %633 = vmatprep.mubr.bf16.mxu0 %v370
      %634 = vmatmul.mubr.bf16.gmra.mxu0 %v369
      %v635 = vpop.f32.mrf.mxu0
      %v636 = vadd.f32 %v247, %v635
      %v637 = vpop.f32.mrf.mxu0
      %v638 = vpop.f32.mrf.mxu0
      %v639 = vadd.f32 %v247, %v638
      %v640 = vpop.f32.mrf.mxu0
      %641 = vmatprep.mubr.bf16.mxu0 %v372
      %642 = vmatmul.mubr.bf16.gmra.mxu0 %v371
      %v643 = vpop.f32.mrf.mxu0
      %v644 = vadd.f32 %v247, %v643
      %v645 = vpop.f32.mrf.mxu0
      %v646 = vpop.f32.mrf.mxu0
      %v647 = vadd.f32 %v247, %v646
      %v648 = vpop.f32.mrf.mxu0
      %649 = vmatprep.mubr.bf16.mxu0 %v374
      %650 = vmatmul.mubr.bf16.gmra.mxu0 %v373
      %v651 = vpop.f32.mrf.mxu0
      %v652 = vadd.f32 %v247, %v651
      %v653 = vpop.f32.mrf.mxu0
      %v654 = vpop.f32.mrf.mxu0
      %v655 = vadd.f32 %v247, %v654
      %v656 = vpop.f32.mrf.mxu0
      %657 = vmatprep.mubr.bf16.mxu0 %v376
      %658 = vmatmul.mubr.bf16.gmra.mxu0 %v375
      %v659 = vpop.f32.mrf.mxu0
      %v660 = vadd.f32 %v247, %v659
      %v661 = vpop.f32.mrf.mxu0
      %v662 = vpop.f32.mrf.mxu0
      %v663 = vadd.f32 %v247, %v662
      %v664 = vpop.f32.mrf.mxu0
      %665 = vdwg.mxu0
      %v666 = vmax.f32 %v540, 0.0
      %v667 = vmax.f32 %v543, 0.0
      %v668 = vmax.f32 %v548, 0.0
      %v669 = vmax.f32 %v551, 0.0
      %v670 = vmax.f32 %v556, 0.0
      %v671 = vmax.f32 %v559, 0.0
      %v672 = vmax.f32 %v564, 0.0
      %v673 = vmax.f32 %v567, 0.0
      %v674 = vmax.f32 %v572, 0.0
      %v675 = vmax.f32 %v575, 0.0
      %v676 = vmax.f32 %v580, 0.0
      %v677 = vmax.f32 %v583, 0.0
      %v678 = vmax.f32 %v588, 0.0
      %v679 = vmax.f32 %v591, 0.0
      %v680 = vmax.f32 %v596, 0.0
      %v681 = vmax.f32 %v599, 0.0
      %v682 = vmax.f32 %v604, 0.0
      %v683 = vmax.f32 %v607, 0.0
      %v684 = vmax.f32 %v612, 0.0
      %v685 = vmax.f32 %v615, 0.0
      %v686 = vmax.f32 %v620, 0.0
      %v687 = vmax.f32 %v623, 0.0
      %v688 = vmax.f32 %v628, 0.0
      %v689 = vmax.f32 %v631, 0.0
      %v690 = vmax.f32 %v636, 0.0
      %v691 = vmax.f32 %v639, 0.0
      %v692 = vmax.f32 %v644, 0.0
      %v693 = vmax.f32 %v647, 0.0
      %v694 = vmax.f32 %v652, 0.0
      %v695 = vmax.f32 %v655, 0.0
      %v696 = vmax.f32 %v660, 0.0
      %v697 = vmax.f32 %v663, 0.0
      %v698 = vpack.c.bf16 %v667, %v666
      %v699 = vpack.c.bf16 %v669, %v668
      %v700 = vpack.c.bf16 %v671, %v670
      %v701 = vpack.c.bf16 %v673, %v672
      %v702 = vpack.c.bf16 %v675, %v674
      %v703 = vpack.c.bf16 %v677, %v676
      %v704 = vpack.c.bf16 %v679, %v678
      %v705 = vpack.c.bf16 %v681, %v680
      %v706 = vpack.c.bf16 %v683, %v682
      %v707 = vpack.c.bf16 %v685, %v684
      %v708 = vpack.c.bf16 %v687, %v686
      %v709 = vpack.c.bf16 %v689, %v688
      %v710 = vpack.c.bf16 %v691, %v690
      %v711 = vpack.c.bf16 %v693, %v692
      %v712 = vpack.c.bf16 %v695, %v694
      %v713 = vpack.c.bf16 %v697, %v696
      %v730 = vunpack.c.l.b16 %v698
      %v731 = vunpack.c.h.b16 %v698
      %v732 = vunpack.c.l.b16 %v699
      %v733 = vunpack.c.h.b16 %v699
      %v734 = vunpack.c.l.b16 %v700
      %v735 = vunpack.c.h.b16 %v700
      %v736 = vunpack.c.l.b16 %v701
      %v737 = vunpack.c.h.b16 %v701
      %v738 = vunpack.c.l.b16 %v702
      %v739 = vunpack.c.h.b16 %v702
      %v740 = vunpack.c.l.b16 %v703
      %v741 = vunpack.c.h.b16 %v703
      %v742 = vunpack.c.l.b16 %v704
      %v743 = vunpack.c.h.b16 %v704
      %v744 = vunpack.c.l.b16 %v705
      %v745 = vunpack.c.h.b16 %v705
      %v746 = vunpack.c.l.b16 %v706
      %v747 = vunpack.c.h.b16 %v706
      %v748 = vunpack.c.l.b16 %v707
      %v749 = vunpack.c.h.b16 %v707
      %v750 = vunpack.c.l.b16 %v708
      %v751 = vunpack.c.h.b16 %v708
      %v752 = vunpack.c.l.b16 %v709
      %v753 = vunpack.c.h.b16 %v709
      %v754 = vunpack.c.l.b16 %v710
      %v755 = vunpack.c.h.b16 %v710
      %v756 = vunpack.c.l.b16 %v711
      %v757 = vunpack.c.h.b16 %v711
      %v758 = vunpack.c.l.b16 %v712
      %v759 = vunpack.c.h.b16 %v712
      %v760 = vunpack.c.l.b16 %v713
      %v761 = vunpack.c.h.b16 %v713
      %v762 = vpack.c.b16 %v730, %v730
      %v763 = vpack.c.b16 %v731, %v731
      %v764 = vpack.c.b16 %v732, %v732
      %v765 = vpack.c.b16 %v733, %v733
      %v766 = vpack.c.b16 %v734, %v734
      %v767 = vpack.c.b16 %v735, %v735
      %v768 = vpack.c.b16 %v736, %v736
      %v769 = vpack.c.b16 %v737, %v737
      %v770 = vpack.c.b16 %v738, %v738
      %v771 = vpack.c.b16 %v739, %v739
      %v772 = vpack.c.b16 %v740, %v740
      %v773 = vpack.c.b16 %v741, %v741
      %v774 = vpack.c.b16 %v742, %v742
      %v775 = vpack.c.b16 %v743, %v743
      %v776 = vpack.c.b16 %v744, %v744
      %v777 = vpack.c.b16 %v745, %v745
      %v778 = vpack.c.b16 %v746, %v746
      %v779 = vpack.c.b16 %v747, %v747
      %v780 = vpack.c.b16 %v748, %v748
      %v781 = vpack.c.b16 %v749, %v749
      %v782 = vpack.c.b16 %v750, %v750
      %v783 = vpack.c.b16 %v751, %v751
      %v784 = vpack.c.b16 %v752, %v752
      %v785 = vpack.c.b16 %v753, %v753
      %v786 = vpack.c.b16 %v754, %v754
      %v787 = vpack.c.b16 %v755, %v755
      %v788 = vpack.c.b16 %v756, %v756
      %v789 = vpack.c.b16 %v757, %v757
      %v790 = vpack.c.b16 %v758, %v758
      %v791 = vpack.c.b16 %v759, %v759
      %v792 = vpack.c.b16 %v760, %v760
      %v793 = vpack.c.b16 %v761, %v761
      %vm826 = vcmask 257024
      %827 = vst.msk [vmem:[%s175] sm:$0xf] %vm826, %v762
      %828 = vst.msk [vmem:[%s175 + $0x4] sm:$0xf] %vm826, %v763
      %829 = vst.msk [vmem:[%s175 + $0x8] sm:$0xf] %vm826, %v764
      %830 = vst.msk [vmem:[%s175 + $0xc] sm:$0xf] %vm826, %v765
      %831 = vst.msk [vmem:[%s175 + $0x10] sm:$0xf] %vm826, %v766
      %832 = vst.msk [vmem:[%s175 + $0x14] sm:$0xf] %vm826, %v767
      %833 = vst.msk [vmem:[%s175 + $0x18] sm:$0xf] %vm826, %v768
      %834 = vst.msk [vmem:[%s175 + $0x1c] sm:$0xf] %vm826, %v769
      %835 = vst.msk [vmem:[%s175 + $0x20] sm:$0xf] %vm826, %v770
      %836 = vst.msk [vmem:[%s175 + $0x24] sm:$0xf] %vm826, %v771
      %837 = vst.msk [vmem:[%s175 + $0x28] sm:$0xf] %vm826, %v772
      %838 = vst.msk [vmem:[%s175 + $0x2c] sm:$0xf] %vm826, %v773
      %839 = vst.msk [vmem:[%s175 + $0x30] sm:$0xf] %vm826, %v774
      %840 = vst.msk [vmem:[%s175 + $0x34] sm:$0xf] %vm826, %v775
      %841 = vst.msk [vmem:[%s175 + $0x38] sm:$0xf] %vm826, %v776
      %842 = vst.msk [vmem:[%s175 + $0x3c] sm:$0xf] %vm826, %v777
      %843 = vst.msk [vmem:[%s175 + $0x40] sm:$0xf] %vm826, %v778
      %844 = vst.msk [vmem:[%s175 + $0x44] sm:$0xf] %vm826, %v779
      %845 = vst.msk [vmem:[%s175 + $0x48] sm:$0xf] %vm826, %v780
      %846 = vst.msk [vmem:[%s175 + $0x4c] sm:$0xf] %vm826, %v781
      %847 = vst.msk [vmem:[%s175 + $0x50] sm:$0xf] %vm826, %v782
      %848 = vst.msk [vmem:[%s175 + $0x54] sm:$0xf] %vm826, %v783
      %849 = vst.msk [vmem:[%s175 + $0x58] sm:$0xf] %vm826, %v784
      %850 = vst.msk [vmem:[%s175 + $0x5c] sm:$0xf] %vm826, %v785
      %851 = vst.msk [vmem:[%s175 + $0x60] sm:$0xf] %vm826, %v786
      %852 = vst.msk [vmem:[%s175 + $0x64] sm:$0xf] %vm826, %v787
      %853 = vst.msk [vmem:[%s175 + $0x68] sm:$0xf] %vm826, %v788
      %854 = vst.msk [vmem:[%s175 + $0x6c] sm:$0xf] %vm826, %v789
      %855 = vst.msk [vmem:[%s175 + $0x70] sm:$0xf] %vm826, %v790
      %856 = vst.msk [vmem:[%s175 + $0x74] sm:$0xf] %vm826, %v791
      %857 = vst.msk [vmem:[%s175 + $0x78] sm:$0xf] %vm826, %v792
      %858 = vst.msk [vmem:[%s175 + $0x7c] sm:$0xf] %vm826, %v793
      %s859 = smul.u32 32, %s14
      %p860 = scmp.lt.s32.totalorder %s859, 95
      %s861 = scalar_select %p860, %s859, 95
      %s862 = smul.addr %s861, 4
      %s863 = scalar_lea.vmem %s3, %s862
      // Predicated region
      $region33: #{cnn_policy_forward.4} parent=31 // pred_check
        %p864 = pneg %p100
      $region34: #{cnn_policy_forward.4} parent=31 // pred_check_branch
        %866 = sbr.rel (%p864) target = $region36
      $region35: #{cnn_policy_forward.4} parent=31 // pred_region
        %s867 = smul.u32 32, %s14
      $region36: #{cnn_policy_forward.4} parent=31 // pred_fallthru
        _
    $region32: #{cnn_policy_forward.4} parent=5 // pred_fallthru
      _
    %p868 = scmp.le.s32.totalorder 2, %s9
    // Predicated region
    $region37: #{cnn_policy_forward.4} parent=5 // pred_check
      %p869 = pneg %p868
    $region38: #{cnn_policy_forward.4} parent=5 // pred_check_branch
      %871 = sbr.rel (%p869) target = $region40
    $region39: #{cnn_policy_forward.4} parent=5 // pred_region
      %s872 = ssub.s32 %s9, 2
      // Predicated region
      $region41: #{cnn_policy_forward.4} parent=39 // pred_check
        %p873 = pneg %p106
      $region42: #{cnn_policy_forward.4} parent=39 // pred_check_branch
        %875 = sbr.rel (%p873) target = $region44
      $region43: #{cnn_policy_forward.4} parent=39 // pred_region
        %s876 = smul.u32 32, %s15
        %p877 = scmp.lt.s32.totalorder %s876, 95
        %s878 = scalar_select %p877, %s876, 95
        %s879 = smul.addr %s878, 4
        %s880 = scalar_lea.vmem %s3, %s879
      $region44: #{cnn_policy_forward.4} parent=39 // pred_fallthru
        _
    $region40: #{cnn_policy_forward.4} parent=5 // pred_fallthru
      _
  $region6: #{cnn_policy_forward.4} parent=0 // loop_footer
    %s13 = sadd.s32 1, %s9
  $region7: #{cnn_policy_forward.4} parent=0 // loop_footer_branch
    %8 = sbr.rel target = $region3
  $region8: #{cnn_policy_forward.4} parent=0 // loop_exit
    _

// kernel: cnn_policy_forward.5
$region0: #{cnn_policy_forward.5}
  #allocation0 [shape = 'u32[]', space=smem, size = 0x4, offset = 0x4, fixed_abs, tag = 'smem constant byte address 0x4 - core index']
  #allocation1 [shape = 'u32[144,128]{1,0:T(1,128)}', space=vmem, size = 0x12000, scoped, tag = 'internal scratch']
  %s0 = inlined_call_operand.vmem [shape: bf16[128,512], index: 0, kind: input, shape index: {}]
  %s1 = inlined_call_operand.vmem [shape: bf16[512,64], index: 1, kind: input, shape index: {}]
  %s2 = inlined_call_operand.vmem [shape: f32[1,64], index: 2, kind: input, shape index: {}]
  %s3 = inlined_call_operand.vmem [shape: bf16[128,64], index: 3, kind: output, shape index: {}]
  %s4 = sld [smem:[#allocation0]]
  $region22: #{cnn_policy_forward.5} parent=0
    _
  %s6 = ssub.s32 1, %s4
  %s7 = scalar_select 0, %s6, %s4
  // Predicated region
  $region2: #{cnn_policy_forward.5} parent=0 // pred_check
    _
  $region3: #{cnn_policy_forward.5} parent=0 // pred_check_branch
    %9 = sbr.rel (0) target = $region5
  $region4: #{cnn_policy_forward.5} parent=0 // pred_region
    _
  $region5: #{cnn_policy_forward.5} parent=0 // pred_fallthru
    _
  // Predicated region
  $region6: #{cnn_policy_forward.5} parent=0 // pred_check
    _
  $region7: #{cnn_policy_forward.5} parent=0 // pred_check_branch
    %11 = sbr.rel (0) target = $region9
  $region8: #{cnn_policy_forward.5} parent=0 // pred_region
    _
  $region9: #{cnn_policy_forward.5} parent=0 // pred_fallthru
    _
  // Predicated region
  $region10: #{cnn_policy_forward.5} parent=0 // pred_check
    _
  $region11: #{cnn_policy_forward.5} parent=0 // pred_check_branch
    %13 = sbr.rel (0) target = $region13
  $region12: #{cnn_policy_forward.5} parent=0 // pred_region
    _
  $region13: #{cnn_policy_forward.5} parent=0 // pred_fallthru
    _
  %v15 = vld [vmem:[%s0] sm:$0xff]
  %v16 = vld [vmem:[%s0 + $0x8] sm:$0xff]
  %v17 = vld [vmem:[%s0 + $0x10] sm:$0xff]
  %v18 = vld [vmem:[%s0 + $0x18] sm:$0xff]
  %v19 = vld [vmem:[%s0 + $0x20] sm:$0xff]
  %v20 = vld [vmem:[%s0 + $0x28] sm:$0xff]
  %v21 = vld [vmem:[%s0 + $0x30] sm:$0xff]
  %v22 = vld [vmem:[%s0 + $0x38] sm:$0xff]
  %v23 = vld [vmem:[%s0 + $0x40] sm:$0xff]
  %v24 = vld [vmem:[%s0 + $0x48] sm:$0xff]
  %v25 = vld [vmem:[%s0 + $0x50] sm:$0xff]
  %v26 = vld [vmem:[%s0 + $0x58] sm:$0xff]
  %v27 = vld [vmem:[%s0 + $0x60] sm:$0xff]
  %v28 = vld [vmem:[%s0 + $0x68] sm:$0xff]
  %v29 = vld [vmem:[%s0 + $0x70] sm:$0xff]
  %v30 = vld [vmem:[%s0 + $0x78] sm:$0xff]
  %v31 = vld [vmem:[%s0 + $0x80] sm:$0xff]
  %v32 = vld [vmem:[%s0 + $0x88] sm:$0xff]
  %v33 = vld [vmem:[%s0 + $0x90] sm:$0xff]
  %v34 = vld [vmem:[%s0 + $0x98] sm:$0xff]
  %v35 = vld [vmem:[%s0 + $0xa0] sm:$0xff]
  %v36 = vld [vmem:[%s0 + $0xa8] sm:$0xff]
  %v37 = vld [vmem:[%s0 + $0xb0] sm:$0xff]
  %v38 = vld [vmem:[%s0 + $0xb8] sm:$0xff]
  %v39 = vld [vmem:[%s0 + $0xc0] sm:$0xff]
  %v40 = vld [vmem:[%s0 + $0xc8] sm:$0xff]
  %v41 = vld [vmem:[%s0 + $0xd0] sm:$0xff]
  %v42 = vld [vmem:[%s0 + $0xd8] sm:$0xff]
  %v43 = vld [vmem:[%s0 + $0xe0] sm:$0xff]
  %v44 = vld [vmem:[%s0 + $0xe8] sm:$0xff]
  %v45 = vld [vmem:[%s0 + $0xf0] sm:$0xff]
  %v46 = vld [vmem:[%s0 + $0xf8] sm:$0xff]
  %v47 = vld [vmem:[%s1] sm:$0xf]
  %v48 = vld [vmem:[%s1 + $0x4] sm:$0xf]
  %v49 = vld [vmem:[%s1 + $0x8] sm:$0xf]
  %v50 = vld [vmem:[%s1 + $0xc] sm:$0xf]
  %v51 = vld [vmem:[%s1 + $0x10] sm:$0xf]
  %v52 = vld [vmem:[%s1 + $0x14] sm:$0xf]
  %v53 = vld [vmem:[%s1 + $0x18] sm:$0xf]
  %v54 = vld [vmem:[%s1 + $0x1c] sm:$0xf]
  %v55 = vld [vmem:[%s1 + $0x20] sm:$0xf]
  %v56 = vld [vmem:[%s1 + $0x24] sm:$0xf]
  %v57 = vld [vmem:[%s1 + $0x28] sm:$0xf]
  %v58 = vld [vmem:[%s1 + $0x2c] sm:$0xf]
  %v59 = vld [vmem:[%s1 + $0x30] sm:$0xf]
  %v60 = vld [vmem:[%s1 + $0x34] sm:$0xf]
  %v61 = vld [vmem:[%s1 + $0x38] sm:$0xf]
  %v62 = vld [vmem:[%s1 + $0x3c] sm:$0xf]
  %v63 = vld [vmem:[%s1 + $0x40] sm:$0xf]
  %v64 = vld [vmem:[%s1 + $0x44] sm:$0xf]
  %v65 = vld [vmem:[%s1 + $0x48] sm:$0xf]
  %v66 = vld [vmem:[%s1 + $0x4c] sm:$0xf]
  %v67 = vld [vmem:[%s1 + $0x50] sm:$0xf]
  %v68 = vld [vmem:[%s1 + $0x54] sm:$0xf]
  %v69 = vld [vmem:[%s1 + $0x58] sm:$0xf]
  %v70 = vld [vmem:[%s1 + $0x5c] sm:$0xf]
  %v71 = vld [vmem:[%s1 + $0x60] sm:$0xf]
  %v72 = vld [vmem:[%s1 + $0x64] sm:$0xf]
  %v73 = vld [vmem:[%s1 + $0x68] sm:$0xf]
  %v74 = vld [vmem:[%s1 + $0x6c] sm:$0xf]
  %v75 = vld [vmem:[%s1 + $0x70] sm:$0xf]
  %v76 = vld [vmem:[%s1 + $0x74] sm:$0xf]
  %v77 = vld [vmem:[%s1 + $0x78] sm:$0xf]
  %v78 = vld [vmem:[%s1 + $0x7c] sm:$0xf]
  %v79 = vld [vmem:[%s1 + $0x80] sm:$0xf]
  %v80 = vld [vmem:[%s1 + $0x84] sm:$0xf]
  %v81 = vld [vmem:[%s1 + $0x88] sm:$0xf]
  %v82 = vld [vmem:[%s1 + $0x8c] sm:$0xf]
  %v83 = vld [vmem:[%s1 + $0x90] sm:$0xf]
  %v84 = vld [vmem:[%s1 + $0x94] sm:$0xf]
  %v85 = vld [vmem:[%s1 + $0x98] sm:$0xf]
  %v86 = vld [vmem:[%s1 + $0x9c] sm:$0xf]
  %v87 = vld [vmem:[%s1 + $0xa0] sm:$0xf]
  %v88 = vld [vmem:[%s1 + $0xa4] sm:$0xf]
  %v89 = vld [vmem:[%s1 + $0xa8] sm:$0xf]
  %v90 = vld [vmem:[%s1 + $0xac] sm:$0xf]
  %v91 = vld [vmem:[%s1 + $0xb0] sm:$0xf]
  %v92 = vld [vmem:[%s1 + $0xb4] sm:$0xf]
  %v93 = vld [vmem:[%s1 + $0xb8] sm:$0xf]
  %v94 = vld [vmem:[%s1 + $0xbc] sm:$0xf]
  %v95 = vld [vmem:[%s1 + $0xc0] sm:$0xf]
  %v96 = vld [vmem:[%s1 + $0xc4] sm:$0xf]
  %v97 = vld [vmem:[%s1 + $0xc8] sm:$0xf]
  %v98 = vld [vmem:[%s1 + $0xcc] sm:$0xf]
  %v99 = vld [vmem:[%s1 + $0xd0] sm:$0xf]
  %v100 = vld [vmem:[%s1 + $0xd4] sm:$0xf]
  %v101 = vld [vmem:[%s1 + $0xd8] sm:$0xf]
  %v102 = vld [vmem:[%s1 + $0xdc] sm:$0xf]
  %v103 = vld [vmem:[%s1 + $0xe0] sm:$0xf]
  %v104 = vld [vmem:[%s1 + $0xe4] sm:$0xf]
  %v105 = vld [vmem:[%s1 + $0xe8] sm:$0xf]
  %v106 = vld [vmem:[%s1 + $0xec] sm:$0xf]
  %v107 = vld [vmem:[%s1 + $0xf0] sm:$0xf]
  %v108 = vld [vmem:[%s1 + $0xf4] sm:$0xf]
  %v109 = vld [vmem:[%s1 + $0xf8] sm:$0xf]
  %v110 = vld [vmem:[%s1 + $0xfc] sm:$0xf]
  %v111 = vld [vmem:[%s2] sm:$0x1]
  %v113 = vlaneseq
  %v114 = vshrl.u32 %v113, 7
  %v115 = vsub.s32 0, %v114
  %v116 = vrot.slane %v111, %v115
  %v150 = vunpack.c.l.b16 %v15
  %v151 = vunpack.c.h.b16 %v15
  %v152 = vunpack.c.l.b16 %v16
  %v153 = vunpack.c.h.b16 %v16
  %v154 = vunpack.c.l.b16 %v17
  %v155 = vunpack.c.h.b16 %v17
  %v156 = vunpack.c.l.b16 %v18
  %v157 = vunpack.c.h.b16 %v18
  %v158 = vunpack.c.l.b16 %v19
  %v159 = vunpack.c.h.b16 %v19
  %v160 = vunpack.c.l.b16 %v20
  %v161 = vunpack.c.h.b16 %v20
  %v162 = vunpack.c.l.b16 %v21
  %v163 = vunpack.c.h.b16 %v21
  %v164 = vunpack.c.l.b16 %v22
  %v165 = vunpack.c.h.b16 %v22
  %v166 = vunpack.c.l.b16 %v23
  %v167 = vunpack.c.h.b16 %v23
  %v168 = vunpack.c.l.b16 %v24
  %v169 = vunpack.c.h.b16 %v24
  %v170 = vunpack.c.l.b16 %v25
  %v171 = vunpack.c.h.b16 %v25
  %v172 = vunpack.c.l.b16 %v26
  %v173 = vunpack.c.h.b16 %v26
  %v174 = vunpack.c.l.b16 %v27
  %v175 = vunpack.c.h.b16 %v27
  %v176 = vunpack.c.l.b16 %v28
  %v177 = vunpack.c.h.b16 %v28
  %v178 = vunpack.c.l.b16 %v29
  %v179 = vunpack.c.h.b16 %v29
  %v180 = vunpack.c.l.b16 %v30
  %v181 = vunpack.c.h.b16 %v30
  %v182 = vunpack.c.l.b16 %v31
  %v183 = vunpack.c.h.b16 %v31
  %v184 = vunpack.c.l.b16 %v32
  %v185 = vunpack.c.h.b16 %v32
  %v186 = vunpack.c.l.b16 %v33
  %v187 = vunpack.c.h.b16 %v33
  %v188 = vunpack.c.l.b16 %v34
  %v189 = vunpack.c.h.b16 %v34
  %v190 = vunpack.c.l.b16 %v35
  %v191 = vunpack.c.h.b16 %v35
  %v192 = vunpack.c.l.b16 %v36
  %v193 = vunpack.c.h.b16 %v36
  %v194 = vunpack.c.l.b16 %v37
  %v195 = vunpack.c.h.b16 %v37
  %v196 = vunpack.c.l.b16 %v38
  %v197 = vunpack.c.h.b16 %v38
  %v198 = vunpack.c.l.b16 %v39
  %v199 = vunpack.c.h.b16 %v39
  %v200 = vunpack.c.l.b16 %v40
  %v201 = vunpack.c.h.b16 %v40
  %v202 = vunpack.c.l.b16 %v41
  %v203 = vunpack.c.h.b16 %v41
  %v204 = vunpack.c.l.b16 %v42
  %v205 = vunpack.c.h.b16 %v42
  %v206 = vunpack.c.l.b16 %v43
  %v207 = vunpack.c.h.b16 %v43
  %v208 = vunpack.c.l.b16 %v44
  %v209 = vunpack.c.h.b16 %v44
  %v210 = vunpack.c.l.b16 %v45
  %v211 = vunpack.c.h.b16 %v45
  %v212 = vunpack.c.l.b16 %v46
  %v213 = vunpack.c.h.b16 %v46
  %v214 = vpack.c.b16 %v154, %v150
  %v215 = vpack.c.b16 %v155, %v151
  %v216 = vpack.c.b16 %v156, %v152
  %v217 = vpack.c.b16 %v157, %v153
  %v218 = vpack.c.b16 %v162, %v158
  %v219 = vpack.c.b16 %v163, %v159
  %v220 = vpack.c.b16 %v164, %v160
  %v221 = vpack.c.b16 %v165, %v161
  %v222 = vpack.c.b16 %v170, %v166
  %v223 = vpack.c.b16 %v171, %v167
  %v224 = vpack.c.b16 %v172, %v168
  %v225 = vpack.c.b16 %v173, %v169
  %v226 = vpack.c.b16 %v178, %v174
  %v227 = vpack.c.b16 %v179, %v175
  %v228 = vpack.c.b16 %v180, %v176
  %v229 = vpack.c.b16 %v181, %v177
  %v230 = vpack.c.b16 %v186, %v182
  %v231 = vpack.c.b16 %v187, %v183
  %v232 = vpack.c.b16 %v188, %v184
  %v233 = vpack.c.b16 %v189, %v185
  %v234 = vpack.c.b16 %v194, %v190
  %v235 = vpack.c.b16 %v195, %v191
  %v236 = vpack.c.b16 %v196, %v192
  %v237 = vpack.c.b16 %v197, %v193
  %v238 = vpack.c.b16 %v202, %v198
  %v239 = vpack.c.b16 %v203, %v199
  %v240 = vpack.c.b16 %v204, %v200
  %v241 = vpack.c.b16 %v205, %v201
  %v242 = vpack.c.b16 %v210, %v206
  %v243 = vpack.c.b16 %v211, %v207
  %v244 = vpack.c.b16 %v212, %v208
  %v245 = vpack.c.b16 %v213, %v209
  %v342 = vunpack.c.l.b16 %v47
  %v343 = vunpack.c.l.b16 %v48
  %v344 = vunpack.c.l.b16 %v49
  %v345 = vunpack.c.l.b16 %v50
  %v346 = vunpack.c.l.b16 %v51
  %v347 = vunpack.c.l.b16 %v52
  %v348 = vunpack.c.l.b16 %v53
  %v349 = vunpack.c.l.b16 %v54
  %v350 = vunpack.c.l.b16 %v55
  %v351 = vunpack.c.l.b16 %v56
  %v352 = vunpack.c.l.b16 %v57
  %v353 = vunpack.c.l.b16 %v58
  %v354 = vunpack.c.l.b16 %v59
  %v355 = vunpack.c.l.b16 %v60
  %v356 = vunpack.c.l.b16 %v61
  %v357 = vunpack.c.l.b16 %v62
  %v358 = vunpack.c.l.b16 %v63
  %v359 = vunpack.c.l.b16 %v64
  %v360 = vunpack.c.l.b16 %v65
  %v361 = vunpack.c.l.b16 %v66
  %v362 = vunpack.c.l.b16 %v67
  %v363 = vunpack.c.l.b16 %v68
  %v364 = vunpack.c.l.b16 %v69
  %v365 = vunpack.c.l.b16 %v70
  %v366 = vunpack.c.l.b16 %v71
  %v367 = vunpack.c.l.b16 %v72
  %v368 = vunpack.c.l.b16 %v73
  %v369 = vunpack.c.l.b16 %v74
  %v370 = vunpack.c.l.b16 %v75
  %v371 = vunpack.c.l.b16 %v76
  %v372 = vunpack.c.l.b16 %v77
  %v373 = vunpack.c.l.b16 %v78
  %v374 = vunpack.c.l.b16 %v79
  %v375 = vunpack.c.l.b16 %v80
  %v376 = vunpack.c.l.b16 %v81
  %v377 = vunpack.c.l.b16 %v82
  %v378 = vunpack.c.l.b16 %v83
  %v379 = vunpack.c.l.b16 %v84
  %v380 = vunpack.c.l.b16 %v85
  %v381 = vunpack.c.l.b16 %v86
  %v382 = vunpack.c.l.b16 %v87
  %v383 = vunpack.c.l.b16 %v88
  %v384 = vunpack.c.l.b16 %v89
  %v385 = vunpack.c.l.b16 %v90
  %v386 = vunpack.c.l.b16 %v91
  %v387 = vunpack.c.l.b16 %v92
  %v388 = vunpack.c.l.b16 %v93
  %v389 = vunpack.c.l.b16 %v94
  %v390 = vunpack.c.l.b16 %v95
  %v391 = vunpack.c.l.b16 %v96
  %v392 = vunpack.c.l.b16 %v97
  %v393 = vunpack.c.l.b16 %v98
  %v394 = vunpack.c.l.b16 %v99
  %v395 = vunpack.c.l.b16 %v100
  %v396 = vunpack.c.l.b16 %v101
  %v397 = vunpack.c.l.b16 %v102
  %v398 = vunpack.c.l.b16 %v103
  %v399 = vunpack.c.l.b16 %v104
  %v400 = vunpack.c.l.b16 %v105
  %v401 = vunpack.c.l.b16 %v106
  %v402 = vunpack.c.l.b16 %v107
  %v403 = vunpack.c.l.b16 %v108
  %v404 = vunpack.c.l.b16 %v109
  %v405 = vunpack.c.l.b16 %v110
  %v406 = vpack.c.b16 %v343, %v342
  %v407 = vpack.c.b16 %v345, %v344
  %v408 = vpack.c.b16 %v347, %v346
  %v409 = vpack.c.b16 %v349, %v348
  %v410 = vpack.c.b16 %v351, %v350
  %v411 = vpack.c.b16 %v353, %v352
  %v412 = vpack.c.b16 %v355, %v354
  %v413 = vpack.c.b16 %v357, %v356
  %v414 = vpack.c.b16 %v359, %v358
  %v415 = vpack.c.b16 %v361, %v360
  %v416 = vpack.c.b16 %v363, %v362
  %v417 = vpack.c.b16 %v365, %v364
  %v418 = vpack.c.b16 %v367, %v366
  %v419 = vpack.c.b16 %v369, %v368
  %v420 = vpack.c.b16 %v371, %v370
  %v421 = vpack.c.b16 %v373, %v372
  %v422 = vpack.c.b16 %v375, %v374
  %v423 = vpack.c.b16 %v377, %v376
  %v424 = vpack.c.b16 %v379, %v378
  %v425 = vpack.c.b16 %v381, %v380
  %v426 = vpack.c.b16 %v383, %v382
  %v427 = vpack.c.b16 %v385, %v384
  %v428 = vpack.c.b16 %v387, %v386
  %v429 = vpack.c.b16 %v389, %v388
  %v430 = vpack.c.b16 %v391, %v390
  %v431 = vpack.c.b16 %v393, %v392
  %v432 = vpack.c.b16 %v395, %v394
  %v433 = vpack.c.b16 %v397, %v396
  %v434 = vpack.c.b16 %v399, %v398
  %v435 = vpack.c.b16 %v401, %v400
  %v436 = vpack.c.b16 %v403, %v402
  %v437 = vpack.c.b16 %v405, %v404
  %470 = vmatprep.subr.bf16.mxu0 0
  %471 = vmatpush1.bf16.msra.mxu0 %v413
  %472 = vmatprep.subr.bf16.mxu0 0
  %473 = vmatpush1.bf16.msra.mxu0 %v412
  %474 = vmatprep.subr.bf16.mxu0 0
  %475 = vmatpush1.bf16.msra.mxu0 %v411
  %476 = vmatprep.subr.bf16.mxu0 0
  %477 = vmatpush1.bf16.msra.mxu0 %v410
  %478 = vmatprep.subr.bf16.mxu0 0
  %479 = vmatpush1.bf16.msra.mxu0 %v409
  %480 = vmatprep.subr.bf16.mxu0 0
  %481 = vmatpush1.bf16.msra.mxu0 %v408
  %482 = vmatprep.subr.bf16.mxu0 0
  %483 = vmatpush1.bf16.msra.mxu0 %v407
  %484 = vmatprep.subr.bf16.mxu0 0
  %485 = vmatpush1.bf16.msra.mxu0 %v406
  %486 = vmatprep.subr.bf16.mxu0 0
  %487 = vmatpush2.bf16.msra.mxu0 %v421
  %488 = vmatprep.subr.bf16.mxu0 0
  %489 = vmatpush2.bf16.msra.mxu0 %v420
  %490 = vmatprep.subr.bf16.mxu0 0
  %491 = vmatpush2.bf16.msra.mxu0 %v419
  %492 = vmatprep.subr.bf16.mxu0 0
  %493 = vmatpush2.bf16.msra.mxu0 %v418
  %494 = vmatprep.subr.bf16.mxu0 0
  %495 = vmatpush2.bf16.msra.mxu0 %v417
  %496 = vmatprep.subr.bf16.mxu0 0
  %497 = vmatpush2.bf16.msra.mxu0 %v416
  %498 = vmatprep.subr.bf16.mxu0 0
  %499 = vmatpush2.bf16.msra.mxu0 %v415
  %500 = vmatprep.subr.bf16.mxu0 0
  %501 = vmatpush2.bf16.msra.mxu0 %v414
  %502 = vmatprep.mubr.bf16.mxu0 %v215
  %503 = vmatmul.mubr.bf16.gmra.mxu0 %v214
  %v504 = vpop.f32.mrf.mxu0
  %v505 = vadd.f32 %v116, %v504
  %v506 = vpop.f32.mrf.mxu0
  %v507 = vpop.f32.mrf.mxu0
  %v508 = vadd.f32 %v116, %v507
  %v509 = vpop.f32.mrf.mxu0
  %510 = vmatprep.mubr.bf16.mxu0 %v219
  %511 = vmatmul.mubr.bf16.gmra.mxu0 %v218
  %v512 = vpop.f32.mrf.mxu0
  %v513 = vadd.f32 %v116, %v512
  %v514 = vpop.f32.mrf.mxu0
  %v515 = vpop.f32.mrf.mxu0
  %v516 = vadd.f32 %v116, %v515
  %v517 = vpop.f32.mrf.mxu0
  %518 = vmatprep.mubr.bf16.mxu0 %v223
  %519 = vmatmul.mubr.bf16.gmra.mxu0 %v222
  %v520 = vpop.f32.mrf.mxu0
  %v521 = vadd.f32 %v116, %v520
  %v522 = vpop.f32.mrf.mxu0
  %v523 = vpop.f32.mrf.mxu0
  %v524 = vadd.f32 %v116, %v523
  %v525 = vpop.f32.mrf.mxu0
  %526 = vmatprep.mubr.bf16.mxu0 %v227
  %527 = vmatmul.mubr.bf16.gmra.mxu0 %v226
  %v528 = vpop.f32.mrf.mxu0
  %v529 = vadd.f32 %v116, %v528
  %v530 = vpop.f32.mrf.mxu0
  %v531 = vpop.f32.mrf.mxu0
  %v532 = vadd.f32 %v116, %v531
  %v533 = vpop.f32.mrf.mxu0
  %534 = vmatprep.mubr.bf16.mxu0 %v231
  %535 = vmatmul.mubr.bf16.gmra.mxu0 %v230
  %v536 = vpop.f32.mrf.mxu0
  %v537 = vadd.f32 %v116, %v536
  %v538 = vpop.f32.mrf.mxu0
  %v539 = vpop.f32.mrf.mxu0
  %v540 = vadd.f32 %v116, %v539
  %v541 = vpop.f32.mrf.mxu0
  %542 = vmatprep.mubr.bf16.mxu0 %v235
  %543 = vmatmul.mubr.bf16.gmra.mxu0 %v234
  %v544 = vpop.f32.mrf.mxu0
  %v545 = vadd.f32 %v116, %v544
  %v546 = vpop.f32.mrf.mxu0
  %v547 = vpop.f32.mrf.mxu0
  %v548 = vadd.f32 %v116, %v547
  %v549 = vpop.f32.mrf.mxu0
  %550 = vmatprep.mubr.bf16.mxu0 %v239
  %551 = vmatmul.mubr.bf16.gmra.mxu0 %v238
  %v552 = vpop.f32.mrf.mxu0
  %v553 = vadd.f32 %v116, %v552
  %v554 = vpop.f32.mrf.mxu0
  %v555 = vpop.f32.mrf.mxu0
  %v556 = vadd.f32 %v116, %v555
  %v557 = vpop.f32.mrf.mxu0
  %558 = vmatprep.mubr.bf16.mxu0 %v243
  %559 = vmatmul.mubr.bf16.gmra.mxu0 %v242
  %v560 = vpop.f32.mrf.mxu0
  %v561 = vadd.f32 %v116, %v560
  %v562 = vpop.f32.mrf.mxu0
  %v563 = vpop.f32.mrf.mxu0
  %v564 = vadd.f32 %v116, %v563
  %v565 = vpop.f32.mrf.mxu0
  %566 = vdwg.mxu0
  %567 = vmatprep.subr.bf16.mxu0 0
  %568 = vmatpush1.bf16.msra.mxu0 %v429
  %569 = vmatprep.subr.bf16.mxu0 0
  %570 = vmatpush1.bf16.msra.mxu0 %v428
  %571 = vmatprep.subr.bf16.mxu0 0
  %572 = vmatpush1.bf16.msra.mxu0 %v427
  %573 = vmatprep.subr.bf16.mxu0 0
  %574 = vmatpush1.bf16.msra.mxu0 %v426
  %575 = vmatprep.subr.bf16.mxu0 0
  %576 = vmatpush1.bf16.msra.mxu0 %v425
  %577 = vmatprep.subr.bf16.mxu0 0
  %578 = vmatpush1.bf16.msra.mxu0 %v424
  %579 = vmatprep.subr.bf16.mxu0 0
  %580 = vmatpush1.bf16.msra.mxu0 %v423
  %581 = vmatprep.subr.bf16.mxu0 0
  %582 = vmatpush1.bf16.msra.mxu0 %v422
  %583 = vmatprep.subr.bf16.mxu0 0
  %584 = vmatpush2.bf16.msra.mxu0 %v437
  %585 = vmatprep.subr.bf16.mxu0 0
  %586 = vmatpush2.bf16.msra.mxu0 %v436
  %587 = vmatprep.subr.bf16.mxu0 0
  %588 = vmatpush2.bf16.msra.mxu0 %v435
  %589 = vmatprep.subr.bf16.mxu0 0
  %590 = vmatpush2.bf16.msra.mxu0 %v434
  %591 = vmatprep.subr.bf16.mxu0 0
  %592 = vmatpush2.bf16.msra.mxu0 %v433
  %593 = vmatprep.subr.bf16.mxu0 0
  %594 = vmatpush2.bf16.msra.mxu0 %v432
  %595 = vmatprep.subr.bf16.mxu0 0
  %596 = vmatpush2.bf16.msra.mxu0 %v431
  %597 = vmatprep.subr.bf16.mxu0 0
  %598 = vmatpush2.bf16.msra.mxu0 %v430
  %599 = vmatprep.mubr.bf16.mxu0 %v217
  %600 = vmatmul.mubr.bf16.gmra.mxu0 %v216
  %v601 = vpop.f32.mrf.mxu0
  %v602 = vadd.f32 %v505, %v601
  %v603 = vpop.f32.mrf.mxu0
  %v604 = vpop.f32.mrf.mxu0
  %v605 = vadd.f32 %v508, %v604
  %v606 = vpop.f32.mrf.mxu0
  %607 = vmatprep.mubr.bf16.mxu0 %v221
  %608 = vmatmul.mubr.bf16.gmra.mxu0 %v220
  %v609 = vpop.f32.mrf.mxu0
  %v610 = vadd.f32 %v513, %v609
  %v611 = vpop.f32.mrf.mxu0
  %v612 = vpop.f32.mrf.mxu0
  %v613 = vadd.f32 %v516, %v612
  %v614 = vpop.f32.mrf.mxu0
  %615 = vmatprep.mubr.bf16.mxu0 %v225
  %616 = vmatmul.mubr.bf16.gmra.mxu0 %v224
  %v617 = vpop.f32.mrf.mxu0
  %v618 = vadd.f32 %v521, %v617
  %v619 = vpop.f32.mrf.mxu0
  %v620 = vpop.f32.mrf.mxu0
  %v621 = vadd.f32 %v524, %v620
  %v622 = vpop.f32.mrf.mxu0
  %623 = vmatprep.mubr.bf16.mxu0 %v229
  %624 = vmatmul.mubr.bf16.gmra.mxu0 %v228
  %v625 = vpop.f32.mrf.mxu0
  %v626 = vadd.f32 %v529, %v625
  %v627 = vpop.f32.mrf.mxu0
  %v628 = vpop.f32.mrf.mxu0
  %v629 = vadd.f32 %v532, %v628
  %v630 = vpop.f32.mrf.mxu0
  %631 = vmatprep.mubr.bf16.mxu0 %v233
  %632 = vmatmul.mubr.bf16.gmra.mxu0 %v232
  %v633 = vpop.f32.mrf.mxu0
  %v634 = vadd.f32 %v537, %v633
  %v635 = vpop.f32.mrf.mxu0
  %v636 = vpop.f32.mrf.mxu0
  %v637 = vadd.f32 %v540, %v636
  %v638 = vpop.f32.mrf.mxu0
  %639 = vmatprep.mubr.bf16.mxu0 %v237
  %640 = vmatmul.mubr.bf16.gmra.mxu0 %v236
  %v641 = vpop.f32.mrf.mxu0
  %v642 = vadd.f32 %v545, %v641
  %v643 = vpop.f32.mrf.mxu0
  %v644 = vpop.f32.mrf.mxu0
  %v645 = vadd.f32 %v548, %v644
  %v646 = vpop.f32.mrf.mxu0
  %647 = vmatprep.mubr.bf16.mxu0 %v241
  %648 = vmatmul.mubr.bf16.gmra.mxu0 %v240
  %v649 = vpop.f32.mrf.mxu0
  %v650 = vadd.f32 %v553, %v649
  %v651 = vpop.f32.mrf.mxu0
  %v652 = vpop.f32.mrf.mxu0
  %v653 = vadd.f32 %v556, %v652
  %v654 = vpop.f32.mrf.mxu0
  %655 = vmatprep.mubr.bf16.mxu0 %v245
  %656 = vmatmul.mubr.bf16.gmra.mxu0 %v244
  %v657 = vpop.f32.mrf.mxu0
  %v658 = vadd.f32 %v561, %v657
  %v659 = vpop.f32.mrf.mxu0
  %v660 = vpop.f32.mrf.mxu0
  %v661 = vadd.f32 %v564, %v660
  %v662 = vpop.f32.mrf.mxu0
  %663 = vdwg.mxu0
  %v664 = vmax.f32 %v602, 0.0
  %v665 = vmax.f32 %v605, 0.0
  %v666 = vmax.f32 %v610, 0.0
  %v667 = vmax.f32 %v613, 0.0
  %v668 = vmax.f32 %v618, 0.0
  %v669 = vmax.f32 %v621, 0.0
  %v670 = vmax.f32 %v626, 0.0
  %v671 = vmax.f32 %v629, 0.0
  %v672 = vmax.f32 %v634, 0.0
  %v673 = vmax.f32 %v637, 0.0
  %v674 = vmax.f32 %v642, 0.0
  %v675 = vmax.f32 %v645, 0.0
  %v676 = vmax.f32 %v650, 0.0
  %v677 = vmax.f32 %v653, 0.0
  %v678 = vmax.f32 %v658, 0.0
  %v679 = vmax.f32 %v661, 0.0
  %v680 = vpack.c.bf16 %v665, %v664
  %v681 = vpack.c.bf16 %v667, %v666
  %v682 = vpack.c.bf16 %v669, %v668
  %v683 = vpack.c.bf16 %v671, %v670
  %v684 = vpack.c.bf16 %v673, %v672
  %v685 = vpack.c.bf16 %v675, %v674
  %v686 = vpack.c.bf16 %v677, %v676
  %v687 = vpack.c.bf16 %v679, %v678
  %v696 = vunpack.c.l.b16 %v680
  %v697 = vunpack.c.h.b16 %v680
  %v698 = vunpack.c.l.b16 %v681
  %v699 = vunpack.c.h.b16 %v681
  %v700 = vunpack.c.l.b16 %v682
  %v701 = vunpack.c.h.b16 %v682
  %v702 = vunpack.c.l.b16 %v683
  %v703 = vunpack.c.h.b16 %v683
  %v704 = vunpack.c.l.b16 %v684
  %v705 = vunpack.c.h.b16 %v684
  %v706 = vunpack.c.l.b16 %v685
  %v707 = vunpack.c.h.b16 %v685
  %v708 = vunpack.c.l.b16 %v686
  %v709 = vunpack.c.h.b16 %v686
  %v710 = vunpack.c.l.b16 %v687
  %v711 = vunpack.c.h.b16 %v687
  %v712 = vpack.c.b16 %v696, %v696
  %v713 = vpack.c.b16 %v697, %v697
  %v714 = vpack.c.b16 %v698, %v698
  %v715 = vpack.c.b16 %v699, %v699
  %v716 = vpack.c.b16 %v700, %v700
  %v717 = vpack.c.b16 %v701, %v701
  %v718 = vpack.c.b16 %v702, %v702
  %v719 = vpack.c.b16 %v703, %v703
  %v720 = vpack.c.b16 %v704, %v704
  %v721 = vpack.c.b16 %v705, %v705
  %v722 = vpack.c.b16 %v706, %v706
  %v723 = vpack.c.b16 %v707, %v707
  %v724 = vpack.c.b16 %v708, %v708
  %v725 = vpack.c.b16 %v709, %v709
  %v726 = vpack.c.b16 %v710, %v710
  %v727 = vpack.c.b16 %v711, %v711
  %vm744 = vcmask 519168
  %745 = vst.msk [vmem:[%s3] sm:$0xf] %vm744, %v712
  %746 = vst.msk [vmem:[%s3 + $0x4] sm:$0xf] %vm744, %v713
  %747 = vst.msk [vmem:[%s3 + $0x8] sm:$0xf] %vm744, %v714
  %748 = vst.msk [vmem:[%s3 + $0xc] sm:$0xf] %vm744, %v715
  %749 = vst.msk [vmem:[%s3 + $0x10] sm:$0xf] %vm744, %v716
  %750 = vst.msk [vmem:[%s3 + $0x14] sm:$0xf] %vm744, %v717
  %751 = vst.msk [vmem:[%s3 + $0x18] sm:$0xf] %vm744, %v718
  %752 = vst.msk [vmem:[%s3 + $0x1c] sm:$0xf] %vm744, %v719
  %753 = vst.msk [vmem:[%s3 + $0x20] sm:$0xf] %vm744, %v720
  %754 = vst.msk [vmem:[%s3 + $0x24] sm:$0xf] %vm744, %v721
  %755 = vst.msk [vmem:[%s3 + $0x28] sm:$0xf] %vm744, %v722
  %756 = vst.msk [vmem:[%s3 + $0x2c] sm:$0xf] %vm744, %v723
  %757 = vst.msk [vmem:[%s3 + $0x30] sm:$0xf] %vm744, %v724
  %758 = vst.msk [vmem:[%s3 + $0x34] sm:$0xf] %vm744, %v725
  %759 = vst.msk [vmem:[%s3 + $0x38] sm:$0xf] %vm744, %v726
  %760 = vst.msk [vmem:[%s3 + $0x3c] sm:$0xf] %vm744, %v727
  // Predicated region
  $region14: #{cnn_policy_forward.5} parent=0 // pred_check
    _
  $region15: #{cnn_policy_forward.5} parent=0 // pred_check_branch
    %762 = sbr.rel (0) target = $region17
  $region16: #{cnn_policy_forward.5} parent=0 // pred_region
    _
  $region17: #{cnn_policy_forward.5} parent=0 // pred_fallthru
    _
  // Predicated region
  $region18: #{cnn_policy_forward.5} parent=0 // pred_check
    _
  $region19: #{cnn_policy_forward.5} parent=0 // pred_check_branch
    %764 = sbr.rel (0) target = $region21
  $region20: #{cnn_policy_forward.5} parent=0 // pred_region
    _
  $region21: #{cnn_policy_forward.5} parent=0 // pred_fallthru
    _

// kernel: cnn_policy_forward.6
$region0: #{cnn_policy_forward.6}
  #allocation0 [shape = 'u32[]', space=smem, size = 0x4, offset = 0x4, fixed_abs, tag = 'smem constant byte address 0x4 - core index']
  #allocation1 [shape = 'u32[144,128]{1,0:T(1,128)}', space=vmem, size = 0x12000, scoped, tag = 'internal scratch']
  %s0 = inlined_call_operand.vmem [shape: bf16[72,576], index: 0, kind: input, shape index: {}]
  %s1 = inlined_call_operand.vmem [shape: bf16[576,64], index: 1, kind: input, shape index: {}]
  %s2 = inlined_call_operand.vmem [shape: f32[1,64], index: 2, kind: input, shape index: {}]
  %s3 = inlined_call_operand.vmem [shape: bf16[72,64], index: 3, kind: output, shape index: {}]
  %s4 = sld [smem:[#allocation0]]
  $region22: #{cnn_policy_forward.6} parent=0
    _
  %s6 = ssub.s32 1, %s4
  %s7 = scalar_select 0, %s6, %s4
  // Predicated region
  $region2: #{cnn_policy_forward.6} parent=0 // pred_check
    _
  $region3: #{cnn_policy_forward.6} parent=0 // pred_check_branch
    %9 = sbr.rel (0) target = $region5
  $region4: #{cnn_policy_forward.6} parent=0 // pred_region
    _
  $region5: #{cnn_policy_forward.6} parent=0 // pred_fallthru
    _
  // Predicated region
  $region6: #{cnn_policy_forward.6} parent=0 // pred_check
    _
  $region7: #{cnn_policy_forward.6} parent=0 // pred_check_branch
    %11 = sbr.rel (0) target = $region9
  $region8: #{cnn_policy_forward.6} parent=0 // pred_region
    _
  $region9: #{cnn_policy_forward.6} parent=0 // pred_fallthru
    _
  // Predicated region
  $region10: #{cnn_policy_forward.6} parent=0 // pred_check
    _
  $region11: #{cnn_policy_forward.6} parent=0 // pred_check_branch
    %13 = sbr.rel (0) target = $region13
  $region12: #{cnn_policy_forward.6} parent=0 // pred_region
    _
  $region13: #{cnn_policy_forward.6} parent=0 // pred_fallthru
    _
  %v15 = vld [vmem:[%s0] sm:$0xff]
  %v16 = vld [vmem:[%s0 + $0x8] sm:$0xff]
  %v17 = vld [vmem:[%s0 + $0x10] sm:$0xf]
  %v18 = vld [vmem:[%s0 + $0x14] sm:$0xff]
  %v19 = vld [vmem:[%s0 + $0x1c] sm:$0xff]
  %v20 = vld [vmem:[%s0 + $0x24] sm:$0xf]
  %v21 = vld [vmem:[%s0 + $0x28] sm:$0xff]
  %v22 = vld [vmem:[%s0 + $0x30] sm:$0xff]
  %v23 = vld [vmem:[%s0 + $0x38] sm:$0xf]
  %v24 = vld [vmem:[%s0 + $0x3c] sm:$0xff]
  %v25 = vld [vmem:[%s0 + $0x44] sm:$0xff]
  %v26 = vld [vmem:[%s0 + $0x4c] sm:$0xf]
  %v27 = vld [vmem:[%s0 + $0x50] sm:$0xff]
  %v28 = vld [vmem:[%s0 + $0x58] sm:$0xff]
  %v29 = vld [vmem:[%s0 + $0x60] sm:$0xf]
  %v30 = vld [vmem:[%s0 + $0x64] sm:$0xff]
  %v31 = vld [vmem:[%s0 + $0x6c] sm:$0xff]
  %v32 = vld [vmem:[%s0 + $0x74] sm:$0xf]
  %v33 = vld [vmem:[%s0 + $0x78] sm:$0xff]
  %v34 = vld [vmem:[%s0 + $0x80] sm:$0xff]
  %v35 = vld [vmem:[%s0 + $0x88] sm:$0xf]
  %v36 = vld [vmem:[%s0 + $0x8c] sm:$0xff]
  %v37 = vld [vmem:[%s0 + $0x94] sm:$0xff]
  %v38 = vld [vmem:[%s0 + $0x9c] sm:$0xf]
  %v39 = vld [vmem:[%s0 + $0xa0] sm:$0xff]
  %v40 = vld [vmem:[%s0 + $0xa8] sm:$0xff]
  %v41 = vld [vmem:[%s0 + $0xb0] sm:$0xf]
  %v42 = vld [vmem:[%s1] sm:$0xf]
  %v43 = vld [vmem:[%s1 + $0x4] sm:$0xf]
  %v44 = vld [vmem:[%s1 + $0x8] sm:$0xf]
  %v45 = vld [vmem:[%s1 + $0xc] sm:$0xf]
  %v46 = vld [vmem:[%s1 + $0x10] sm:$0xf]
  %v47 = vld [vmem:[%s1 + $0x14] sm:$0xf]
  %v48 = vld [vmem:[%s1 + $0x18] sm:$0xf]
  %v49 = vld [vmem:[%s1 + $0x1c] sm:$0xf]
  %v50 = vld [vmem:[%s1 + $0x20] sm:$0xf]
  %v51 = vld [vmem:[%s1 + $0x24] sm:$0xf]
  %v52 = vld [vmem:[%s1 + $0x28] sm:$0xf]
  %v53 = vld [vmem:[%s1 + $0x2c] sm:$0xf]
  %v54 = vld [vmem:[%s1 + $0x30] sm:$0xf]
  %v55 = vld [vmem:[%s1 + $0x34] sm:$0xf]
  %v56 = vld [vmem:[%s1 + $0x38] sm:$0xf]
  %v57 = vld [vmem:[%s1 + $0x3c] sm:$0xf]
  %v58 = vld [vmem:[%s1 + $0x40] sm:$0xf]
  %v59 = vld [vmem:[%s1 + $0x44] sm:$0xf]
  %v60 = vld [vmem:[%s1 + $0x48] sm:$0xf]
  %v61 = vld [vmem:[%s1 + $0x4c] sm:$0xf]
  %v62 = vld [vmem:[%s1 + $0x50] sm:$0xf]
  %v63 = vld [vmem:[%s1 + $0x54] sm:$0xf]
  %v64 = vld [vmem:[%s1 + $0x58] sm:$0xf]
  %v65 = vld [vmem:[%s1 + $0x5c] sm:$0xf]
  %v66 = vld [vmem:[%s1 + $0x60] sm:$0xf]
  %v67 = vld [vmem:[%s1 + $0x64] sm:$0xf]
  %v68 = vld [vmem:[%s1 + $0x68] sm:$0xf]
  %v69 = vld [vmem:[%s1 + $0x6c] sm:$0xf]
  %v70 = vld [vmem:[%s1 + $0x70] sm:$0xf]
  %v71 = vld [vmem:[%s1 + $0x74] sm:$0xf]
  %v72 = vld [vmem:[%s1 + $0x78] sm:$0xf]
  %v73 = vld [vmem:[%s1 + $0x7c] sm:$0xf]
  %v74 = vld [vmem:[%s1 + $0x80] sm:$0xf]
  %v75 = vld [vmem:[%s1 + $0x84] sm:$0xf]
  %v76 = vld [vmem:[%s1 + $0x88] sm:$0xf]
  %v77 = vld [vmem:[%s1 + $0x8c] sm:$0xf]
  %v78 = vld [vmem:[%s1 + $0x90] sm:$0xf]
  %v79 = vld [vmem:[%s1 + $0x94] sm:$0xf]
  %v80 = vld [vmem:[%s1 + $0x98] sm:$0xf]
  %v81 = vld [vmem:[%s1 + $0x9c] sm:$0xf]
  %v82 = vld [vmem:[%s1 + $0xa0] sm:$0xf]
  %v83 = vld [vmem:[%s1 + $0xa4] sm:$0xf]
  %v84 = vld [vmem:[%s1 + $0xa8] sm:$0xf]
  %v85 = vld [vmem:[%s1 + $0xac] sm:$0xf]
  %v86 = vld [vmem:[%s1 + $0xb0] sm:$0xf]
  %v87 = vld [vmem:[%s1 + $0xb4] sm:$0xf]
  %v88 = vld [vmem:[%s1 + $0xb8] sm:$0xf]
  %v89 = vld [vmem:[%s1 + $0xbc] sm:$0xf]
  %v90 = vld [vmem:[%s1 + $0xc0] sm:$0xf]
  %v91 = vld [vmem:[%s1 + $0xc4] sm:$0xf]
  %v92 = vld [vmem:[%s1 + $0xc8] sm:$0xf]
  %v93 = vld [vmem:[%s1 + $0xcc] sm:$0xf]
  %v94 = vld [vmem:[%s1 + $0xd0] sm:$0xf]
  %v95 = vld [vmem:[%s1 + $0xd4] sm:$0xf]
  %v96 = vld [vmem:[%s1 + $0xd8] sm:$0xf]
  %v97 = vld [vmem:[%s1 + $0xdc] sm:$0xf]
  %v98 = vld [vmem:[%s1 + $0xe0] sm:$0xf]
  %v99 = vld [vmem:[%s1 + $0xe4] sm:$0xf]
  %v100 = vld [vmem:[%s1 + $0xe8] sm:$0xf]
  %v101 = vld [vmem:[%s1 + $0xec] sm:$0xf]
  %v102 = vld [vmem:[%s1 + $0xf0] sm:$0xf]
  %v103 = vld [vmem:[%s1 + $0xf4] sm:$0xf]
  %v104 = vld [vmem:[%s1 + $0xf8] sm:$0xf]
  %v105 = vld [vmem:[%s1 + $0xfc] sm:$0xf]
  %v106 = vld [vmem:[%s1 + $0x100] sm:$0xf]
  %v107 = vld [vmem:[%s1 + $0x104] sm:$0xf]
  %v108 = vld [vmem:[%s1 + $0x108] sm:$0xf]
  %v109 = vld [vmem:[%s1 + $0x10c] sm:$0xf]
  %v110 = vld [vmem:[%s1 + $0x110] sm:$0xf]
  %v111 = vld [vmem:[%s1 + $0x114] sm:$0xf]
  %v112 = vld [vmem:[%s1 + $0x118] sm:$0xf]
  %v113 = vld [vmem:[%s1 + $0x11c] sm:$0xf]
  %v114 = vld [vmem:[%s2] sm:$0x1]
  %v116 = vlaneseq
  %v117 = vshrl.u32 %v116, 7
  %v118 = vsub.s32 0, %v117
  %v119 = vrot.slane %v114, %v118
  %v148 = vunpack.c.l.b16 %v15
  %v149 = vunpack.c.h.b16 %v15
  %v150 = vunpack.c.l.b16 %v16
  %v151 = vunpack.c.h.b16 %v16
  %v152 = vunpack.c.l.b16 %v17
  %v153 = vunpack.c.l.b16 %v18
  %v154 = vunpack.c.h.b16 %v18
  %v155 = vunpack.c.l.b16 %v19
  %v156 = vunpack.c.h.b16 %v19
  %v157 = vunpack.c.l.b16 %v20
  %v158 = vunpack.c.l.b16 %v21
  %v159 = vunpack.c.h.b16 %v21
  %v160 = vunpack.c.l.b16 %v22
  %v161 = vunpack.c.h.b16 %v22
  %v162 = vunpack.c.l.b16 %v23
  %v163 = vunpack.c.l.b16 %v24
  %v164 = vunpack.c.h.b16 %v24
  %v165 = vunpack.c.l.b16 %v25
  %v166 = vunpack.c.h.b16 %v25
  %v167 = vunpack.c.l.b16 %v26
  %v168 = vunpack.c.l.b16 %v27
  %v169 = vunpack.c.h.b16 %v27
  %v170 = vunpack.c.l.b16 %v28
  %v171 = vunpack.c.h.b16 %v28
  %v172 = vunpack.c.l.b16 %v29
  %v173 = vunpack.c.l.b16 %v30
  %v174 = vunpack.c.h.b16 %v30
  %v175 = vunpack.c.l.b16 %v31
  %v176 = vunpack.c.h.b16 %v31
  %v177 = vunpack.c.l.b16 %v32
  %v178 = vunpack.c.l.b16 %v33
  %v179 = vunpack.c.h.b16 %v33
  %v180 = vunpack.c.l.b16 %v34
  %v181 = vunpack.c.h.b16 %v34
  %v182 = vunpack.c.l.b16 %v35
  %v183 = vunpack.c.l.b16 %v36
  %v184 = vunpack.c.h.b16 %v36
  %v185 = vunpack.c.l.b16 %v37
  %v186 = vunpack.c.h.b16 %v37
  %v187 = vunpack.c.l.b16 %v38
  %v188 = vunpack.c.l.b16 %v39
  %v189 = vunpack.c.h.b16 %v39
  %v190 = vunpack.c.l.b16 %v40
  %v191 = vunpack.c.h.b16 %v40
  %v192 = vunpack.c.l.b16 %v41
  %v193 = vpack.c.b16 %v153, %v148
  %v194 = vpack.c.b16 %v154, %v149
  %v195 = vpack.c.b16 %v155, %v150
  %v196 = vpack.c.b16 %v156, %v151
  %v197 = vpack.c.b16 %v157, %v152
  %v198 = vpack.c.b16 %v163, %v158
  %v199 = vpack.c.b16 %v164, %v159
  %v200 = vpack.c.b16 %v165, %v160
  %v201 = vpack.c.b16 %v166, %v161
  %v202 = vpack.c.b16 %v167, %v162
  %v203 = vpack.c.b16 %v173, %v168
  %v204 = vpack.c.b16 %v174, %v169
  %v205 = vpack.c.b16 %v175, %v170
  %v206 = vpack.c.b16 %v176, %v171
  %v207 = vpack.c.b16 %v177, %v172
  %v208 = vpack.c.b16 %v183, %v178
  %v209 = vpack.c.b16 %v184, %v179
  %v210 = vpack.c.b16 %v185, %v180
  %v211 = vpack.c.b16 %v186, %v181
  %v212 = vpack.c.b16 %v187, %v182
  %v213 = vpack.c.b16 %v188, %v188
  %v214 = vpack.c.b16 %v189, %v189
  %v215 = vpack.c.b16 %v190, %v190
  %v216 = vpack.c.b16 %v191, %v191
  %v217 = vpack.c.b16 %v192, %v192
  %v310 = vunpack.c.l.b16 %v42
  %v311 = vunpack.c.l.b16 %v43
  %v312 = vunpack.c.l.b16 %v44
  %v313 = vunpack.c.l.b16 %v45
  %v314 = vunpack.c.l.b16 %v46
  %v315 = vunpack.c.l.b16 %v47
  %v316 = vunpack.c.l.b16 %v48
  %v317 = vunpack.c.l.b16 %v49
  %v318 = vunpack.c.l.b16 %v50
  %v319 = vunpack.c.l.b16 %v51
  %v320 = vunpack.c.l.b16 %v52
  %v321 = vunpack.c.l.b16 %v53
  %v322 = vunpack.c.l.b16 %v54
  %v323 = vunpack.c.l.b16 %v55
  %v324 = vunpack.c.l.b16 %v56
  %v325 = vunpack.c.l.b16 %v57
  %v326 = vunpack.c.l.b16 %v58
  %v327 = vunpack.c.l.b16 %v59
  %v328 = vunpack.c.l.b16 %v60
  %v329 = vunpack.c.l.b16 %v61
  %v330 = vunpack.c.l.b16 %v62
  %v331 = vunpack.c.l.b16 %v63
  %v332 = vunpack.c.l.b16 %v64
  %v333 = vunpack.c.l.b16 %v65
  %v334 = vunpack.c.l.b16 %v66
  %v335 = vunpack.c.l.b16 %v67
  %v336 = vunpack.c.l.b16 %v68
  %v337 = vunpack.c.l.b16 %v69
  %v338 = vunpack.c.l.b16 %v70
  %v339 = vunpack.c.l.b16 %v71
  %v340 = vunpack.c.l.b16 %v72
  %v341 = vunpack.c.l.b16 %v73
  %v342 = vunpack.c.l.b16 %v74
  %v343 = vunpack.c.l.b16 %v75
  %v344 = vunpack.c.l.b16 %v76
  %v345 = vunpack.c.l.b16 %v77
  %v346 = vunpack.c.l.b16 %v78
  %v347 = vunpack.c.l.b16 %v79
  %v348 = vunpack.c.l.b16 %v80
  %v349 = vunpack.c.l.b16 %v81
  %v350 = vunpack.c.l.b16 %v82
  %v351 = vunpack.c.l.b16 %v83
  %v352 = vunpack.c.l.b16 %v84
  %v353 = vunpack.c.l.b16 %v85
  %v354 = vunpack.c.l.b16 %v86
  %v355 = vunpack.c.l.b16 %v87
  %v356 = vunpack.c.l.b16 %v88
  %v357 = vunpack.c.l.b16 %v89
  %v358 = vunpack.c.l.b16 %v90
  %v359 = vunpack.c.l.b16 %v91
  %v360 = vunpack.c.l.b16 %v92
  %v361 = vunpack.c.l.b16 %v93
  %v362 = vunpack.c.l.b16 %v94
  %v363 = vunpack.c.l.b16 %v95
  %v364 = vunpack.c.l.b16 %v96
  %v365 = vunpack.c.l.b16 %v97
  %v366 = vunpack.c.l.b16 %v98
  %v367 = vunpack.c.l.b16 %v99
  %v368 = vunpack.c.l.b16 %v100
  %v369 = vunpack.c.l.b16 %v101
  %v370 = vunpack.c.l.b16 %v102
  %v371 = vunpack.c.l.b16 %v103
  %v372 = vunpack.c.l.b16 %v104
  %v373 = vunpack.c.l.b16 %v105
  %v374 = vunpack.c.l.b16 %v106
  %v375 = vunpack.c.l.b16 %v107
  %v376 = vunpack.c.l.b16 %v108
  %v377 = vunpack.c.l.b16 %v109
  %v378 = vunpack.c.l.b16 %v110
  %v379 = vunpack.c.l.b16 %v111
  %v380 = vunpack.c.l.b16 %v112
  %v381 = vunpack.c.l.b16 %v113
  %v382 = vpack.c.b16 %v311, %v310
  %v383 = vpack.c.b16 %v313, %v312
  %v384 = vpack.c.b16 %v315, %v314
  %v385 = vpack.c.b16 %v317, %v316
  %v386 = vpack.c.b16 %v319, %v318
  %v387 = vpack.c.b16 %v321, %v320
  %v388 = vpack.c.b16 %v323, %v322
  %v389 = vpack.c.b16 %v325, %v324
  %v390 = vpack.c.b16 %v327, %v326
  %v391 = vpack.c.b16 %v329, %v328
  %v392 = vpack.c.b16 %v331, %v330
  %v393 = vpack.c.b16 %v333, %v332
  %v394 = vpack.c.b16 %v335, %v334
  %v395 = vpack.c.b16 %v337, %v336
  %v396 = vpack.c.b16 %v339, %v338
  %v397 = vpack.c.b16 %v341, %v340
  %v398 = vpack.c.b16 %v343, %v342
  %v399 = vpack.c.b16 %v345, %v344
  %v400 = vpack.c.b16 %v347, %v346
  %v401 = vpack.c.b16 %v349, %v348
  %v402 = vpack.c.b16 %v351, %v350
  %v403 = vpack.c.b16 %v353, %v352
  %v404 = vpack.c.b16 %v355, %v354
  %v405 = vpack.c.b16 %v357, %v356
  %v406 = vpack.c.b16 %v359, %v358
  %v407 = vpack.c.b16 %v361, %v360
  %v408 = vpack.c.b16 %v363, %v362
  %v409 = vpack.c.b16 %v365, %v364
  %v410 = vpack.c.b16 %v367, %v366
  %v411 = vpack.c.b16 %v369, %v368
  %v412 = vpack.c.b16 %v371, %v370
  %v413 = vpack.c.b16 %v373, %v372
  %v414 = vpack.c.b16 %v375, %v374
  %v415 = vpack.c.b16 %v377, %v376
  %v416 = vpack.c.b16 %v379, %v378
  %v417 = vpack.c.b16 %v381, %v380
  %vm454 = vcmask 523264
  %v456 = vsel %vm454, %v197, 0
  %v459 = vsel %vm454, %v202, 0
  %v462 = vsel %vm454, %v207, 0
  %v465 = vsel %vm454, %v212, 0
  %v468 = vsel %vm454, %v217, 0
  %470 = vmatprep.subr.bf16.mxu0 0
  %471 = vmatpush1.bf16.msra.mxu0 %v389
  %472 = vmatprep.subr.bf16.mxu0 0
  %473 = vmatpush1.bf16.msra.mxu0 %v388
  %474 = vmatprep.subr.bf16.mxu0 0
  %475 = vmatpush1.bf16.msra.mxu0 %v387
  %476 = vmatprep.subr.bf16.mxu0 0
  %477 = vmatpush1.bf16.msra.mxu0 %v386
  %478 = vmatprep.subr.bf16.mxu0 0
  %479 = vmatpush1.bf16.msra.mxu0 %v385
  %480 = vmatprep.subr.bf16.mxu0 0
  %481 = vmatpush1.bf16.msra.mxu0 %v384
  %482 = vmatprep.subr.bf16.mxu0 0
  %483 = vmatpush1.bf16.msra.mxu0 %v383
  %484 = vmatprep.subr.bf16.mxu0 0
  %485 = vmatpush1.bf16.msra.mxu0 %v382
  %486 = vmatprep.subr.bf16.mxu0 0
  %487 = vmatpush2.bf16.msra.mxu0 %v397
  %488 = vmatprep.subr.bf16.mxu0 0
  %489 = vmatpush2.bf16.msra.mxu0 %v396
  %490 = vmatprep.subr.bf16.mxu0 0
  %491 = vmatpush2.bf16.msra.mxu0 %v395
  %492 = vmatprep.subr.bf16.mxu0 0
  %493 = vmatpush2.bf16.msra.mxu0 %v394
  %494 = vmatprep.subr.bf16.mxu0 0
  %495 = vmatpush2.bf16.msra.mxu0 %v393
  %496 = vmatprep.subr.bf16.mxu0 0
  %497 = vmatpush2.bf16.msra.mxu0 %v392
  %498 = vmatprep.subr.bf16.mxu0 0
  %499 = vmatpush2.bf16.msra.mxu0 %v391
  %500 = vmatprep.subr.bf16.mxu0 0
  %501 = vmatpush2.bf16.msra.mxu0 %v390
  %502 = vmatprep.mubr.bf16.mxu0 %v194
  %503 = vmatmul.mubr.bf16.gmra.mxu0 %v193
  %v504 = vpop.f32.mrf.mxu0
  %v505 = vadd.f32 %v119, %v504
  %v506 = vpop.f32.mrf.mxu0
  %v507 = vpop.f32.mrf.mxu0
  %v508 = vadd.f32 %v119, %v507
  %v509 = vpop.f32.mrf.mxu0
  %510 = vmatprep.mubr.bf16.mxu0 %v199
  %511 = vmatmul.mubr.bf16.gmra.mxu0 %v198
  %v512 = vpop.f32.mrf.mxu0
  %v513 = vadd.f32 %v119, %v512
  %v514 = vpop.f32.mrf.mxu0
  %v515 = vpop.f32.mrf.mxu0
  %v516 = vadd.f32 %v119, %v515
  %v517 = vpop.f32.mrf.mxu0
  %518 = vmatprep.mubr.bf16.mxu0 %v204
  %519 = vmatmul.mubr.bf16.gmra.mxu0 %v203
  %v520 = vpop.f32.mrf.mxu0
  %v521 = vadd.f32 %v119, %v520
  %v522 = vpop.f32.mrf.mxu0
  %v523 = vpop.f32.mrf.mxu0
  %v524 = vadd.f32 %v119, %v523
  %v525 = vpop.f32.mrf.mxu0
  %526 = vmatprep.mubr.bf16.mxu0 %v209
  %527 = vmatmul.mubr.bf16.gmra.mxu0 %v208
  %v528 = vpop.f32.mrf.mxu0
  %v529 = vadd.f32 %v119, %v528
  %v530 = vpop.f32.mrf.mxu0
  %v531 = vpop.f32.mrf.mxu0
  %v532 = vadd.f32 %v119, %v531
  %v533 = vpop.f32.mrf.mxu0
  %534 = vmatprep.mubr.bf16.mxu0 %v214
  %535 = vmatmul.mubr.bf16.gmra.mxu0 %v213
  %v536 = vpop.f32.mrf.mxu0
  %v537 = vadd.f32 %v119, %v536
  %v538 = vpop.f32.mrf.mxu0
  %v539 = vpop.f32.mrf.mxu0
  %v540 = vpop.f32.mrf.mxu0
  %541 = vdwg.mxu0
  %542 = vmatprep.subr.bf16.mxu0 0
  %543 = vmatpush1.bf16.msra.mxu0 %v405
  %544 = vmatprep.subr.bf16.mxu0 0
  %545 = vmatpush1.bf16.msra.mxu0 %v404
  %546 = vmatprep.subr.bf16.mxu0 0
  %547 = vmatpush1.bf16.msra.mxu0 %v403
  %548 = vmatprep.subr.bf16.mxu0 0
  %549 = vmatpush1.bf16.msra.mxu0 %v402
  %550 = vmatprep.subr.bf16.mxu0 0
  %551 = vmatpush1.bf16.msra.mxu0 %v401
  %552 = vmatprep.subr.bf16.mxu0 0
  %553 = vmatpush1.bf16.msra.mxu0 %v400
  %554 = vmatprep.subr.bf16.mxu0 0
  %555 = vmatpush1.bf16.msra.mxu0 %v399
  %556 = vmatprep.subr.bf16.mxu0 0
  %557 = vmatpush1.bf16.msra.mxu0 %v398
  %558 = vmatprep.subr.bf16.mxu0 0
  %559 = vmatpush2.bf16.msra.mxu0 %v413
  %560 = vmatprep.subr.bf16.mxu0 0
  %561 = vmatpush2.bf16.msra.mxu0 %v412
  %562 = vmatprep.subr.bf16.mxu0 0
  %563 = vmatpush2.bf16.msra.mxu0 %v411
  %564 = vmatprep.subr.bf16.mxu0 0
  %565 = vmatpush2.bf16.msra.mxu0 %v410
  %566 = vmatprep.subr.bf16.mxu0 0
  %567 = vmatpush2.bf16.msra.mxu0 %v409
  %568 = vmatprep.subr.bf16.mxu0 0
  %569 = vmatpush2.bf16.msra.mxu0 %v408
  %570 = vmatprep.subr.bf16.mxu0 0
  %571 = vmatpush2.bf16.msra.mxu0 %v407
  %572 = vmatprep.subr.bf16.mxu0 0
  %573 = vmatpush2.bf16.msra.mxu0 %v406
  %574 = vmatprep.mubr.bf16.mxu0 %v196
  %575 = vmatmul.mubr.bf16.gmra.mxu0 %v195
  %v576 = vpop.f32.mrf.mxu0
  %v577 = vadd.f32 %v505, %v576
  %v578 = vpop.f32.mrf.mxu0
  %v579 = vpop.f32.mrf.mxu0
  %v580 = vadd.f32 %v508, %v579
  %v581 = vpop.f32.mrf.mxu0
  %582 = vmatprep.mubr.bf16.mxu0 %v201
  %583 = vmatmul.mubr.bf16.gmra.mxu0 %v200
  %v584 = vpop.f32.mrf.mxu0
  %v585 = vadd.f32 %v513, %v584
  %v586 = vpop.f32.mrf.mxu0
  %v587 = vpop.f32.mrf.mxu0
  %v588 = vadd.f32 %v516, %v587
  %v589 = vpop.f32.mrf.mxu0
  %590 = vmatprep.mubr.bf16.mxu0 %v206
  %591 = vmatmul.mubr.bf16.gmra.mxu0 %v205
  %v592 = vpop.f32.mrf.mxu0
  %v593 = vadd.f32 %v521, %v592
  %v594 = vpop.f32.mrf.mxu0
  %v595 = vpop.f32.mrf.mxu0
  %v596 = vadd.f32 %v524, %v595
  %v597 = vpop.f32.mrf.mxu0
  %598 = vmatprep.mubr.bf16.mxu0 %v211
  %599 = vmatmul.mubr.bf16.gmra.mxu0 %v210
  %v600 = vpop.f32.mrf.mxu0
  %v601 = vadd.f32 %v529, %v600
  %v602 = vpop.f32.mrf.mxu0
  %v603 = vpop.f32.mrf.mxu0
  %v604 = vadd.f32 %v532, %v603
  %v605 = vpop.f32.mrf.mxu0
  %606 = vmatprep.mubr.bf16.mxu0 %v216
  %607 = vmatmul.mubr.bf16.gmra.mxu0 %v215
  %v608 = vpop.f32.mrf.mxu0
  %v609 = vadd.f32 %v537, %v608
  %v610 = vpop.f32.mrf.mxu0
  %v611 = vpop.f32.mrf.mxu0
  %v612 = vpop.f32.mrf.mxu0
  %613 = vdwg.mxu0
  %614 = vmatprep.subr.bf16.mxu0 0
  %615 = vmatpush1.bf16.msra.mxu0 0
  %616 = vmatprep.subr.bf16.mxu0 0
  %617 = vmatpush1.bf16.msra.mxu0 0
  %618 = vmatprep.subr.bf16.mxu0 0
  %619 = vmatpush1.bf16.msra.mxu0 0
  %620 = vmatprep.subr.bf16.mxu0 0
  %621 = vmatpush1.bf16.msra.mxu0 0
  %622 = vmatprep.subr.bf16.mxu0 0
  %623 = vmatpush1.bf16.msra.mxu0 %v417
  %624 = vmatprep.subr.bf16.mxu0 0
  %625 = vmatpush1.bf16.msra.mxu0 %v416
  %626 = vmatprep.subr.bf16.mxu0 0
  %627 = vmatpush1.bf16.msra.mxu0 %v415
  %628 = vmatprep.subr.bf16.mxu0 0
  %629 = vmatpush1.bf16.msra.mxu0 %v414
  %630 = vmatprep.subr.bf16.mxu0 0
  %631 = vmatpush2.bf16.msra.mxu0 0
  %632 = vmatprep.subr.bf16.mxu0 0
  %633 = vmatpush2.bf16.msra.mxu0 0
  %634 = vmatprep.subr.bf16.mxu0 0
  %635 = vmatpush2.bf16.msra.mxu0 0
  %636 = vmatprep.subr.bf16.mxu0 0
  %637 = vmatpush2.bf16.msra.mxu0 0
  %638 = vmatprep.subr.bf16.mxu0 0
  %639 = vmatpush2.bf16.msra.mxu0 0
  %640 = vmatprep.subr.bf16.mxu0 0
  %641 = vmatpush2.bf16.msra.mxu0 0
  %642 = vmatprep.subr.bf16.mxu0 0
  %643 = vmatpush2.bf16.msra.mxu0 0
  %644 = vmatprep.subr.bf16.mxu0 0
  %645 = vmatpush2.bf16.msra.mxu0 0
  %646 = vmatprep.mubr.bf16.mxu0 0
  %647 = vmatmul.mubr.bf16.gmra.mxu0 %v456
  %v648 = vpop.f32.mrf.mxu0
  %v649 = vadd.f32 %v577, %v648
  %v650 = vpop.f32.mrf.mxu0
  %v651 = vpop.f32.mrf.mxu0
  %v652 = vadd.f32 %v580, %v651
  %v653 = vpop.f32.mrf.mxu0
  %654 = vmatprep.mubr.bf16.mxu0 0
  %655 = vmatmul.mubr.bf16.gmra.mxu0 %v459
  %v656 = vpop.f32.mrf.mxu0
  %v657 = vadd.f32 %v585, %v656
  %v658 = vpop.f32.mrf.mxu0
  %v659 = vpop.f32.mrf.mxu0
  %v660 = vadd.f32 %v588, %v659
  %v661 = vpop.f32.mrf.mxu0
  %662 = vmatprep.mubr.bf16.mxu0 0
  %663 = vmatmul.mubr.bf16.gmra.mxu0 %v462
  %v664 = vpop.f32.mrf.mxu0
  %v665 = vadd.f32 %v593, %v664
  %v666 = vpop.f32.mrf.mxu0
  %v667 = vpop.f32.mrf.mxu0
  %v668 = vadd.f32 %v596, %v667
  %v669 = vpop.f32.mrf.mxu0
  %670 = vmatprep.mubr.bf16.mxu0 0
  %671 = vmatmul.mubr.bf16.gmra.mxu0 %v465
  %v672 = vpop.f32.mrf.mxu0
  %v673 = vadd.f32 %v601, %v672
  %v674 = vpop.f32.mrf.mxu0
  %v675 = vpop.f32.mrf.mxu0
  %v676 = vadd.f32 %v604, %v675
  %v677 = vpop.f32.mrf.mxu0
  %678 = vmatprep.mubr.bf16.mxu0 0
  %679 = vmatmul.mubr.bf16.gmra.mxu0 %v468
  %v680 = vpop.f32.mrf.mxu0
  %v681 = vadd.f32 %v609, %v680
  %v682 = vpop.f32.mrf.mxu0
  %v683 = vpop.f32.mrf.mxu0
  %v684 = vpop.f32.mrf.mxu0
  %685 = vdwg.mxu0
  %v686 = vmax.f32 %v649, 0.0
  %v687 = vmax.f32 %v652, 0.0
  %v688 = vmax.f32 %v657, 0.0
  %v689 = vmax.f32 %v660, 0.0
  %v690 = vmax.f32 %v665, 0.0
  %v691 = vmax.f32 %v668, 0.0
  %v692 = vmax.f32 %v673, 0.0
  %v693 = vmax.f32 %v676, 0.0
  %v694 = vmax.f32 %v681, 0.0
  %v695 = vpack.c.bf16 %v687, %v686
  %v696 = vpack.c.bf16 %v689, %v688
  %v697 = vpack.c.bf16 %v691, %v690
  %v698 = vpack.c.bf16 %v693, %v692
  %v699 = vpack.c.bf16 %v694, %v694
  %v705 = vunpack.c.l.b16 %v695
  %v706 = vunpack.c.h.b16 %v695
  %v707 = vunpack.c.l.b16 %v696
  %v708 = vunpack.c.h.b16 %v696
  %v709 = vunpack.c.l.b16 %v697
  %v710 = vunpack.c.h.b16 %v697
  %v711 = vunpack.c.l.b16 %v698
  %v712 = vunpack.c.h.b16 %v698
  %v713 = vunpack.c.l.b16 %v699
  %v714 = vpack.c.b16 %v705, %v705
  %v715 = vpack.c.b16 %v706, %v706
  %v716 = vpack.c.b16 %v707, %v707
  %v717 = vpack.c.b16 %v708, %v708
  %v718 = vpack.c.b16 %v709, %v709
  %v719 = vpack.c.b16 %v710, %v710
  %v720 = vpack.c.b16 %v711, %v711
  %v721 = vpack.c.b16 %v712, %v712
  %v722 = vpack.c.b16 %v713, %v713
  %vm732 = vcmask 519168
  %733 = vst.msk [vmem:[%s3] sm:$0xf] %vm732, %v714
  %734 = vst.msk [vmem:[%s3 + $0x4] sm:$0xf] %vm732, %v715
  %735 = vst.msk [vmem:[%s3 + $0x8] sm:$0xf] %vm732, %v716
  %736 = vst.msk [vmem:[%s3 + $0xc] sm:$0xf] %vm732, %v717
  %737 = vst.msk [vmem:[%s3 + $0x10] sm:$0xf] %vm732, %v718
  %738 = vst.msk [vmem:[%s3 + $0x14] sm:$0xf] %vm732, %v719
  %739 = vst.msk [vmem:[%s3 + $0x18] sm:$0xf] %vm732, %v720
  %740 = vst.msk [vmem:[%s3 + $0x1c] sm:$0xf] %vm732, %v721
  %741 = vst.msk [vmem:[%s3 + $0x20] sm:$0xf] %vm732, %v722
  // Predicated region
  $region14: #{cnn_policy_forward.6} parent=0 // pred_check
    _
  $region15: #{cnn_policy_forward.6} parent=0 // pred_check_branch
    %743 = sbr.rel (0) target = $region17
  $region16: #{cnn_policy_forward.6} parent=0 // pred_region
    _
  $region17: #{cnn_policy_forward.6} parent=0 // pred_fallthru
    _
  // Predicated region
  $region18: #{cnn_policy_forward.6} parent=0 // pred_check
    _
  $region19: #{cnn_policy_forward.6} parent=0 // pred_check_branch
    %745 = sbr.rel (0) target = $region21
  $region20: #{cnn_policy_forward.6} parent=0 // pred_region
    _
  $region21: #{cnn_policy_forward.6} parent=0 // pred_fallthru
    _

// kernel: cnn_policy_forward.7
$region0: #{cnn_policy_forward.7}
  #allocation0 [shape = 'u32[]', space=smem, size = 0x4, offset = 0x4, fixed_abs, tag = 'smem constant byte address 0x4 - core index']
  #allocation1 [shape = 'u32[144,128]{1,0:T(1,128)}', space=vmem, size = 0x12000, scoped, tag = 'internal scratch']
  %s0 = inlined_call_operand.vmem [shape: bf16[8,2304], index: 0, kind: input, shape index: {}]
  %s1 = inlined_call_operand.vmem [shape: bf16[2304,512], index: 1, kind: input, shape index: {}]
  %s2 = inlined_call_operand.vmem [shape: f32[1,512], index: 2, kind: input, shape index: {}]
  %s3 = inlined_call_operand.vmem [shape: bf16[512,128], index: 3, kind: input, shape index: {}]
  %s4 = inlined_call_operand.vmem [shape: f32[1,128], index: 4, kind: input, shape index: {}]
  %s5 = inlined_call_operand.vmem [shape: f32[8,128], index: 5, kind: output, shape index: {}]
  %s6 = sld [smem:[#allocation0]]
  $region30: #{cnn_policy_forward.7} parent=0
    _
  %s8 = ssub.s32 1, %s6
  %s9 = scalar_select 0, %s8, %s6
  // Predicated region
  $region2: #{cnn_policy_forward.7} parent=0 // pred_check
    _
  $region3: #{cnn_policy_forward.7} parent=0 // pred_check_branch
    %11 = sbr.rel (0) target = $region5
  $region4: #{cnn_policy_forward.7} parent=0 // pred_region
    _
  $region5: #{cnn_policy_forward.7} parent=0 // pred_fallthru
    _
  // Predicated region
  $region6: #{cnn_policy_forward.7} parent=0 // pred_check
    _
  $region7: #{cnn_policy_forward.7} parent=0 // pred_check_branch
    %13 = sbr.rel (0) target = $region9
  $region8: #{cnn_policy_forward.7} parent=0 // pred_region
    _
  $region9: #{cnn_policy_forward.7} parent=0 // pred_fallthru
    _
  // Predicated region
  $region10: #{cnn_policy_forward.7} parent=0 // pred_check
    _
  $region11: #{cnn_policy_forward.7} parent=0 // pred_check_branch
    %15 = sbr.rel (0) target = $region13
  $region12: #{cnn_policy_forward.7} parent=0 // pred_region
    _
  $region13: #{cnn_policy_forward.7} parent=0 // pred_fallthru
    _
  // Predicated region
  $region14: #{cnn_policy_forward.7} parent=0 // pred_check
    _
  $region15: #{cnn_policy_forward.7} parent=0 // pred_check_branch
    %17 = sbr.rel (0) target = $region17
  $region16: #{cnn_policy_forward.7} parent=0 // pred_region
    _
  $region17: #{cnn_policy_forward.7} parent=0 // pred_fallthru
    _
  // Predicated region
  $region18: #{cnn_policy_forward.7} parent=0 // pred_check
    _
  $region19: #{cnn_policy_forward.7} parent=0 // pred_check_branch
    %19 = sbr.rel (0) target = $region21
  $region20: #{cnn_policy_forward.7} parent=0 // pred_region
    _
  $region21: #{cnn_policy_forward.7} parent=0 // pred_fallthru
    _
  %v21 = vld [vmem:[%s0] sm:$0xff]
  %v22 = vld [vmem:[%s0 + $0x8] sm:$0xff]
  %v23 = vld [vmem:[%s0 + $0x10] sm:$0xff]
  %v24 = vld [vmem:[%s0 + $0x18] sm:$0xff]
  %v25 = vld [vmem:[%s0 + $0x20] sm:$0xff]
  %v26 = vld [vmem:[%s0 + $0x28] sm:$0xff]
  %v27 = vld [vmem:[%s0 + $0x30] sm:$0xff]
  %v28 = vld [vmem:[%s0 + $0x38] sm:$0xff]
  %v29 = vld [vmem:[%s0 + $0x40] sm:$0xff]
  %v30 = vld [vmem:[%s1] sm:$0xff]
  %v31 = vld [vmem:[%s1 + $0x8] sm:$0xff]
  %v32 = vld [vmem:[%s1 + $0x10] sm:$0xff]
  %v33 = vld [vmem:[%s1 + $0x18] sm:$0xff]
  %v34 = vld [vmem:[%s1 + $0x20] sm:$0xff]
  %v35 = vld [vmem:[%s1 + $0x28] sm:$0xff]
  %v36 = vld [vmem:[%s1 + $0x30] sm:$0xff]
  %v37 = vld [vmem:[%s1 + $0x38] sm:$0xff]
  %v38 = vld [vmem:[%s1 + $0x40] sm:$0xff]
  %v39 = vld [vmem:[%s1 + $0x48] sm:$0xff]
  %v40 = vld [vmem:[%s1 + $0x50] sm:$0xff]
  %v41 = vld [vmem:[%s1 + $0x58] sm:$0xff]
  %v42 = vld [vmem:[%s1 + $0x60] sm:$0xff]
  %v43 = vld [vmem:[%s1 + $0x68] sm:$0xff]
  %v44 = vld [vmem:[%s1 + $0x70] sm:$0xff]
  %v45 = vld [vmem:[%s1 + $0x78] sm:$0xff]
  %v46 = vld [vmem:[%s1 + $0x80] sm:$0xff]
  %v47 = vld [vmem:[%s1 + $0x88] sm:$0xff]
  %v48 = vld [vmem:[%s1 + $0x90] sm:$0xff]
  %v49 = vld [vmem:[%s1 + $0x98] sm:$0xff]
  %v50 = vld [vmem:[%s1 + $0xa0] sm:$0xff]
  %v51 = vld [vmem:[%s1 + $0xa8] sm:$0xff]
  %v52 = vld [vmem:[%s1 + $0xb0] sm:$0xff]
  %v53 = vld [vmem:[%s1 + $0xb8] sm:$0xff]
  %v54 = vld [vmem:[%s1 + $0xc0] sm:$0xff]
  %v55 = vld [vmem:[%s1 + $0xc8] sm:$0xff]
  %v56 = vld [vmem:[%s1 + $0xd0] sm:$0xff]
  %v57 = vld [vmem:[%s1 + $0xd8] sm:$0xff]
  %v58 = vld [vmem:[%s1 + $0xe0] sm:$0xff]
  %v59 = vld [vmem:[%s1 + $0xe8] sm:$0xff]
  %v60 = vld [vmem:[%s1 + $0xf0] sm:$0xff]
  %v61 = vld [vmem:[%s1 + $0xf8] sm:$0xff]
  %v62 = vld [vmem:[%s1 + $0x100] sm:$0xff]
  %v63 = vld [vmem:[%s1 + $0x108] sm:$0xff]
  %v64 = vld [vmem:[%s1 + $0x110] sm:$0xff]
  %v65 = vld [vmem:[%s1 + $0x118] sm:$0xff]
  %v66 = vld [vmem:[%s1 + $0x120] sm:$0xff]
  %v67 = vld [vmem:[%s1 + $0x128] sm:$0xff]
  %v68 = vld [vmem:[%s1 + $0x130] sm:$0xff]
  %v69 = vld [vmem:[%s1 + $0x138] sm:$0xff]
  %v70 = vld [vmem:[%s1 + $0x140] sm:$0xff]
  %v71 = vld [vmem:[%s1 + $0x148] sm:$0xff]
  %v72 = vld [vmem:[%s1 + $0x150] sm:$0xff]
  %v73 = vld [vmem:[%s1 + $0x158] sm:$0xff]
  %v74 = vld [vmem:[%s1 + $0x160] sm:$0xff]
  %v75 = vld [vmem:[%s1 + $0x168] sm:$0xff]
  %v76 = vld [vmem:[%s1 + $0x170] sm:$0xff]
  %v77 = vld [vmem:[%s1 + $0x178] sm:$0xff]
  %v78 = vld [vmem:[%s1 + $0x180] sm:$0xff]
  %v79 = vld [vmem:[%s1 + $0x188] sm:$0xff]
  %v80 = vld [vmem:[%s1 + $0x190] sm:$0xff]
  %v81 = vld [vmem:[%s1 + $0x198] sm:$0xff]
  %v82 = vld [vmem:[%s1 + $0x1a0] sm:$0xff]
  %v83 = vld [vmem:[%s1 + $0x1a8] sm:$0xff]
  %v84 = vld [vmem:[%s1 + $0x1b0] sm:$0xff]
  %v85 = vld [vmem:[%s1 + $0x1b8] sm:$0xff]
  %v86 = vld [vmem:[%s1 + $0x1c0] sm:$0xff]
  %v87 = vld [vmem:[%s1 + $0x1c8] sm:$0xff]
  %v88 = vld [vmem:[%s1 + $0x1d0] sm:$0xff]
  %v89 = vld [vmem:[%s1 + $0x1d8] sm:$0xff]
  %v90 = vld [vmem:[%s1 + $0x1e0] sm:$0xff]
  %v91 = vld [vmem:[%s1 + $0x1e8] sm:$0xff]
  %v92 = vld [vmem:[%s1 + $0x1f0] sm:$0xff]
  %v93 = vld [vmem:[%s1 + $0x1f8] sm:$0xff]
  %v94 = vld [vmem:[%s1 + $0x200] sm:$0xff]
  %v95 = vld [vmem:[%s1 + $0x208] sm:$0xff]
  %v96 = vld [vmem:[%s1 + $0x210] sm:$0xff]
  %v97 = vld [vmem:[%s1 + $0x218] sm:$0xff]
  %v98 = vld [vmem:[%s1 + $0x220] sm:$0xff]
  %v99 = vld [vmem:[%s1 + $0x228] sm:$0xff]
  %v100 = vld [vmem:[%s1 + $0x230] sm:$0xff]
  %v101 = vld [vmem:[%s1 + $0x238] sm:$0xff]
  %v102 = vld [vmem:[%s1 + $0x240] sm:$0xff]
  %v103 = vld [vmem:[%s1 + $0x248] sm:$0xff]
  %v104 = vld [vmem:[%s1 + $0x250] sm:$0xff]
  %v105 = vld [vmem:[%s1 + $0x258] sm:$0xff]
  %v106 = vld [vmem:[%s1 + $0x260] sm:$0xff]
  %v107 = vld [vmem:[%s1 + $0x268] sm:$0xff]
  %v108 = vld [vmem:[%s1 + $0x270] sm:$0xff]
  %v109 = vld [vmem:[%s1 + $0x278] sm:$0xff]
  %v110 = vld [vmem:[%s1 + $0x280] sm:$0xff]
  %v111 = vld [vmem:[%s1 + $0x288] sm:$0xff]
  %v112 = vld [vmem:[%s1 + $0x290] sm:$0xff]
  %v113 = vld [vmem:[%s1 + $0x298] sm:$0xff]
  %v114 = vld [vmem:[%s1 + $0x2a0] sm:$0xff]
  %v115 = vld [vmem:[%s1 + $0x2a8] sm:$0xff]
  %v116 = vld [vmem:[%s1 + $0x2b0] sm:$0xff]
  %v117 = vld [vmem:[%s1 + $0x2b8] sm:$0xff]
  %v118 = vld [vmem:[%s1 + $0x2c0] sm:$0xff]
  %v119 = vld [vmem:[%s1 + $0x2c8] sm:$0xff]
  %v120 = vld [vmem:[%s1 + $0x2d0] sm:$0xff]
  %v121 = vld [vmem:[%s1 + $0x2d8] sm:$0xff]
  %v122 = vld [vmem:[%s1 + $0x2e0] sm:$0xff]
  %v123 = vld [vmem:[%s1 + $0x2e8] sm:$0xff]
  %v124 = vld [vmem:[%s1 + $0x2f0] sm:$0xff]
  %v125 = vld [vmem:[%s1 + $0x2f8] sm:$0xff]
  %v126 = vld [vmem:[%s1 + $0x300] sm:$0xff]
  %v127 = vld [vmem:[%s1 + $0x308] sm:$0xff]
  %v128 = vld [vmem:[%s1 + $0x310] sm:$0xff]
  %v129 = vld [vmem:[%s1 + $0x318] sm:$0xff]
  %v130 = vld [vmem:[%s1 + $0x320] sm:$0xff]
  %v131 = vld [vmem:[%s1 + $0x328] sm:$0xff]
  %v132 = vld [vmem:[%s1 + $0x330] sm:$0xff]
  %v133 = vld [vmem:[%s1 + $0x338] sm:$0xff]
  %v134 = vld [vmem:[%s1 + $0x340] sm:$0xff]
  %v135 = vld [vmem:[%s1 + $0x348] sm:$0xff]
  %v136 = vld [vmem:[%s1 + $0x350] sm:$0xff]
  %v137 = vld [vmem:[%s1 + $0x358] sm:$0xff]
  %v138 = vld [vmem:[%s1 + $0x360] sm:$0xff]
  %v139 = vld [vmem:[%s1 + $0x368] sm:$0xff]
  %v140 = vld [vmem:[%s1 + $0x370] sm:$0xff]
  %v141 = vld [vmem:[%s1 + $0x378] sm:$0xff]
  %v142 = vld [vmem:[%s1 + $0x380] sm:$0xff]
  %v143 = vld [vmem:[%s1 + $0x388] sm:$0xff]
  %v144 = vld [vmem:[%s1 + $0x390] sm:$0xff]
  %v145 = vld [vmem:[%s1 + $0x398] sm:$0xff]
  %v146 = vld [vmem:[%s1 + $0x3a0] sm:$0xff]
  %v147 = vld [vmem:[%s1 + $0x3a8] sm:$0xff]
  %v148 = vld [vmem:[%s1 + $0x3b0] sm:$0xff]
  %v149 = vld [vmem:[%s1 + $0x3b8] sm:$0xff]
  %v150 = vld [vmem:[%s1 + $0x3c0] sm:$0xff]
  %v151 = vld [vmem:[%s1 + $0x3c8] sm:$0xff]
  %v152 = vld [vmem:[%s1 + $0x3d0] sm:$0xff]
  %v153 = vld [vmem:[%s1 + $0x3d8] sm:$0xff]
  %v154 = vld [vmem:[%s1 + $0x3e0] sm:$0xff]
  %v155 = vld [vmem:[%s1 + $0x3e8] sm:$0xff]
  %v156 = vld [vmem:[%s1 + $0x3f0] sm:$0xff]
  %v157 = vld [vmem:[%s1 + $0x3f8] sm:$0xff]
  %v158 = vld [vmem:[%s1 + $0x400] sm:$0xff]
  %v159 = vld [vmem:[%s1 + $0x408] sm:$0xff]
  %v160 = vld [vmem:[%s1 + $0x410] sm:$0xff]
  %v161 = vld [vmem:[%s1 + $0x418] sm:$0xff]
  %v162 = vld [vmem:[%s1 + $0x420] sm:$0xff]
  %v163 = vld [vmem:[%s1 + $0x428] sm:$0xff]
  %v164 = vld [vmem:[%s1 + $0x430] sm:$0xff]
  %v165 = vld [vmem:[%s1 + $0x438] sm:$0xff]
  %v166 = vld [vmem:[%s1 + $0x440] sm:$0xff]
  %v167 = vld [vmem:[%s1 + $0x448] sm:$0xff]
  %v168 = vld [vmem:[%s1 + $0x450] sm:$0xff]
  %v169 = vld [vmem:[%s1 + $0x458] sm:$0xff]
  %v170 = vld [vmem:[%s1 + $0x460] sm:$0xff]
  %v171 = vld [vmem:[%s1 + $0x468] sm:$0xff]
  %v172 = vld [vmem:[%s1 + $0x470] sm:$0xff]
  %v173 = vld [vmem:[%s1 + $0x478] sm:$0xff]
  %v174 = vld [vmem:[%s1 + $0x480] sm:$0xff]
  %v175 = vld [vmem:[%s1 + $0x488] sm:$0xff]
  %v176 = vld [vmem:[%s1 + $0x490] sm:$0xff]
  %v177 = vld [vmem:[%s1 + $0x498] sm:$0xff]
  %v178 = vld [vmem:[%s1 + $0x4a0] sm:$0xff]
  %v179 = vld [vmem:[%s1 + $0x4a8] sm:$0xff]
  %v180 = vld [vmem:[%s1 + $0x4b0] sm:$0xff]
  %v181 = vld [vmem:[%s1 + $0x4b8] sm:$0xff]
  %v182 = vld [vmem:[%s1 + $0x4c0] sm:$0xff]
  %v183 = vld [vmem:[%s1 + $0x4c8] sm:$0xff]
  %v184 = vld [vmem:[%s1 + $0x4d0] sm:$0xff]
  %v185 = vld [vmem:[%s1 + $0x4d8] sm:$0xff]
  %v186 = vld [vmem:[%s1 + $0x4e0] sm:$0xff]
  %v187 = vld [vmem:[%s1 + $0x4e8] sm:$0xff]
  %v188 = vld [vmem:[%s1 + $0x4f0] sm:$0xff]
  %v189 = vld [vmem:[%s1 + $0x4f8] sm:$0xff]
  %v190 = vld [vmem:[%s1 + $0x500] sm:$0xff]
  %v191 = vld [vmem:[%s1 + $0x508] sm:$0xff]
  %v192 = vld [vmem:[%s1 + $0x510] sm:$0xff]
  %v193 = vld [vmem:[%s1 + $0x518] sm:$0xff]
  %v194 = vld [vmem:[%s1 + $0x520] sm:$0xff]
  %v195 = vld [vmem:[%s1 + $0x528] sm:$0xff]
  %v196 = vld [vmem:[%s1 + $0x530] sm:$0xff]
  %v197 = vld [vmem:[%s1 + $0x538] sm:$0xff]
  %v198 = vld [vmem:[%s1 + $0x540] sm:$0xff]
  %v199 = vld [vmem:[%s1 + $0x548] sm:$0xff]
  %v200 = vld [vmem:[%s1 + $0x550] sm:$0xff]
  %v201 = vld [vmem:[%s1 + $0x558] sm:$0xff]
  %v202 = vld [vmem:[%s1 + $0x560] sm:$0xff]
  %v203 = vld [vmem:[%s1 + $0x568] sm:$0xff]
  %v204 = vld [vmem:[%s1 + $0x570] sm:$0xff]
  %v205 = vld [vmem:[%s1 + $0x578] sm:$0xff]
  %v206 = vld [vmem:[%s1 + $0x580] sm:$0xff]
  %v207 = vld [vmem:[%s1 + $0x588] sm:$0xff]
  %v208 = vld [vmem:[%s1 + $0x590] sm:$0xff]
  %v209 = vld [vmem:[%s1 + $0x598] sm:$0xff]
  %v210 = vld [vmem:[%s1 + $0x5a0] sm:$0xff]
  %v211 = vld [vmem:[%s1 + $0x5a8] sm:$0xff]
  %v212 = vld [vmem:[%s1 + $0x5b0] sm:$0xff]
  %v213 = vld [vmem:[%s1 + $0x5b8] sm:$0xff]
  %v214 = vld [vmem:[%s1 + $0x5c0] sm:$0xff]
  %v215 = vld [vmem:[%s1 + $0x5c8] sm:$0xff]
  %v216 = vld [vmem:[%s1 + $0x5d0] sm:$0xff]
  %v217 = vld [vmem:[%s1 + $0x5d8] sm:$0xff]
  %v218 = vld [vmem:[%s1 + $0x5e0] sm:$0xff]
  %v219 = vld [vmem:[%s1 + $0x5e8] sm:$0xff]
  %v220 = vld [vmem:[%s1 + $0x5f0] sm:$0xff]
  %v221 = vld [vmem:[%s1 + $0x5f8] sm:$0xff]
  %v222 = vld [vmem:[%s1 + $0x600] sm:$0xff]
  %v223 = vld [vmem:[%s1 + $0x608] sm:$0xff]
  %v224 = vld [vmem:[%s1 + $0x610] sm:$0xff]
  %v225 = vld [vmem:[%s1 + $0x618] sm:$0xff]
  %v226 = vld [vmem:[%s1 + $0x620] sm:$0xff]
  %v227 = vld [vmem:[%s1 + $0x628] sm:$0xff]
  %v228 = vld [vmem:[%s1 + $0x630] sm:$0xff]
  %v229 = vld [vmem:[%s1 + $0x638] sm:$0xff]
  %v230 = vld [vmem:[%s1 + $0x640] sm:$0xff]
  %v231 = vld [vmem:[%s1 + $0x648] sm:$0xff]
  %v232 = vld [vmem:[%s1 + $0x650] sm:$0xff]
  %v233 = vld [vmem:[%s1 + $0x658] sm:$0xff]
  %v234 = vld [vmem:[%s1 + $0x660] sm:$0xff]
  %v235 = vld [vmem:[%s1 + $0x668] sm:$0xff]
  %v236 = vld [vmem:[%s1 + $0x670] sm:$0xff]
  %v237 = vld [vmem:[%s1 + $0x678] sm:$0xff]
  %v238 = vld [vmem:[%s1 + $0x680] sm:$0xff]
  %v239 = vld [vmem:[%s1 + $0x688] sm:$0xff]
  %v240 = vld [vmem:[%s1 + $0x690] sm:$0xff]
  %v241 = vld [vmem:[%s1 + $0x698] sm:$0xff]
  %v242 = vld [vmem:[%s1 + $0x6a0] sm:$0xff]
  %v243 = vld [vmem:[%s1 + $0x6a8] sm:$0xff]
  %v244 = vld [vmem:[%s1 + $0x6b0] sm:$0xff]
  %v245 = vld [vmem:[%s1 + $0x6b8] sm:$0xff]
  %v246 = vld [vmem:[%s1 + $0x6c0] sm:$0xff]
  %v247 = vld [vmem:[%s1 + $0x6c8] sm:$0xff]
  %v248 = vld [vmem:[%s1 + $0x6d0] sm:$0xff]
  %v249 = vld [vmem:[%s1 + $0x6d8] sm:$0xff]
  %v250 = vld [vmem:[%s1 + $0x6e0] sm:$0xff]
  %v251 = vld [vmem:[%s1 + $0x6e8] sm:$0xff]
  %v252 = vld [vmem:[%s1 + $0x6f0] sm:$0xff]
  %v253 = vld [vmem:[%s1 + $0x6f8] sm:$0xff]
  %v254 = vld [vmem:[%s1 + $0x700] sm:$0xff]
  %v255 = vld [vmem:[%s1 + $0x708] sm:$0xff]
  %v256 = vld [vmem:[%s1 + $0x710] sm:$0xff]
  %v257 = vld [vmem:[%s1 + $0x718] sm:$0xff]
  %v258 = vld [vmem:[%s1 + $0x720] sm:$0xff]
  %v259 = vld [vmem:[%s1 + $0x728] sm:$0xff]
  %v260 = vld [vmem:[%s1 + $0x730] sm:$0xff]
  %v261 = vld [vmem:[%s1 + $0x738] sm:$0xff]
  %v262 = vld [vmem:[%s1 + $0x740] sm:$0xff]
  %v263 = vld [vmem:[%s1 + $0x748] sm:$0xff]
  %v264 = vld [vmem:[%s1 + $0x750] sm:$0xff]
  %v265 = vld [vmem:[%s1 + $0x758] sm:$0xff]
  %v266 = vld [vmem:[%s1 + $0x760] sm:$0xff]
  %v267 = vld [vmem:[%s1 + $0x768] sm:$0xff]
  %v268 = vld [vmem:[%s1 + $0x770] sm:$0xff]
  %v269 = vld [vmem:[%s1 + $0x778] sm:$0xff]
  %v270 = vld [vmem:[%s1 + $0x780] sm:$0xff]
  %v271 = vld [vmem:[%s1 + $0x788] sm:$0xff]
  %v272 = vld [vmem:[%s1 + $0x790] sm:$0xff]
  %v273 = vld [vmem:[%s1 + $0x798] sm:$0xff]
  %v274 = vld [vmem:[%s1 + $0x7a0] sm:$0xff]
  %v275 = vld [vmem:[%s1 + $0x7a8] sm:$0xff]
  %v276 = vld [vmem:[%s1 + $0x7b0] sm:$0xff]
  %v277 = vld [vmem:[%s1 + $0x7b8] sm:$0xff]
  %v278 = vld [vmem:[%s1 + $0x7c0] sm:$0xff]
  %v279 = vld [vmem:[%s1 + $0x7c8] sm:$0xff]
  %v280 = vld [vmem:[%s1 + $0x7d0] sm:$0xff]
  %v281 = vld [vmem:[%s1 + $0x7d8] sm:$0xff]
  %v282 = vld [vmem:[%s1 + $0x7e0] sm:$0xff]
  %v283 = vld [vmem:[%s1 + $0x7e8] sm:$0xff]
  %v284 = vld [vmem:[%s1 + $0x7f0] sm:$0xff]
  %v285 = vld [vmem:[%s1 + $0x7f8] sm:$0xff]
  %v286 = vld [vmem:[%s1 + $0x800] sm:$0xff]
  %v287 = vld [vmem:[%s1 + $0x808] sm:$0xff]
  %v288 = vld [vmem:[%s1 + $0x810] sm:$0xff]
  %v289 = vld [vmem:[%s1 + $0x818] sm:$0xff]
  %v290 = vld [vmem:[%s1 + $0x820] sm:$0xff]
  %v291 = vld [vmem:[%s1 + $0x828] sm:$0xff]
  %v292 = vld [vmem:[%s1 + $0x830] sm:$0xff]
  %v293 = vld [vmem:[%s1 + $0x838] sm:$0xff]
  %v294 = vld [vmem:[%s1 + $0x840] sm:$0xff]
  %v295 = vld [vmem:[%s1 + $0x848] sm:$0xff]
  %v296 = vld [vmem:[%s1 + $0x850] sm:$0xff]
  %v297 = vld [vmem:[%s1 + $0x858] sm:$0xff]
  %v298 = vld [vmem:[%s1 + $0x860] sm:$0xff]
  %v299 = vld [vmem:[%s1 + $0x868] sm:$0xff]
  %v300 = vld [vmem:[%s1 + $0x870] sm:$0xff]
  %v301 = vld [vmem:[%s1 + $0x878] sm:$0xff]
  %v302 = vld [vmem:[%s1 + $0x880] sm:$0xff]
  %v303 = vld [vmem:[%s1 + $0x888] sm:$0xff]
  %v304 = vld [vmem:[%s1 + $0x890] sm:$0xff]
  %v305 = vld [vmem:[%s1 + $0x898] sm:$0xff]
  %v306 = vld [vmem:[%s1 + $0x8a0] sm:$0xff]
  %v307 = vld [vmem:[%s1 + $0x8a8] sm:$0xff]
  %v308 = vld [vmem:[%s1 + $0x8b0] sm:$0xff]
  %v309 = vld [vmem:[%s1 + $0x8b8] sm:$0xff]
  %v310 = vld [vmem:[%s1 + $0x8c0] sm:$0xff]
  %v311 = vld [vmem:[%s1 + $0x8c8] sm:$0xff]
  %v312 = vld [vmem:[%s1 + $0x8d0] sm:$0xff]
  %v313 = vld [vmem:[%s1 + $0x8d8] sm:$0xff]
  %v314 = vld [vmem:[%s1 + $0x8e0] sm:$0xff]
  %v315 = vld [vmem:[%s1 + $0x8e8] sm:$0xff]
  %v316 = vld [vmem:[%s1 + $0x8f0] sm:$0xff]
  %v317 = vld [vmem:[%s1 + $0x8f8] sm:$0xff]
  %v318 = vld [vmem:[%s1 + $0x900] sm:$0xff]
  %v319 = vld [vmem:[%s1 + $0x908] sm:$0xff]
  %v320 = vld [vmem:[%s1 + $0x910] sm:$0xff]
  %v321 = vld [vmem:[%s1 + $0x918] sm:$0xff]
  %v322 = vld [vmem:[%s1 + $0x920] sm:$0xff]
  %v323 = vld [vmem:[%s1 + $0x928] sm:$0xff]
  %v324 = vld [vmem:[%s1 + $0x930] sm:$0xff]
  %v325 = vld [vmem:[%s1 + $0x938] sm:$0xff]
  %v326 = vld [vmem:[%s1 + $0x940] sm:$0xff]
  %v327 = vld [vmem:[%s1 + $0x948] sm:$0xff]
  %v328 = vld [vmem:[%s1 + $0x950] sm:$0xff]
  %v329 = vld [vmem:[%s1 + $0x958] sm:$0xff]
  %v330 = vld [vmem:[%s1 + $0x960] sm:$0xff]
  %v331 = vld [vmem:[%s1 + $0x968] sm:$0xff]
  %v332 = vld [vmem:[%s1 + $0x970] sm:$0xff]
  %v333 = vld [vmem:[%s1 + $0x978] sm:$0xff]
  %v334 = vld [vmem:[%s1 + $0x980] sm:$0xff]
  %v335 = vld [vmem:[%s1 + $0x988] sm:$0xff]
  %v336 = vld [vmem:[%s1 + $0x990] sm:$0xff]
  %v337 = vld [vmem:[%s1 + $0x998] sm:$0xff]
  %v338 = vld [vmem:[%s1 + $0x9a0] sm:$0xff]
  %v339 = vld [vmem:[%s1 + $0x9a8] sm:$0xff]
  %v340 = vld [vmem:[%s1 + $0x9b0] sm:$0xff]
  %v341 = vld [vmem:[%s1 + $0x9b8] sm:$0xff]
  %v342 = vld [vmem:[%s1 + $0x9c0] sm:$0xff]
  %v343 = vld [vmem:[%s1 + $0x9c8] sm:$0xff]
  %v344 = vld [vmem:[%s1 + $0x9d0] sm:$0xff]
  %v345 = vld [vmem:[%s1 + $0x9d8] sm:$0xff]
  %v346 = vld [vmem:[%s1 + $0x9e0] sm:$0xff]
  %v347 = vld [vmem:[%s1 + $0x9e8] sm:$0xff]
  %v348 = vld [vmem:[%s1 + $0x9f0] sm:$0xff]
  %v349 = vld [vmem:[%s1 + $0x9f8] sm:$0xff]
  %v350 = vld [vmem:[%s1 + $0xa00] sm:$0xff]
  %v351 = vld [vmem:[%s1 + $0xa08] sm:$0xff]
  %v352 = vld [vmem:[%s1 + $0xa10] sm:$0xff]
  %v353 = vld [vmem:[%s1 + $0xa18] sm:$0xff]
  %v354 = vld [vmem:[%s1 + $0xa20] sm:$0xff]
  %v355 = vld [vmem:[%s1 + $0xa28] sm:$0xff]
  %v356 = vld [vmem:[%s1 + $0xa30] sm:$0xff]
  %v357 = vld [vmem:[%s1 + $0xa38] sm:$0xff]
  %v358 = vld [vmem:[%s1 + $0xa40] sm:$0xff]
  %v359 = vld [vmem:[%s1 + $0xa48] sm:$0xff]
  %v360 = vld [vmem:[%s1 + $0xa50] sm:$0xff]
  %v361 = vld [vmem:[%s1 + $0xa58] sm:$0xff]
  %v362 = vld [vmem:[%s1 + $0xa60] sm:$0xff]
  %v363 = vld [vmem:[%s1 + $0xa68] sm:$0xff]
  %v364 = vld [vmem:[%s1 + $0xa70] sm:$0xff]
  %v365 = vld [vmem:[%s1 + $0xa78] sm:$0xff]
  %v366 = vld [vmem:[%s1 + $0xa80] sm:$0xff]
  %v367 = vld [vmem:[%s1 + $0xa88] sm:$0xff]
  %v368 = vld [vmem:[%s1 + $0xa90] sm:$0xff]
  %v369 = vld [vmem:[%s1 + $0xa98] sm:$0xff]
  %v370 = vld [vmem:[%s1 + $0xaa0] sm:$0xff]
  %v371 = vld [vmem:[%s1 + $0xaa8] sm:$0xff]
  %v372 = vld [vmem:[%s1 + $0xab0] sm:$0xff]
  %v373 = vld [vmem:[%s1 + $0xab8] sm:$0xff]
  %v374 = vld [vmem:[%s1 + $0xac0] sm:$0xff]
  %v375 = vld [vmem:[%s1 + $0xac8] sm:$0xff]
  %v376 = vld [vmem:[%s1 + $0xad0] sm:$0xff]
  %v377 = vld [vmem:[%s1 + $0xad8] sm:$0xff]
  %v378 = vld [vmem:[%s1 + $0xae0] sm:$0xff]
  %v379 = vld [vmem:[%s1 + $0xae8] sm:$0xff]
  %v380 = vld [vmem:[%s1 + $0xaf0] sm:$0xff]
  %v381 = vld [vmem:[%s1 + $0xaf8] sm:$0xff]
  %v382 = vld [vmem:[%s1 + $0xb00] sm:$0xff]
  %v383 = vld [vmem:[%s1 + $0xb08] sm:$0xff]
  %v384 = vld [vmem:[%s1 + $0xb10] sm:$0xff]
  %v385 = vld [vmem:[%s1 + $0xb18] sm:$0xff]
  %v386 = vld [vmem:[%s1 + $0xb20] sm:$0xff]
  %v387 = vld [vmem:[%s1 + $0xb28] sm:$0xff]
  %v388 = vld [vmem:[%s1 + $0xb30] sm:$0xff]
  %v389 = vld [vmem:[%s1 + $0xb38] sm:$0xff]
  %v390 = vld [vmem:[%s1 + $0xb40] sm:$0xff]
  %v391 = vld [vmem:[%s1 + $0xb48] sm:$0xff]
  %v392 = vld [vmem:[%s1 + $0xb50] sm:$0xff]
  %v393 = vld [vmem:[%s1 + $0xb58] sm:$0xff]
  %v394 = vld [vmem:[%s1 + $0xb60] sm:$0xff]
  %v395 = vld [vmem:[%s1 + $0xb68] sm:$0xff]
  %v396 = vld [vmem:[%s1 + $0xb70] sm:$0xff]
  %v397 = vld [vmem:[%s1 + $0xb78] sm:$0xff]
  %v398 = vld [vmem:[%s1 + $0xb80] sm:$0xff]
  %v399 = vld [vmem:[%s1 + $0xb88] sm:$0xff]
  %v400 = vld [vmem:[%s1 + $0xb90] sm:$0xff]
  %v401 = vld [vmem:[%s1 + $0xb98] sm:$0xff]
  %v402 = vld [vmem:[%s1 + $0xba0] sm:$0xff]
  %v403 = vld [vmem:[%s1 + $0xba8] sm:$0xff]
  %v404 = vld [vmem:[%s1 + $0xbb0] sm:$0xff]
  %v405 = vld [vmem:[%s1 + $0xbb8] sm:$0xff]
  %v406 = vld [vmem:[%s1 + $0xbc0] sm:$0xff]
  %v407 = vld [vmem:[%s1 + $0xbc8] sm:$0xff]
  %v408 = vld [vmem:[%s1 + $0xbd0] sm:$0xff]
  %v409 = vld [vmem:[%s1 + $0xbd8] sm:$0xff]
  %v410 = vld [vmem:[%s1 + $0xbe0] sm:$0xff]
  %v411 = vld [vmem:[%s1 + $0xbe8] sm:$0xff]
  %v412 = vld [vmem:[%s1 + $0xbf0] sm:$0xff]
  %v413 = vld [vmem:[%s1 + $0xbf8] sm:$0xff]
  %v414 = vld [vmem:[%s1 + $0xc00] sm:$0xff]
  %v415 = vld [vmem:[%s1 + $0xc08] sm:$0xff]
  %v416 = vld [vmem:[%s1 + $0xc10] sm:$0xff]
  %v417 = vld [vmem:[%s1 + $0xc18] sm:$0xff]
  %v418 = vld [vmem:[%s1 + $0xc20] sm:$0xff]
  %v419 = vld [vmem:[%s1 + $0xc28] sm:$0xff]
  %v420 = vld [vmem:[%s1 + $0xc30] sm:$0xff]
  %v421 = vld [vmem:[%s1 + $0xc38] sm:$0xff]
  %v422 = vld [vmem:[%s1 + $0xc40] sm:$0xff]
  %v423 = vld [vmem:[%s1 + $0xc48] sm:$0xff]
  %v424 = vld [vmem:[%s1 + $0xc50] sm:$0xff]
  %v425 = vld [vmem:[%s1 + $0xc58] sm:$0xff]
  %v426 = vld [vmem:[%s1 + $0xc60] sm:$0xff]
  %v427 = vld [vmem:[%s1 + $0xc68] sm:$0xff]
  %v428 = vld [vmem:[%s1 + $0xc70] sm:$0xff]
  %v429 = vld [vmem:[%s1 + $0xc78] sm:$0xff]
  %v430 = vld [vmem:[%s1 + $0xc80] sm:$0xff]
  %v431 = vld [vmem:[%s1 + $0xc88] sm:$0xff]
  %v432 = vld [vmem:[%s1 + $0xc90] sm:$0xff]
  %v433 = vld [vmem:[%s1 + $0xc98] sm:$0xff]
  %v434 = vld [vmem:[%s1 + $0xca0] sm:$0xff]
  %v435 = vld [vmem:[%s1 + $0xca8] sm:$0xff]
  %v436 = vld [vmem:[%s1 + $0xcb0] sm:$0xff]
  %v437 = vld [vmem:[%s1 + $0xcb8] sm:$0xff]
  %v438 = vld [vmem:[%s1 + $0xcc0] sm:$0xff]
  %v439 = vld [vmem:[%s1 + $0xcc8] sm:$0xff]
  %v440 = vld [vmem:[%s1 + $0xcd0] sm:$0xff]
  %v441 = vld [vmem:[%s1 + $0xcd8] sm:$0xff]
  %v442 = vld [vmem:[%s1 + $0xce0] sm:$0xff]
  %v443 = vld [vmem:[%s1 + $0xce8] sm:$0xff]
  %v444 = vld [vmem:[%s1 + $0xcf0] sm:$0xff]
  %v445 = vld [vmem:[%s1 + $0xcf8] sm:$0xff]
  %v446 = vld [vmem:[%s1 + $0xd00] sm:$0xff]
  %v447 = vld [vmem:[%s1 + $0xd08] sm:$0xff]
  %v448 = vld [vmem:[%s1 + $0xd10] sm:$0xff]
  %v449 = vld [vmem:[%s1 + $0xd18] sm:$0xff]
  %v450 = vld [vmem:[%s1 + $0xd20] sm:$0xff]
  %v451 = vld [vmem:[%s1 + $0xd28] sm:$0xff]
  %v452 = vld [vmem:[%s1 + $0xd30] sm:$0xff]
  %v453 = vld [vmem:[%s1 + $0xd38] sm:$0xff]
  %v454 = vld [vmem:[%s1 + $0xd40] sm:$0xff]
  %v455 = vld [vmem:[%s1 + $0xd48] sm:$0xff]
  %v456 = vld [vmem:[%s1 + $0xd50] sm:$0xff]
  %v457 = vld [vmem:[%s1 + $0xd58] sm:$0xff]
  %v458 = vld [vmem:[%s1 + $0xd60] sm:$0xff]
  %v459 = vld [vmem:[%s1 + $0xd68] sm:$0xff]
  %v460 = vld [vmem:[%s1 + $0xd70] sm:$0xff]
  %v461 = vld [vmem:[%s1 + $0xd78] sm:$0xff]
  %v462 = vld [vmem:[%s1 + $0xd80] sm:$0xff]
  %v463 = vld [vmem:[%s1 + $0xd88] sm:$0xff]
  %v464 = vld [vmem:[%s1 + $0xd90] sm:$0xff]
  %v465 = vld [vmem:[%s1 + $0xd98] sm:$0xff]
  %v466 = vld [vmem:[%s1 + $0xda0] sm:$0xff]
  %v467 = vld [vmem:[%s1 + $0xda8] sm:$0xff]
  %v468 = vld [vmem:[%s1 + $0xdb0] sm:$0xff]
  %v469 = vld [vmem:[%s1 + $0xdb8] sm:$0xff]
  %v470 = vld [vmem:[%s1 + $0xdc0] sm:$0xff]
  %v471 = vld [vmem:[%s1 + $0xdc8] sm:$0xff]
  %v472 = vld [vmem:[%s1 + $0xdd0] sm:$0xff]
  %v473 = vld [vmem:[%s1 + $0xdd8] sm:$0xff]
  %v474 = vld [vmem:[%s1 + $0xde0] sm:$0xff]
  %v475 = vld [vmem:[%s1 + $0xde8] sm:$0xff]
  %v476 = vld [vmem:[%s1 + $0xdf0] sm:$0xff]
  %v477 = vld [vmem:[%s1 + $0xdf8] sm:$0xff]
  %v478 = vld [vmem:[%s1 + $0xe00] sm:$0xff]
  %v479 = vld [vmem:[%s1 + $0xe08] sm:$0xff]
  %v480 = vld [vmem:[%s1 + $0xe10] sm:$0xff]
  %v481 = vld [vmem:[%s1 + $0xe18] sm:$0xff]
  %v482 = vld [vmem:[%s1 + $0xe20] sm:$0xff]
  %v483 = vld [vmem:[%s1 + $0xe28] sm:$0xff]
  %v484 = vld [vmem:[%s1 + $0xe30] sm:$0xff]
  %v485 = vld [vmem:[%s1 + $0xe38] sm:$0xff]
  %v486 = vld [vmem:[%s1 + $0xe40] sm:$0xff]
  %v487 = vld [vmem:[%s1 + $0xe48] sm:$0xff]
  %v488 = vld [vmem:[%s1 + $0xe50] sm:$0xff]
  %v489 = vld [vmem:[%s1 + $0xe58] sm:$0xff]
  %v490 = vld [vmem:[%s1 + $0xe60] sm:$0xff]
  %v491 = vld [vmem:[%s1 + $0xe68] sm:$0xff]
  %v492 = vld [vmem:[%s1 + $0xe70] sm:$0xff]
  %v493 = vld [vmem:[%s1 + $0xe78] sm:$0xff]
  %v494 = vld [vmem:[%s1 + $0xe80] sm:$0xff]
  %v495 = vld [vmem:[%s1 + $0xe88] sm:$0xff]
  %v496 = vld [vmem:[%s1 + $0xe90] sm:$0xff]
  %v497 = vld [vmem:[%s1 + $0xe98] sm:$0xff]
  %v498 = vld [vmem:[%s1 + $0xea0] sm:$0xff]
  %v499 = vld [vmem:[%s1 + $0xea8] sm:$0xff]
  %v500 = vld [vmem:[%s1 + $0xeb0] sm:$0xff]
  %v501 = vld [vmem:[%s1 + $0xeb8] sm:$0xff]
  %v502 = vld [vmem:[%s1 + $0xec0] sm:$0xff]
  %v503 = vld [vmem:[%s1 + $0xec8] sm:$0xff]
  %v504 = vld [vmem:[%s1 + $0xed0] sm:$0xff]
  %v505 = vld [vmem:[%s1 + $0xed8] sm:$0xff]
  %v506 = vld [vmem:[%s1 + $0xee0] sm:$0xff]
  %v507 = vld [vmem:[%s1 + $0xee8] sm:$0xff]
  %v508 = vld [vmem:[%s1 + $0xef0] sm:$0xff]
  %v509 = vld [vmem:[%s1 + $0xef8] sm:$0xff]
  %v510 = vld [vmem:[%s1 + $0xf00] sm:$0xff]
  %v511 = vld [vmem:[%s1 + $0xf08] sm:$0xff]
  %v512 = vld [vmem:[%s1 + $0xf10] sm:$0xff]
  %v513 = vld [vmem:[%s1 + $0xf18] sm:$0xff]
  %v514 = vld [vmem:[%s1 + $0xf20] sm:$0xff]
  %v515 = vld [vmem:[%s1 + $0xf28] sm:$0xff]
  %v516 = vld [vmem:[%s1 + $0xf30] sm:$0xff]
  %v517 = vld [vmem:[%s1 + $0xf38] sm:$0xff]
  %v518 = vld [vmem:[%s1 + $0xf40] sm:$0xff]
  %v519 = vld [vmem:[%s1 + $0xf48] sm:$0xff]
  %v520 = vld [vmem:[%s1 + $0xf50] sm:$0xff]
  %v521 = vld [vmem:[%s1 + $0xf58] sm:$0xff]
  %v522 = vld [vmem:[%s1 + $0xf60] sm:$0xff]
  %v523 = vld [vmem:[%s1 + $0xf68] sm:$0xff]
  %v524 = vld [vmem:[%s1 + $0xf70] sm:$0xff]
  %v525 = vld [vmem:[%s1 + $0xf78] sm:$0xff]
  %v526 = vld [vmem:[%s1 + $0xf80] sm:$0xff]
  %v527 = vld [vmem:[%s1 + $0xf88] sm:$0xff]
  %v528 = vld [vmem:[%s1 + $0xf90] sm:$0xff]
  %v529 = vld [vmem:[%s1 + $0xf98] sm:$0xff]
  %v530 = vld [vmem:[%s1 + $0xfa0] sm:$0xff]
  %v531 = vld [vmem:[%s1 + $0xfa8] sm:$0xff]
  %v532 = vld [vmem:[%s1 + $0xfb0] sm:$0xff]
  %v533 = vld [vmem:[%s1 + $0xfb8] sm:$0xff]
  %v534 = vld [vmem:[%s1 + $0xfc0] sm:$0xff]
  %v535 = vld [vmem:[%s1 + $0xfc8] sm:$0xff]
  %v536 = vld [vmem:[%s1 + $0xfd0] sm:$0xff]
  %v537 = vld [vmem:[%s1 + $0xfd8] sm:$0xff]
  %v538 = vld [vmem:[%s1 + $0xfe0] sm:$0xff]
  %v539 = vld [vmem:[%s1 + $0xfe8] sm:$0xff]
  %v540 = vld [vmem:[%s1 + $0xff0] sm:$0xff]
  %v541 = vld [vmem:[%s1 + $0xff8] sm:$0xff]
  %v542 = vld [vmem:[%s1 + $0x1000] sm:$0xff]
  %v543 = vld [vmem:[%s1 + $0x1008] sm:$0xff]
  %v544 = vld [vmem:[%s1 + $0x1010] sm:$0xff]
  %v545 = vld [vmem:[%s1 + $0x1018] sm:$0xff]
  %v546 = vld [vmem:[%s1 + $0x1020] sm:$0xff]
  %v547 = vld [vmem:[%s1 + $0x1028] sm:$0xff]
  %v548 = vld [vmem:[%s1 + $0x1030] sm:$0xff]
  %v549 = vld [vmem:[%s1 + $0x1038] sm:$0xff]
  %v550 = vld [vmem:[%s1 + $0x1040] sm:$0xff]
  %v551 = vld [vmem:[%s1 + $0x1048] sm:$0xff]
  %v552 = vld [vmem:[%s1 + $0x1050] sm:$0xff]
  %v553 = vld [vmem:[%s1 + $0x1058] sm:$0xff]
  %v554 = vld [vmem:[%s1 + $0x1060] sm:$0xff]
  %v555 = vld [vmem:[%s1 + $0x1068] sm:$0xff]
  %v556 = vld [vmem:[%s1 + $0x1070] sm:$0xff]
  %v557 = vld [vmem:[%s1 + $0x1078] sm:$0xff]
  %v558 = vld [vmem:[%s1 + $0x1080] sm:$0xff]
  %v559 = vld [vmem:[%s1 + $0x1088] sm:$0xff]
  %v560 = vld [vmem:[%s1 + $0x1090] sm:$0xff]
  %v561 = vld [vmem:[%s1 + $0x1098] sm:$0xff]
  %v562 = vld [vmem:[%s1 + $0x10a0] sm:$0xff]
  %v563 = vld [vmem:[%s1 + $0x10a8] sm:$0xff]
  %v564 = vld [vmem:[%s1 + $0x10b0] sm:$0xff]
  %v565 = vld [vmem:[%s1 + $0x10b8] sm:$0xff]
  %v566 = vld [vmem:[%s1 + $0x10c0] sm:$0xff]
  %v567 = vld [vmem:[%s1 + $0x10c8] sm:$0xff]
  %v568 = vld [vmem:[%s1 + $0x10d0] sm:$0xff]
  %v569 = vld [vmem:[%s1 + $0x10d8] sm:$0xff]
  %v570 = vld [vmem:[%s1 + $0x10e0] sm:$0xff]
  %v571 = vld [vmem:[%s1 + $0x10e8] sm:$0xff]
  %v572 = vld [vmem:[%s1 + $0x10f0] sm:$0xff]
  %v573 = vld [vmem:[%s1 + $0x10f8] sm:$0xff]
  %v574 = vld [vmem:[%s1 + $0x1100] sm:$0xff]
  %v575 = vld [vmem:[%s1 + $0x1108] sm:$0xff]
  %v576 = vld [vmem:[%s1 + $0x1110] sm:$0xff]
  %v577 = vld [vmem:[%s1 + $0x1118] sm:$0xff]
  %v578 = vld [vmem:[%s1 + $0x1120] sm:$0xff]
  %v579 = vld [vmem:[%s1 + $0x1128] sm:$0xff]
  %v580 = vld [vmem:[%s1 + $0x1130] sm:$0xff]
  %v581 = vld [vmem:[%s1 + $0x1138] sm:$0xff]
  %v582 = vld [vmem:[%s1 + $0x1140] sm:$0xff]
  %v583 = vld [vmem:[%s1 + $0x1148] sm:$0xff]
  %v584 = vld [vmem:[%s1 + $0x1150] sm:$0xff]
  %v585 = vld [vmem:[%s1 + $0x1158] sm:$0xff]
  %v586 = vld [vmem:[%s1 + $0x1160] sm:$0xff]
  %v587 = vld [vmem:[%s1 + $0x1168] sm:$0xff]
  %v588 = vld [vmem:[%s1 + $0x1170] sm:$0xff]
  %v589 = vld [vmem:[%s1 + $0x1178] sm:$0xff]
  %v590 = vld [vmem:[%s1 + $0x1180] sm:$0xff]
  %v591 = vld [vmem:[%s1 + $0x1188] sm:$0xff]
  %v592 = vld [vmem:[%s1 + $0x1190] sm:$0xff]
  %v593 = vld [vmem:[%s1 + $0x1198] sm:$0xff]
  %v594 = vld [vmem:[%s1 + $0x11a0] sm:$0xff]
  %v595 = vld [vmem:[%s1 + $0x11a8] sm:$0xff]
  %v596 = vld [vmem:[%s1 + $0x11b0] sm:$0xff]
  %v597 = vld [vmem:[%s1 + $0x11b8] sm:$0xff]
  %v598 = vld [vmem:[%s1 + $0x11c0] sm:$0xff]
  %v599 = vld [vmem:[%s1 + $0x11c8] sm:$0xff]
  %v600 = vld [vmem:[%s1 + $0x11d0] sm:$0xff]
  %v601 = vld [vmem:[%s1 + $0x11d8] sm:$0xff]
  %v602 = vld [vmem:[%s1 + $0x11e0] sm:$0xff]
  %v603 = vld [vmem:[%s1 + $0x11e8] sm:$0xff]
  %v604 = vld [vmem:[%s1 + $0x11f0] sm:$0xff]
  %v605 = vld [vmem:[%s1 + $0x11f8] sm:$0xff]
  %v606 = vld [vmem:[%s2] sm:$0xf]
  %v608 = vlaneseq
  %v609 = vshrl.u32 %v608, 7
  %v610 = vsub.s32 0, %v609
  %v611 = vrot.slane %v606, %v610
  %v612 = vlaneseq
  %v613 = vshrl.u32 %v612, 7
  %v614 = vsub.s32 1, %v613
  %v615 = vrot.slane %v606, %v614
  %v616 = vlaneseq
  %v617 = vshrl.u32 %v616, 7
  %v618 = vsub.s32 2, %v617
  %v619 = vrot.slane %v606, %v618
  %v620 = vlaneseq
  %v621 = vshrl.u32 %v620, 7
  %v622 = vsub.s32 3, %v621
  %v623 = vrot.slane %v606, %v622
  %v637 = vunpack.c.l.b16 %v21
  %v638 = vunpack.c.h.b16 %v21
  %v639 = vunpack.c.l.b16 %v22
  %v640 = vunpack.c.h.b16 %v22
  %v641 = vunpack.c.l.b16 %v23
  %v642 = vunpack.c.h.b16 %v23
  %v643 = vunpack.c.l.b16 %v24
  %v644 = vunpack.c.h.b16 %v24
  %v645 = vunpack.c.l.b16 %v25
  %v646 = vunpack.c.h.b16 %v25
  %v647 = vunpack.c.l.b16 %v26
  %v648 = vunpack.c.h.b16 %v26
  %v649 = vunpack.c.l.b16 %v27
  %v650 = vunpack.c.h.b16 %v27
  %v651 = vunpack.c.l.b16 %v28
  %v652 = vunpack.c.h.b16 %v28
  %v653 = vunpack.c.l.b16 %v29
  %v654 = vunpack.c.h.b16 %v29
  %v655 = vpack.c.b16 %v637, %v637
  %v656 = vpack.c.b16 %v638, %v638
  %v657 = vpack.c.b16 %v639, %v639
  %v658 = vpack.c.b16 %v640, %v640
  %v659 = vpack.c.b16 %v641, %v641
  %v660 = vpack.c.b16 %v642, %v642
  %v661 = vpack.c.b16 %v643, %v643
  %v662 = vpack.c.b16 %v644, %v644
  %v663 = vpack.c.b16 %v645, %v645
  %v664 = vpack.c.b16 %v646, %v646
  %v665 = vpack.c.b16 %v647, %v647
  %v666 = vpack.c.b16 %v648, %v648
  %v667 = vpack.c.b16 %v649, %v649
  %v668 = vpack.c.b16 %v650, %v650
  %v669 = vpack.c.b16 %v651, %v651
  %v670 = vpack.c.b16 %v652, %v652
  %v671 = vpack.c.b16 %v653, %v653
  %v672 = vpack.c.b16 %v654, %v654
  %v1267 = vunpack.c.l.b16 %v30
  %v1268 = vunpack.c.h.b16 %v30
  %v1269 = vunpack.c.l.b16 %v31
  %v1270 = vunpack.c.h.b16 %v31
  %v1271 = vunpack.c.l.b16 %v32
  %v1272 = vunpack.c.h.b16 %v32
  %v1273 = vunpack.c.l.b16 %v33
  %v1274 = vunpack.c.h.b16 %v33
  %v1275 = vunpack.c.l.b16 %v34
  %v1276 = vunpack.c.h.b16 %v34
  %v1277 = vunpack.c.l.b16 %v35
  %v1278 = vunpack.c.h.b16 %v35
  %v1279 = vunpack.c.l.b16 %v36
  %v1280 = vunpack.c.h.b16 %v36
  %v1281 = vunpack.c.l.b16 %v37
  %v1282 = vunpack.c.h.b16 %v37
  %v1283 = vunpack.c.l.b16 %v38
  %v1284 = vunpack.c.h.b16 %v38
  %v1285 = vunpack.c.l.b16 %v39
  %v1286 = vunpack.c.h.b16 %v39
  %v1287 = vunpack.c.l.b16 %v40
  %v1288 = vunpack.c.h.b16 %v40
  %v1289 = vunpack.c.l.b16 %v41
  %v1290 = vunpack.c.h.b16 %v41
  %v1291 = vunpack.c.l.b16 %v42
  %v1292 = vunpack.c.h.b16 %v42
  %v1293 = vunpack.c.l.b16 %v43
  %v1294 = vunpack.c.h.b16 %v43
  %v1295 = vunpack.c.l.b16 %v44
  %v1296 = vunpack.c.h.b16 %v44
  %v1297 = vunpack.c.l.b16 %v45
  %v1298 = vunpack.c.h.b16 %v45
  %v1299 = vunpack.c.l.b16 %v46
  %v1300 = vunpack.c.h.b16 %v46
  %v1301 = vunpack.c.l.b16 %v47
  %v1302 = vunpack.c.h.b16 %v47
  %v1303 = vunpack.c.l.b16 %v48
  %v1304 = vunpack.c.h.b16 %v48
  %v1305 = vunpack.c.l.b16 %v49
  %v1306 = vunpack.c.h.b16 %v49
  %v1307 = vunpack.c.l.b16 %v50
  %v1308 = vunpack.c.h.b16 %v50
  %v1309 = vunpack.c.l.b16 %v51
  %v1310 = vunpack.c.h.b16 %v51
  %v1311 = vunpack.c.l.b16 %v52
  %v1312 = vunpack.c.h.b16 %v52
  %v1313 = vunpack.c.l.b16 %v53
  %v1314 = vunpack.c.h.b16 %v53
  %v1315 = vunpack.c.l.b16 %v54
  %v1316 = vunpack.c.h.b16 %v54
  %v1317 = vunpack.c.l.b16 %v55
  %v1318 = vunpack.c.h.b16 %v55
  %v1319 = vunpack.c.l.b16 %v56
  %v1320 = vunpack.c.h.b16 %v56
  %v1321 = vunpack.c.l.b16 %v57
  %v1322 = vunpack.c.h.b16 %v57
  %v1323 = vunpack.c.l.b16 %v58
  %v1324 = vunpack.c.h.b16 %v58
  %v1325 = vunpack.c.l.b16 %v59
  %v1326 = vunpack.c.h.b16 %v59
  %v1327 = vunpack.c.l.b16 %v60
  %v1328 = vunpack.c.h.b16 %v60
  %v1329 = vunpack.c.l.b16 %v61
  %v1330 = vunpack.c.h.b16 %v61
  %v1331 = vunpack.c.l.b16 %v62
  %v1332 = vunpack.c.h.b16 %v62
  %v1333 = vunpack.c.l.b16 %v63
  %v1334 = vunpack.c.h.b16 %v63
  %v1335 = vunpack.c.l.b16 %v64
  %v1336 = vunpack.c.h.b16 %v64
  %v1337 = vunpack.c.l.b16 %v65
  %v1338 = vunpack.c.h.b16 %v65
  %v1339 = vunpack.c.l.b16 %v66
  %v1340 = vunpack.c.h.b16 %v66
  %v1341 = vunpack.c.l.b16 %v67
  %v1342 = vunpack.c.h.b16 %v67
  %v1343 = vunpack.c.l.b16 %v68
  %v1344 = vunpack.c.h.b16 %v68
  %v1345 = vunpack.c.l.b16 %v69
  %v1346 = vunpack.c.h.b16 %v69
  %v1347 = vunpack.c.l.b16 %v70
  %v1348 = vunpack.c.h.b16 %v70
  %v1349 = vunpack.c.l.b16 %v71
  %v1350 = vunpack.c.h.b16 %v71
  %v1351 = vunpack.c.l.b16 %v72
  %v1352 = vunpack.c.h.b16 %v72
  %v1353 = vunpack.c.l.b16 %v73
  %v1354 = vunpack.c.h.b16 %v73
  %v1355 = vunpack.c.l.b16 %v74
  %v1356 = vunpack.c.h.b16 %v74
  %v1357 = vunpack.c.l.b16 %v75
  %v1358 = vunpack.c.h.b16 %v75
  %v1359 = vunpack.c.l.b16 %v76
  %v1360 = vunpack.c.h.b16 %v76
  %v1361 = vunpack.c.l.b16 %v77
  %v1362 = vunpack.c.h.b16 %v77
  %v1363 = vunpack.c.l.b16 %v78
  %v1364 = vunpack.c.h.b16 %v78
  %v1365 = vunpack.c.l.b16 %v79
  %v1366 = vunpack.c.h.b16 %v79
  %v1367 = vunpack.c.l.b16 %v80
  %v1368 = vunpack.c.h.b16 %v80
  %v1369 = vunpack.c.l.b16 %v81
  %v1370 = vunpack.c.h.b16 %v81
  %v1371 = vunpack.c.l.b16 %v82
  %v1372 = vunpack.c.h.b16 %v82
  %v1373 = vunpack.c.l.b16 %v83
  %v1374 = vunpack.c.h.b16 %v83
  %v1375 = vunpack.c.l.b16 %v84
  %v1376 = vunpack.c.h.b16 %v84
  %v1377 = vunpack.c.l.b16 %v85
  %v1378 = vunpack.c.h.b16 %v85
  %v1379 = vunpack.c.l.b16 %v86
  %v1380 = vunpack.c.h.b16 %v86
  %v1381 = vunpack.c.l.b16 %v87
  %v1382 = vunpack.c.h.b16 %v87
  %v1383 = vunpack.c.l.b16 %v88
  %v1384 = vunpack.c.h.b16 %v88
  %v1385 = vunpack.c.l.b16 %v89
  %v1386 = vunpack.c.h.b16 %v89
  %v1387 = vunpack.c.l.b16 %v90
  %v1388 = vunpack.c.h.b16 %v90
  %v1389 = vunpack.c.l.b16 %v91
  %v1390 = vunpack.c.h.b16 %v91
  %v1391 = vunpack.c.l.b16 %v92
  %v1392 = vunpack.c.h.b16 %v92
  %v1393 = vunpack.c.l.b16 %v93
  %v1394 = vunpack.c.h.b16 %v93
  %v1395 = vunpack.c.l.b16 %v94
  %v1396 = vunpack.c.h.b16 %v94
  %v1397 = vunpack.c.l.b16 %v95
  %v1398 = vunpack.c.h.b16 %v95
  %v1399 = vunpack.c.l.b16 %v96
  %v1400 = vunpack.c.h.b16 %v96
  %v1401 = vunpack.c.l.b16 %v97
  %v1402 = vunpack.c.h.b16 %v97
  %v1403 = vunpack.c.l.b16 %v98
  %v1404 = vunpack.c.h.b16 %v98
  %v1405 = vunpack.c.l.b16 %v99
  %v1406 = vunpack.c.h.b16 %v99
  %v1407 = vunpack.c.l.b16 %v100
  %v1408 = vunpack.c.h.b16 %v100
  %v1409 = vunpack.c.l.b16 %v101
  %v1410 = vunpack.c.h.b16 %v101
  %v1411 = vunpack.c.l.b16 %v102
  %v1412 = vunpack.c.h.b16 %v102
  %v1413 = vunpack.c.l.b16 %v103
  %v1414 = vunpack.c.h.b16 %v103
  %v1415 = vunpack.c.l.b16 %v104
  %v1416 = vunpack.c.h.b16 %v104
  %v1417 = vunpack.c.l.b16 %v105
  %v1418 = vunpack.c.h.b16 %v105
  %v1419 = vunpack.c.l.b16 %v106
  %v1420 = vunpack.c.h.b16 %v106
  %v1421 = vunpack.c.l.b16 %v107
  %v1422 = vunpack.c.h.b16 %v107
  %v1423 = vunpack.c.l.b16 %v108
  %v1424 = vunpack.c.h.b16 %v108
  %v1425 = vunpack.c.l.b16 %v109
  %v1426 = vunpack.c.h.b16 %v109
  %v1427 = vunpack.c.l.b16 %v110
  %v1428 = vunpack.c.h.b16 %v110
  %v1429 = vunpack.c.l.b16 %v111
  %v1430 = vunpack.c.h.b16 %v111
  %v1431 = vunpack.c.l.b16 %v112
  %v1432 = vunpack.c.h.b16 %v112
  %v1433 = vunpack.c.l.b16 %v113
  %v1434 = vunpack.c.h.b16 %v113
  %v1435 = vunpack.c.l.b16 %v114
  %v1436 = vunpack.c.h.b16 %v114
  %v1437 = vunpack.c.l.b16 %v115
  %v1438 = vunpack.c.h.b16 %v115
  %v1439 = vunpack.c.l.b16 %v116
  %v1440 = vunpack.c.h.b16 %v116
  %v1441 = vunpack.c.l.b16 %v117
  %v1442 = vunpack.c.h.b16 %v117
  %v1443 = vunpack.c.l.b16 %v118
  %v1444 = vunpack.c.h.b16 %v118
  %v1445 = vunpack.c.l.b16 %v119
  %v1446 = vunpack.c.h.b16 %v119
  %v1447 = vunpack.c.l.b16 %v120
  %v1448 = vunpack.c.h.b16 %v120
  %v1449 = vunpack.c.l.b16 %v121
  %v1450 = vunpack.c.h.b16 %v121
  %v1451 = vunpack.c.l.b16 %v122
  %v1452 = vunpack.c.h.b16 %v122
  %v1453 = vunpack.c.l.b16 %v123
  %v1454 = vunpack.c.h.b16 %v123
  %v1455 = vunpack.c.l.b16 %v124
  %v1456 = vunpack.c.h.b16 %v124
  %v1457 = vunpack.c.l.b16 %v125
  %v1458 = vunpack.c.h.b16 %v125
  %v1459 = vunpack.c.l.b16 %v126
  %v1460 = vunpack.c.h.b16 %v126
  %v1461 = vunpack.c.l.b16 %v127
  %v1462 = vunpack.c.h.b16 %v127
  %v1463 = vunpack.c.l.b16 %v128
  %v1464 = vunpack.c.h.b16 %v128
  %v1465 = vunpack.c.l.b16 %v129
  %v1466 = vunpack.c.h.b16 %v129
  %v1467 = vunpack.c.l.b16 %v130
  %v1468 = vunpack.c.h.b16 %v130
  %v1469 = vunpack.c.l.b16 %v131
  %v1470 = vunpack.c.h.b16 %v131
  %v1471 = vunpack.c.l.b16 %v132
  %v1472 = vunpack.c.h.b16 %v132
  %v1473 = vunpack.c.l.b16 %v133
  %v1474 = vunpack.c.h.b16 %v133
  %v1475 = vunpack.c.l.b16 %v134
  %v1476 = vunpack.c.h.b16 %v134
  %v1477 = vunpack.c.l.b16 %v135
  %v1478 = vunpack.c.h.b16 %v135
  %v1479 = vunpack.c.l.b16 %v136
  %v1480 = vunpack.c.h.b16 %v136
  %v1481 = vunpack.c.l.b16 %v137
  %v1482 = vunpack.c.h.b16 %v137
  %v1483 = vunpack.c.l.b16 %v138
  %v1484 = vunpack.c.h.b16 %v138
  %v1485 = vunpack.c.l.b16 %v139
  %v1486 = vunpack.c.h.b16 %v139
  %v1487 = vunpack.c.l.b16 %v140
  %v1488 = vunpack.c.h.b16 %v140
  %v1489 = vunpack.c.l.b16 %v141
  %v1490 = vunpack.c.h.b16 %v141
  %v1491 = vunpack.c.l.b16 %v142
  %v1492 = vunpack.c.h.b16 %v142
  %v1493 = vunpack.c.l.b16 %v143
  %v1494 = vunpack.c.h.b16 %v143
  %v1495 = vunpack.c.l.b16 %v144
  %v1496 = vunpack.c.h.b16 %v144
  %v1497 = vunpack.c.l.b16 %v145
  %v1498 = vunpack.c.h.b16 %v145
  %v1499 = vunpack.c.l.b16 %v146
  %v1500 = vunpack.c.h.b16 %v146
  %v1501 = vunpack.c.l.b16 %v147
  %v1502 = vunpack.c.h.b16 %v147
  %v1503 = vunpack.c.l.b16 %v148
  %v1504 = vunpack.c.h.b16 %v148
  %v1505 = vunpack.c.l.b16 %v149
  %v1506 = vunpack.c.h.b16 %v149
  %v1507 = vunpack.c.l.b16 %v150
  %v1508 = vunpack.c.h.b16 %v150
  %v1509 = vunpack.c.l.b16 %v151
  %v1510 = vunpack.c.h.b16 %v151
  %v1511 = vunpack.c.l.b16 %v152
  %v1512 = vunpack.c.h.b16 %v152
  %v1513 = vunpack.c.l.b16 %v153
  %v1514 = vunpack.c.h.b16 %v153
  %v1515 = vunpack.c.l.b16 %v154
  %v1516 = vunpack.c.h.b16 %v154
  %v1517 = vunpack.c.l.b16 %v155
  %v1518 = vunpack.c.h.b16 %v155
  %v1519 = vunpack.c.l.b16 %v156
  %v1520 = vunpack.c.h.b16 %v156
  %v1521 = vunpack.c.l.b16 %v157
  %v1522 = vunpack.c.h.b16 %v157
  %v1523 = vunpack.c.l.b16 %v158
  %v1524 = vunpack.c.h.b16 %v158
  %v1525 = vunpack.c.l.b16 %v159
  %v1526 = vunpack.c.h.b16 %v159
  %v1527 = vunpack.c.l.b16 %v160
  %v1528 = vunpack.c.h.b16 %v160
  %v1529 = vunpack.c.l.b16 %v161
  %v1530 = vunpack.c.h.b16 %v161
  %v1531 = vunpack.c.l.b16 %v162
  %v1532 = vunpack.c.h.b16 %v162
  %v1533 = vunpack.c.l.b16 %v163
  %v1534 = vunpack.c.h.b16 %v163
  %v1535 = vunpack.c.l.b16 %v164
  %v1536 = vunpack.c.h.b16 %v164
  %v1537 = vunpack.c.l.b16 %v165
  %v1538 = vunpack.c.h.b16 %v165
  %v1539 = vunpack.c.l.b16 %v166
  %v1540 = vunpack.c.h.b16 %v166
  %v1541 = vunpack.c.l.b16 %v167
  %v1542 = vunpack.c.h.b16 %v167
  %v1543 = vunpack.c.l.b16 %v168
  %v1544 = vunpack.c.h.b16 %v168
  %v1545 = vunpack.c.l.b16 %v169
  %v1546 = vunpack.c.h.b16 %v169
  %v1547 = vunpack.c.l.b16 %v170
  %v1548 = vunpack.c.h.b16 %v170
  %v1549 = vunpack.c.l.b16 %v171
  %v1550 = vunpack.c.h.b16 %v171
  %v1551 = vunpack.c.l.b16 %v172
  %v1552 = vunpack.c.h.b16 %v172
  %v1553 = vunpack.c.l.b16 %v173
  %v1554 = vunpack.c.h.b16 %v173
  %v1555 = vunpack.c.l.b16 %v174
  %v1556 = vunpack.c.h.b16 %v174
  %v1557 = vunpack.c.l.b16 %v175
  %v1558 = vunpack.c.h.b16 %v175
  %v1559 = vunpack.c.l.b16 %v176
  %v1560 = vunpack.c.h.b16 %v176
  %v1561 = vunpack.c.l.b16 %v177
  %v1562 = vunpack.c.h.b16 %v177
  %v1563 = vunpack.c.l.b16 %v178
  %v1564 = vunpack.c.h.b16 %v178
  %v1565 = vunpack.c.l.b16 %v179
  %v1566 = vunpack.c.h.b16 %v179
  %v1567 = vunpack.c.l.b16 %v180
  %v1568 = vunpack.c.h.b16 %v180
  %v1569 = vunpack.c.l.b16 %v181
  %v1570 = vunpack.c.h.b16 %v181
  %v1571 = vunpack.c.l.b16 %v182
  %v1572 = vunpack.c.h.b16 %v182
  %v1573 = vunpack.c.l.b16 %v183
  %v1574 = vunpack.c.h.b16 %v183
  %v1575 = vunpack.c.l.b16 %v184
  %v1576 = vunpack.c.h.b16 %v184
  %v1577 = vunpack.c.l.b16 %v185
  %v1578 = vunpack.c.h.b16 %v185
  %v1579 = vunpack.c.l.b16 %v186
  %v1580 = vunpack.c.h.b16 %v186
  %v1581 = vunpack.c.l.b16 %v187
  %v1582 = vunpack.c.h.b16 %v187
  %v1583 = vunpack.c.l.b16 %v188
  %v1584 = vunpack.c.h.b16 %v188
  %v1585 = vunpack.c.l.b16 %v189
  %v1586 = vunpack.c.h.b16 %v189
  %v1587 = vunpack.c.l.b16 %v190
  %v1588 = vunpack.c.h.b16 %v190
  %v1589 = vunpack.c.l.b16 %v191
  %v1590 = vunpack.c.h.b16 %v191
  %v1591 = vunpack.c.l.b16 %v192
  %v1592 = vunpack.c.h.b16 %v192
  %v1593 = vunpack.c.l.b16 %v193
  %v1594 = vunpack.c.h.b16 %v193
  %v1595 = vunpack.c.l.b16 %v194
  %v1596 = vunpack.c.h.b16 %v194
  %v1597 = vunpack.c.l.b16 %v195
  %v1598 = vunpack.c.h.b16 %v195
  %v1599 = vunpack.c.l.b16 %v196
  %v1600 = vunpack.c.h.b16 %v196
  %v1601 = vunpack.c.l.b16 %v197
  %v1602 = vunpack.c.h.b16 %v197
  %v1603 = vunpack.c.l.b16 %v198
  %v1604 = vunpack.c.h.b16 %v198
  %v1605 = vunpack.c.l.b16 %v199
  %v1606 = vunpack.c.h.b16 %v199
  %v1607 = vunpack.c.l.b16 %v200
  %v1608 = vunpack.c.h.b16 %v200
  %v1609 = vunpack.c.l.b16 %v201
  %v1610 = vunpack.c.h.b16 %v201
  %v1611 = vunpack.c.l.b16 %v202
  %v1612 = vunpack.c.h.b16 %v202
  %v1613 = vunpack.c.l.b16 %v203
  %v1614 = vunpack.c.h.b16 %v203
  %v1615 = vunpack.c.l.b16 %v204
  %v1616 = vunpack.c.h.b16 %v204
  %v1617 = vunpack.c.l.b16 %v205
  %v1618 = vunpack.c.h.b16 %v205
  %v1619 = vunpack.c.l.b16 %v206
  %v1620 = vunpack.c.h.b16 %v206
  %v1621 = vunpack.c.l.b16 %v207
  %v1622 = vunpack.c.h.b16 %v207
  %v1623 = vunpack.c.l.b16 %v208
  %v1624 = vunpack.c.h.b16 %v208
  %v1625 = vunpack.c.l.b16 %v209
  %v1626 = vunpack.c.h.b16 %v209
  %v1627 = vunpack.c.l.b16 %v210
  %v1628 = vunpack.c.h.b16 %v210
  %v1629 = vunpack.c.l.b16 %v211
  %v1630 = vunpack.c.h.b16 %v211
  %v1631 = vunpack.c.l.b16 %v212
  %v1632 = vunpack.c.h.b16 %v212
  %v1633 = vunpack.c.l.b16 %v213
  %v1634 = vunpack.c.h.b16 %v213
  %v1635 = vunpack.c.l.b16 %v214
  %v1636 = vunpack.c.h.b16 %v214
  %v1637 = vunpack.c.l.b16 %v215
  %v1638 = vunpack.c.h.b16 %v215
  %v1639 = vunpack.c.l.b16 %v216
  %v1640 = vunpack.c.h.b16 %v216
  %v1641 = vunpack.c.l.b16 %v217
  %v1642 = vunpack.c.h.b16 %v217
  %v1643 = vunpack.c.l.b16 %v218
  %v1644 = vunpack.c.h.b16 %v218
  %v1645 = vunpack.c.l.b16 %v219
  %v1646 = vunpack.c.h.b16 %v219
  %v1647 = vunpack.c.l.b16 %v220
  %v1648 = vunpack.c.h.b16 %v220
  %v1649 = vunpack.c.l.b16 %v221
  %v1650 = vunpack.c.h.b16 %v221
  %v1651 = vunpack.c.l.b16 %v222
  %v1652 = vunpack.c.h.b16 %v222
  %v1653 = vunpack.c.l.b16 %v223
  %v1654 = vunpack.c.h.b16 %v223
  %v1655 = vunpack.c.l.b16 %v224
  %v1656 = vunpack.c.h.b16 %v224
  %v1657 = vunpack.c.l.b16 %v225
  %v1658 = vunpack.c.h.b16 %v225
  %v1659 = vunpack.c.l.b16 %v226
  %v1660 = vunpack.c.h.b16 %v226
  %v1661 = vunpack.c.l.b16 %v227
  %v1662 = vunpack.c.h.b16 %v227
  %v1663 = vunpack.c.l.b16 %v228
  %v1664 = vunpack.c.h.b16 %v228
  %v1665 = vunpack.c.l.b16 %v229
  %v1666 = vunpack.c.h.b16 %v229
  %v1667 = vunpack.c.l.b16 %v230
  %v1668 = vunpack.c.h.b16 %v230
  %v1669 = vunpack.c.l.b16 %v231
  %v1670 = vunpack.c.h.b16 %v231
  %v1671 = vunpack.c.l.b16 %v232
  %v1672 = vunpack.c.h.b16 %v232
  %v1673 = vunpack.c.l.b16 %v233
  %v1674 = vunpack.c.h.b16 %v233
  %v1675 = vunpack.c.l.b16 %v234
  %v1676 = vunpack.c.h.b16 %v234
  %v1677 = vunpack.c.l.b16 %v235
  %v1678 = vunpack.c.h.b16 %v235
  %v1679 = vunpack.c.l.b16 %v236
  %v1680 = vunpack.c.h.b16 %v236
  %v1681 = vunpack.c.l.b16 %v237
  %v1682 = vunpack.c.h.b16 %v237
  %v1683 = vunpack.c.l.b16 %v238
  %v1684 = vunpack.c.h.b16 %v238
  %v1685 = vunpack.c.l.b16 %v239
  %v1686 = vunpack.c.h.b16 %v239
  %v1687 = vunpack.c.l.b16 %v240
  %v1688 = vunpack.c.h.b16 %v240
  %v1689 = vunpack.c.l.b16 %v241
  %v1690 = vunpack.c.h.b16 %v241
  %v1691 = vunpack.c.l.b16 %v242
  %v1692 = vunpack.c.h.b16 %v242
  %v1693 = vunpack.c.l.b16 %v243
  %v1694 = vunpack.c.h.b16 %v243
  %v1695 = vunpack.c.l.b16 %v244
  %v1696 = vunpack.c.h.b16 %v244
  %v1697 = vunpack.c.l.b16 %v245
  %v1698 = vunpack.c.h.b16 %v245
  %v1699 = vunpack.c.l.b16 %v246
  %v1700 = vunpack.c.h.b16 %v246
  %v1701 = vunpack.c.l.b16 %v247
  %v1702 = vunpack.c.h.b16 %v247
  %v1703 = vunpack.c.l.b16 %v248
  %v1704 = vunpack.c.h.b16 %v248
  %v1705 = vunpack.c.l.b16 %v249
  %v1706 = vunpack.c.h.b16 %v249
  %v1707 = vunpack.c.l.b16 %v250
  %v1708 = vunpack.c.h.b16 %v250
  %v1709 = vunpack.c.l.b16 %v251
  %v1710 = vunpack.c.h.b16 %v251
  %v1711 = vunpack.c.l.b16 %v252
  %v1712 = vunpack.c.h.b16 %v252
  %v1713 = vunpack.c.l.b16 %v253
  %v1714 = vunpack.c.h.b16 %v253
  %v1715 = vunpack.c.l.b16 %v254
  %v1716 = vunpack.c.h.b16 %v254
  %v1717 = vunpack.c.l.b16 %v255
  %v1718 = vunpack.c.h.b16 %v255
  %v1719 = vunpack.c.l.b16 %v256
  %v1720 = vunpack.c.h.b16 %v256
  %v1721 = vunpack.c.l.b16 %v257
  %v1722 = vunpack.c.h.b16 %v257
  %v1723 = vunpack.c.l.b16 %v258
  %v1724 = vunpack.c.h.b16 %v258
  %v1725 = vunpack.c.l.b16 %v259
  %v1726 = vunpack.c.h.b16 %v259
  %v1727 = vunpack.c.l.b16 %v260
  %v1728 = vunpack.c.h.b16 %v260
  %v1729 = vunpack.c.l.b16 %v261
  %v1730 = vunpack.c.h.b16 %v261
  %v1731 = vunpack.c.l.b16 %v262
  %v1732 = vunpack.c.h.b16 %v262
  %v1733 = vunpack.c.l.b16 %v263
  %v1734 = vunpack.c.h.b16 %v263
  %v1735 = vunpack.c.l.b16 %v264
  %v1736 = vunpack.c.h.b16 %v264
  %v1737 = vunpack.c.l.b16 %v265
  %v1738 = vunpack.c.h.b16 %v265
  %v1739 = vunpack.c.l.b16 %v266
  %v1740 = vunpack.c.h.b16 %v266
  %v1741 = vunpack.c.l.b16 %v267
  %v1742 = vunpack.c.h.b16 %v267
  %v1743 = vunpack.c.l.b16 %v268
  %v1744 = vunpack.c.h.b16 %v268
  %v1745 = vunpack.c.l.b16 %v269
  %v1746 = vunpack.c.h.b16 %v269
  %v1747 = vunpack.c.l.b16 %v270
  %v1748 = vunpack.c.h.b16 %v270
  %v1749 = vunpack.c.l.b16 %v271
  %v1750 = vunpack.c.h.b16 %v271
  %v1751 = vunpack.c.l.b16 %v272
  %v1752 = vunpack.c.h.b16 %v272
  %v1753 = vunpack.c.l.b16 %v273
  %v1754 = vunpack.c.h.b16 %v273
  %v1755 = vunpack.c.l.b16 %v274
  %v1756 = vunpack.c.h.b16 %v274
  %v1757 = vunpack.c.l.b16 %v275
  %v1758 = vunpack.c.h.b16 %v275
  %v1759 = vunpack.c.l.b16 %v276
  %v1760 = vunpack.c.h.b16 %v276
  %v1761 = vunpack.c.l.b16 %v277
  %v1762 = vunpack.c.h.b16 %v277
  %v1763 = vunpack.c.l.b16 %v278
  %v1764 = vunpack.c.h.b16 %v278
  %v1765 = vunpack.c.l.b16 %v279
  %v1766 = vunpack.c.h.b16 %v279
  %v1767 = vunpack.c.l.b16 %v280
  %v1768 = vunpack.c.h.b16 %v280
  %v1769 = vunpack.c.l.b16 %v281
  %v1770 = vunpack.c.h.b16 %v281
  %v1771 = vunpack.c.l.b16 %v282
  %v1772 = vunpack.c.h.b16 %v282
  %v1773 = vunpack.c.l.b16 %v283
  %v1774 = vunpack.c.h.b16 %v283
  %v1775 = vunpack.c.l.b16 %v284
  %v1776 = vunpack.c.h.b16 %v284
  %v1777 = vunpack.c.l.b16 %v285
  %v1778 = vunpack.c.h.b16 %v285
  %v1779 = vunpack.c.l.b16 %v286
  %v1780 = vunpack.c.h.b16 %v286
  %v1781 = vunpack.c.l.b16 %v287
  %v1782 = vunpack.c.h.b16 %v287
  %v1783 = vunpack.c.l.b16 %v288
  %v1784 = vunpack.c.h.b16 %v288
  %v1785 = vunpack.c.l.b16 %v289
  %v1786 = vunpack.c.h.b16 %v289
  %v1787 = vunpack.c.l.b16 %v290
  %v1788 = vunpack.c.h.b16 %v290
  %v1789 = vunpack.c.l.b16 %v291
  %v1790 = vunpack.c.h.b16 %v291
  %v1791 = vunpack.c.l.b16 %v292
  %v1792 = vunpack.c.h.b16 %v292
  %v1793 = vunpack.c.l.b16 %v293
  %v1794 = vunpack.c.h.b16 %v293
  %v1795 = vunpack.c.l.b16 %v294
  %v1796 = vunpack.c.h.b16 %v294
  %v1797 = vunpack.c.l.b16 %v295
  %v1798 = vunpack.c.h.b16 %v295
  %v1799 = vunpack.c.l.b16 %v296
  %v1800 = vunpack.c.h.b16 %v296
  %v1801 = vunpack.c.l.b16 %v297
  %v1802 = vunpack.c.h.b16 %v297
  %v1803 = vunpack.c.l.b16 %v298
  %v1804 = vunpack.c.h.b16 %v298
  %v1805 = vunpack.c.l.b16 %v299
  %v1806 = vunpack.c.h.b16 %v299
  %v1807 = vunpack.c.l.b16 %v300
  %v1808 = vunpack.c.h.b16 %v300
  %v1809 = vunpack.c.l.b16 %v301
  %v1810 = vunpack.c.h.b16 %v301
  %v1811 = vunpack.c.l.b16 %v302
  %v1812 = vunpack.c.h.b16 %v302
  %v1813 = vunpack.c.l.b16 %v303
  %v1814 = vunpack.c.h.b16 %v303
  %v1815 = vunpack.c.l.b16 %v304
  %v1816 = vunpack.c.h.b16 %v304
  %v1817 = vunpack.c.l.b16 %v305
  %v1818 = vunpack.c.h.b16 %v305
  %v1819 = vunpack.c.l.b16 %v306
  %v1820 = vunpack.c.h.b16 %v306
  %v1821 = vunpack.c.l.b16 %v307
  %v1822 = vunpack.c.h.b16 %v307
  %v1823 = vunpack.c.l.b16 %v308
  %v1824 = vunpack.c.h.b16 %v308
  %v1825 = vunpack.c.l.b16 %v309
  %v1826 = vunpack.c.h.b16 %v309
  %v1827 = vunpack.c.l.b16 %v310
  %v1828 = vunpack.c.h.b16 %v310
  %v1829 = vunpack.c.l.b16 %v311
  %v1830 = vunpack.c.h.b16 %v311
  %v1831 = vunpack.c.l.b16 %v312
  %v1832 = vunpack.c.h.b16 %v312
  %v1833 = vunpack.c.l.b16 %v313
  %v1834 = vunpack.c.h.b16 %v313
  %v1835 = vunpack.c.l.b16 %v314
  %v1836 = vunpack.c.h.b16 %v314
  %v1837 = vunpack.c.l.b16 %v315
  %v1838 = vunpack.c.h.b16 %v315
  %v1839 = vunpack.c.l.b16 %v316
  %v1840 = vunpack.c.h.b16 %v316
  %v1841 = vunpack.c.l.b16 %v317
  %v1842 = vunpack.c.h.b16 %v317
  %v1843 = vunpack.c.l.b16 %v318
  %v1844 = vunpack.c.h.b16 %v318
  %v1845 = vunpack.c.l.b16 %v319
  %v1846 = vunpack.c.h.b16 %v319
  %v1847 = vunpack.c.l.b16 %v320
  %v1848 = vunpack.c.h.b16 %v320
  %v1849 = vunpack.c.l.b16 %v321
  %v1850 = vunpack.c.h.b16 %v321
  %v1851 = vunpack.c.l.b16 %v322
  %v1852 = vunpack.c.h.b16 %v322
  %v1853 = vunpack.c.l.b16 %v323
  %v1854 = vunpack.c.h.b16 %v323
  %v1855 = vunpack.c.l.b16 %v324
  %v1856 = vunpack.c.h.b16 %v324
  %v1857 = vunpack.c.l.b16 %v325
  %v1858 = vunpack.c.h.b16 %v325
  %v1859 = vunpack.c.l.b16 %v326
  %v1860 = vunpack.c.h.b16 %v326
  %v1861 = vunpack.c.l.b16 %v327
  %v1862 = vunpack.c.h.b16 %v327
  %v1863 = vunpack.c.l.b16 %v328
  %v1864 = vunpack.c.h.b16 %v328
  %v1865 = vunpack.c.l.b16 %v329
  %v1866 = vunpack.c.h.b16 %v329
  %v1867 = vunpack.c.l.b16 %v330
  %v1868 = vunpack.c.h.b16 %v330
  %v1869 = vunpack.c.l.b16 %v331
  %v1870 = vunpack.c.h.b16 %v331
  %v1871 = vunpack.c.l.b16 %v332
  %v1872 = vunpack.c.h.b16 %v332
  %v1873 = vunpack.c.l.b16 %v333
  %v1874 = vunpack.c.h.b16 %v333
  %v1875 = vunpack.c.l.b16 %v334
  %v1876 = vunpack.c.h.b16 %v334
  %v1877 = vunpack.c.l.b16 %v335
  %v1878 = vunpack.c.h.b16 %v335
  %v1879 = vunpack.c.l.b16 %v336
  %v1880 = vunpack.c.h.b16 %v336
  %v1881 = vunpack.c.l.b16 %v337
  %v1882 = vunpack.c.h.b16 %v337
  %v1883 = vunpack.c.l.b16 %v338
  %v1884 = vunpack.c.h.b16 %v338
  %v1885 = vunpack.c.l.b16 %v339
  %v1886 = vunpack.c.h.b16 %v339
  %v1887 = vunpack.c.l.b16 %v340
  %v1888 = vunpack.c.h.b16 %v340
  %v1889 = vunpack.c.l.b16 %v341
  %v1890 = vunpack.c.h.b16 %v341
  %v1891 = vunpack.c.l.b16 %v342
  %v1892 = vunpack.c.h.b16 %v342
  %v1893 = vunpack.c.l.b16 %v343
  %v1894 = vunpack.c.h.b16 %v343
  %v1895 = vunpack.c.l.b16 %v344
  %v1896 = vunpack.c.h.b16 %v344
  %v1897 = vunpack.c.l.b16 %v345
  %v1898 = vunpack.c.h.b16 %v345
  %v1899 = vunpack.c.l.b16 %v346
  %v1900 = vunpack.c.h.b16 %v346
  %v1901 = vunpack.c.l.b16 %v347
  %v1902 = vunpack.c.h.b16 %v347
  %v1903 = vunpack.c.l.b16 %v348
  %v1904 = vunpack.c.h.b16 %v348
  %v1905 = vunpack.c.l.b16 %v349
  %v1906 = vunpack.c.h.b16 %v349
  %v1907 = vunpack.c.l.b16 %v350
  %v1908 = vunpack.c.h.b16 %v350
  %v1909 = vunpack.c.l.b16 %v351
  %v1910 = vunpack.c.h.b16 %v351
  %v1911 = vunpack.c.l.b16 %v352
  %v1912 = vunpack.c.h.b16 %v352
  %v1913 = vunpack.c.l.b16 %v353
  %v1914 = vunpack.c.h.b16 %v353
  %v1915 = vunpack.c.l.b16 %v354
  %v1916 = vunpack.c.h.b16 %v354
  %v1917 = vunpack.c.l.b16 %v355
  %v1918 = vunpack.c.h.b16 %v355
  %v1919 = vunpack.c.l.b16 %v356
  %v1920 = vunpack.c.h.b16 %v356
  %v1921 = vunpack.c.l.b16 %v357
  %v1922 = vunpack.c.h.b16 %v357
  %v1923 = vunpack.c.l.b16 %v358
  %v1924 = vunpack.c.h.b16 %v358
  %v1925 = vunpack.c.l.b16 %v359
  %v1926 = vunpack.c.h.b16 %v359
  %v1927 = vunpack.c.l.b16 %v360
  %v1928 = vunpack.c.h.b16 %v360
  %v1929 = vunpack.c.l.b16 %v361
  %v1930 = vunpack.c.h.b16 %v361
  %v1931 = vunpack.c.l.b16 %v362
  %v1932 = vunpack.c.h.b16 %v362
  %v1933 = vunpack.c.l.b16 %v363
  %v1934 = vunpack.c.h.b16 %v363
  %v1935 = vunpack.c.l.b16 %v364
  %v1936 = vunpack.c.h.b16 %v364
  %v1937 = vunpack.c.l.b16 %v365
  %v1938 = vunpack.c.h.b16 %v365
  %v1939 = vunpack.c.l.b16 %v366
  %v1940 = vunpack.c.h.b16 %v366
  %v1941 = vunpack.c.l.b16 %v367
  %v1942 = vunpack.c.h.b16 %v367
  %v1943 = vunpack.c.l.b16 %v368
  %v1944 = vunpack.c.h.b16 %v368
  %v1945 = vunpack.c.l.b16 %v369
  %v1946 = vunpack.c.h.b16 %v369
  %v1947 = vunpack.c.l.b16 %v370
  %v1948 = vunpack.c.h.b16 %v370
  %v1949 = vunpack.c.l.b16 %v371
  %v1950 = vunpack.c.h.b16 %v371
  %v1951 = vunpack.c.l.b16 %v372
  %v1952 = vunpack.c.h.b16 %v372
  %v1953 = vunpack.c.l.b16 %v373
  %v1954 = vunpack.c.h.b16 %v373
  %v1955 = vunpack.c.l.b16 %v374
  %v1956 = vunpack.c.h.b16 %v374
  %v1957 = vunpack.c.l.b16 %v375
  %v1958 = vunpack.c.h.b16 %v375
  %v1959 = vunpack.c.l.b16 %v376
  %v1960 = vunpack.c.h.b16 %v376
  %v1961 = vunpack.c.l.b16 %v377
  %v1962 = vunpack.c.h.b16 %v377
  %v1963 = vunpack.c.l.b16 %v378
  %v1964 = vunpack.c.h.b16 %v378
  %v1965 = vunpack.c.l.b16 %v379
  %v1966 = vunpack.c.h.b16 %v379
  %v1967 = vunpack.c.l.b16 %v380
  %v1968 = vunpack.c.h.b16 %v380
  %v1969 = vunpack.c.l.b16 %v381
  %v1970 = vunpack.c.h.b16 %v381
  %v1971 = vunpack.c.l.b16 %v382
  %v1972 = vunpack.c.h.b16 %v382
  %v1973 = vunpack.c.l.b16 %v383
  %v1974 = vunpack.c.h.b16 %v383
  %v1975 = vunpack.c.l.b16 %v384
  %v1976 = vunpack.c.h.b16 %v384
  %v1977 = vunpack.c.l.b16 %v385
  %v1978 = vunpack.c.h.b16 %v385
  %v1979 = vunpack.c.l.b16 %v386
  %v1980 = vunpack.c.h.b16 %v386
  %v1981 = vunpack.c.l.b16 %v387
  %v1982 = vunpack.c.h.b16 %v387
  %v1983 = vunpack.c.l.b16 %v388
  %v1984 = vunpack.c.h.b16 %v388
  %v1985 = vunpack.c.l.b16 %v389
  %v1986 = vunpack.c.h.b16 %v389
  %v1987 = vunpack.c.l.b16 %v390
  %v1988 = vunpack.c.h.b16 %v390
  %v1989 = vunpack.c.l.b16 %v391
  %v1990 = vunpack.c.h.b16 %v391
  %v1991 = vunpack.c.l.b16 %v392
  %v1992 = vunpack.c.h.b16 %v392
  %v1993 = vunpack.c.l.b16 %v393
  %v1994 = vunpack.c.h.b16 %v393
  %v1995 = vunpack.c.l.b16 %v394
  %v1996 = vunpack.c.h.b16 %v394
  %v1997 = vunpack.c.l.b16 %v395
  %v1998 = vunpack.c.h.b16 %v395
  %v1999 = vunpack.c.l.b16 %v396
  %v2000 = vunpack.c.h.b16 %v396
  %v2001 = vunpack.c.l.b16 %v397
  %v2002 = vunpack.c.h.b16 %v397
  %v2003 = vunpack.c.l.b16 %v398
  %v2004 = vunpack.c.h.b16 %v398
  %v2005 = vunpack.c.l.b16 %v399
  %v2006 = vunpack.c.h.b16 %v399
  %v2007 = vunpack.c.l.b16 %v400
  %v2008 = vunpack.c.h.b16 %v400
  %v2009 = vunpack.c.l.b16 %v401
  %v2010 = vunpack.c.h.b16 %v401
  %v2011 = vunpack.c.l.b16 %v402
  %v2012 = vunpack.c.h.b16 %v402
  %v2013 = vunpack.c.l.b16 %v403
  %v2014 = vunpack.c.h.b16 %v403
  %v2015 = vunpack.c.l.b16 %v404
  %v2016 = vunpack.c.h.b16 %v404
  %v2017 = vunpack.c.l.b16 %v405
  %v2018 = vunpack.c.h.b16 %v405
  %v2019 = vunpack.c.l.b16 %v406
  %v2020 = vunpack.c.h.b16 %v406
  %v2021 = vunpack.c.l.b16 %v407
  %v2022 = vunpack.c.h.b16 %v407
  %v2023 = vunpack.c.l.b16 %v408
  %v2024 = vunpack.c.h.b16 %v408
  %v2025 = vunpack.c.l.b16 %v409
  %v2026 = vunpack.c.h.b16 %v409
  %v2027 = vunpack.c.l.b16 %v410
  %v2028 = vunpack.c.h.b16 %v410
  %v2029 = vunpack.c.l.b16 %v411
  %v2030 = vunpack.c.h.b16 %v411
  %v2031 = vunpack.c.l.b16 %v412
  %v2032 = vunpack.c.h.b16 %v412
  %v2033 = vunpack.c.l.b16 %v413
  %v2034 = vunpack.c.h.b16 %v413
  %v2035 = vunpack.c.l.b16 %v414
  %v2036 = vunpack.c.h.b16 %v414
  %v2037 = vunpack.c.l.b16 %v415
  %v2038 = vunpack.c.h.b16 %v415
  %v2039 = vunpack.c.l.b16 %v416
  %v2040 = vunpack.c.h.b16 %v416
  %v2041 = vunpack.c.l.b16 %v417
  %v2042 = vunpack.c.h.b16 %v417
  %v2043 = vunpack.c.l.b16 %v418
  %v2044 = vunpack.c.h.b16 %v418
  %v2045 = vunpack.c.l.b16 %v419
  %v2046 = vunpack.c.h.b16 %v419
  %v2047 = vunpack.c.l.b16 %v420
  %v2048 = vunpack.c.h.b16 %v420
  %v2049 = vunpack.c.l.b16 %v421
  %v2050 = vunpack.c.h.b16 %v421
  %v2051 = vunpack.c.l.b16 %v422
  %v2052 = vunpack.c.h.b16 %v422
  %v2053 = vunpack.c.l.b16 %v423
  %v2054 = vunpack.c.h.b16 %v423
  %v2055 = vunpack.c.l.b16 %v424
  %v2056 = vunpack.c.h.b16 %v424
  %v2057 = vunpack.c.l.b16 %v425
  %v2058 = vunpack.c.h.b16 %v425
  %v2059 = vunpack.c.l.b16 %v426
  %v2060 = vunpack.c.h.b16 %v426
  %v2061 = vunpack.c.l.b16 %v427
  %v2062 = vunpack.c.h.b16 %v427
  %v2063 = vunpack.c.l.b16 %v428
  %v2064 = vunpack.c.h.b16 %v428
  %v2065 = vunpack.c.l.b16 %v429
  %v2066 = vunpack.c.h.b16 %v429
  %v2067 = vunpack.c.l.b16 %v430
  %v2068 = vunpack.c.h.b16 %v430
  %v2069 = vunpack.c.l.b16 %v431
  %v2070 = vunpack.c.h.b16 %v431
  %v2071 = vunpack.c.l.b16 %v432
  %v2072 = vunpack.c.h.b16 %v432
  %v2073 = vunpack.c.l.b16 %v433
  %v2074 = vunpack.c.h.b16 %v433
  %v2075 = vunpack.c.l.b16 %v434
  %v2076 = vunpack.c.h.b16 %v434
  %v2077 = vunpack.c.l.b16 %v435
  %v2078 = vunpack.c.h.b16 %v435
  %v2079 = vunpack.c.l.b16 %v436
  %v2080 = vunpack.c.h.b16 %v436
  %v2081 = vunpack.c.l.b16 %v437
  %v2082 = vunpack.c.h.b16 %v437
  %v2083 = vunpack.c.l.b16 %v438
  %v2084 = vunpack.c.h.b16 %v438
  %v2085 = vunpack.c.l.b16 %v439
  %v2086 = vunpack.c.h.b16 %v439
  %v2087 = vunpack.c.l.b16 %v440
  %v2088 = vunpack.c.h.b16 %v440
  %v2089 = vunpack.c.l.b16 %v441
  %v2090 = vunpack.c.h.b16 %v441
  %v2091 = vunpack.c.l.b16 %v442
  %v2092 = vunpack.c.h.b16 %v442
  %v2093 = vunpack.c.l.b16 %v443
  %v2094 = vunpack.c.h.b16 %v443
  %v2095 = vunpack.c.l.b16 %v444
  %v2096 = vunpack.c.h.b16 %v444
  %v2097 = vunpack.c.l.b16 %v445
  %v2098 = vunpack.c.h.b16 %v445
  %v2099 = vunpack.c.l.b16 %v446
  %v2100 = vunpack.c.h.b16 %v446
  %v2101 = vunpack.c.l.b16 %v447
  %v2102 = vunpack.c.h.b16 %v447
  %v2103 = vunpack.c.l.b16 %v448
  %v2104 = vunpack.c.h.b16 %v448
  %v2105 = vunpack.c.l.b16 %v449
  %v2106 = vunpack.c.h.b16 %v449
  %v2107 = vunpack.c.l.b16 %v450
  %v2108 = vunpack.c.h.b16 %v450
  %v2109 = vunpack.c.l.b16 %v451
  %v2110 = vunpack.c.h.b16 %v451
  %v2111 = vunpack.c.l.b16 %v452
  %v2112 = vunpack.c.h.b16 %v452
  %v2113 = vunpack.c.l.b16 %v453
  %v2114 = vunpack.c.h.b16 %v453
  %v2115 = vunpack.c.l.b16 %v454
  %v2116 = vunpack.c.h.b16 %v454
  %v2117 = vunpack.c.l.b16 %v455
  %v2118 = vunpack.c.h.b16 %v455
  %v2119 = vunpack.c.l.b16 %v456
  %v2120 = vunpack.c.h.b16 %v456
  %v2121 = vunpack.c.l.b16 %v457
  %v2122 = vunpack.c.h.b16 %v457
  %v2123 = vunpack.c.l.b16 %v458
  %v2124 = vunpack.c.h.b16 %v458
  %v2125 = vunpack.c.l.b16 %v459
  %v2126 = vunpack.c.h.b16 %v459
  %v2127 = vunpack.c.l.b16 %v460
  %v2128 = vunpack.c.h.b16 %v460
  %v2129 = vunpack.c.l.b16 %v461
  %v2130 = vunpack.c.h.b16 %v461
  %v2131 = vunpack.c.l.b16 %v462
  %v2132 = vunpack.c.h.b16 %v462
  %v2133 = vunpack.c.l.b16 %v463
  %v2134 = vunpack.c.h.b16 %v463
  %v2135 = vunpack.c.l.b16 %v464
  %v2136 = vunpack.c.h.b16 %v464
  %v2137 = vunpack.c.l.b16 %v465
  %v2138 = vunpack.c.h.b16 %v465
  %v2139 = vunpack.c.l.b16 %v466
  %v2140 = vunpack.c.h.b16 %v466
  %v2141 = vunpack.c.l.b16 %v467
  %v2142 = vunpack.c.h.b16 %v467
  %v2143 = vunpack.c.l.b16 %v468
  %v2144 = vunpack.c.h.b16 %v468
  %v2145 = vunpack.c.l.b16 %v469
  %v2146 = vunpack.c.h.b16 %v469
  %v2147 = vunpack.c.l.b16 %v470
  %v2148 = vunpack.c.h.b16 %v470
  %v2149 = vunpack.c.l.b16 %v471
  %v2150 = vunpack.c.h.b16 %v471
  %v2151 = vunpack.c.l.b16 %v472
  %v2152 = vunpack.c.h.b16 %v472
  %v2153 = vunpack.c.l.b16 %v473
  %v2154 = vunpack.c.h.b16 %v473
  %v2155 = vunpack.c.l.b16 %v474
  %v2156 = vunpack.c.h.b16 %v474
  %v2157 = vunpack.c.l.b16 %v475
  %v2158 = vunpack.c.h.b16 %v475
  %v2159 = vunpack.c.l.b16 %v476
  %v2160 = vunpack.c.h.b16 %v476
  %v2161 = vunpack.c.l.b16 %v477
  %v2162 = vunpack.c.h.b16 %v477
  %v2163 = vunpack.c.l.b16 %v478
  %v2164 = vunpack.c.h.b16 %v478
  %v2165 = vunpack.c.l.b16 %v479
  %v2166 = vunpack.c.h.b16 %v479
  %v2167 = vunpack.c.l.b16 %v480
  %v2168 = vunpack.c.h.b16 %v480
  %v2169 = vunpack.c.l.b16 %v481
  %v2170 = vunpack.c.h.b16 %v481
  %v2171 = vunpack.c.l.b16 %v482
  %v2172 = vunpack.c.h.b16 %v482
  %v2173 = vunpack.c.l.b16 %v483
  %v2174 = vunpack.c.h.b16 %v483
  %v2175 = vunpack.c.l.b16 %v484
  %v2176 = vunpack.c.h.b16 %v484
  %v2177 = vunpack.c.l.b16 %v485
  %v2178 = vunpack.c.h.b16 %v485
  %v2179 = vunpack.c.l.b16 %v486
  %v2180 = vunpack.c.h.b16 %v486
  %v2181 = vunpack.c.l.b16 %v487
  %v2182 = vunpack.c.h.b16 %v487
  %v2183 = vunpack.c.l.b16 %v488
  %v2184 = vunpack.c.h.b16 %v488
  %v2185 = vunpack.c.l.b16 %v489
  %v2186 = vunpack.c.h.b16 %v489
  %v2187 = vunpack.c.l.b16 %v490
  %v2188 = vunpack.c.h.b16 %v490
  %v2189 = vunpack.c.l.b16 %v491
  %v2190 = vunpack.c.h.b16 %v491
  %v2191 = vunpack.c.l.b16 %v492
  %v2192 = vunpack.c.h.b16 %v492
  %v2193 = vunpack.c.l.b16 %v493
  %v2194 = vunpack.c.h.b16 %v493
  %v2195 = vunpack.c.l.b16 %v494
  %v2196 = vunpack.c.h.b16 %v494
  %v2197 = vunpack.c.l.b16 %v495
  %v2198 = vunpack.c.h.b16 %v495
  %v2199 = vunpack.c.l.b16 %v496
  %v2200 = vunpack.c.h.b16 %v496
  %v2201 = vunpack.c.l.b16 %v497
  %v2202 = vunpack.c.h.b16 %v497
  %v2203 = vunpack.c.l.b16 %v498
  %v2204 = vunpack.c.h.b16 %v498
  %v2205 = vunpack.c.l.b16 %v499
  %v2206 = vunpack.c.h.b16 %v499
  %v2207 = vunpack.c.l.b16 %v500
  %v2208 = vunpack.c.h.b16 %v500
  %v2209 = vunpack.c.l.b16 %v501
  %v2210 = vunpack.c.h.b16 %v501
  %v2211 = vunpack.c.l.b16 %v502
  %v2212 = vunpack.c.h.b16 %v502
  %v2213 = vunpack.c.l.b16 %v503
  %v2214 = vunpack.c.h.b16 %v503
  %v2215 = vunpack.c.l.b16 %v504
  %v2216 = vunpack.c.h.b16 %v504
  %v2217 = vunpack.c.l.b16 %v505
  %v2218 = vunpack.c.h.b16 %v505
  %v2219 = vunpack.c.l.b16 %v506
  %v2220 = vunpack.c.h.b16 %v506
  %v2221 = vunpack.c.l.b16 %v507
  %v2222 = vunpack.c.h.b16 %v507
  %v2223 = vunpack.c.l.b16 %v508
  %v2224 = vunpack.c.h.b16 %v508
  %v2225 = vunpack.c.l.b16 %v509
  %v2226 = vunpack.c.h.b16 %v509
  %v2227 = vunpack.c.l.b16 %v510
  %v2228 = vunpack.c.h.b16 %v510
  %v2229 = vunpack.c.l.b16 %v511
  %v2230 = vunpack.c.h.b16 %v511
  %v2231 = vunpack.c.l.b16 %v512
  %v2232 = vunpack.c.h.b16 %v512
  %v2233 = vunpack.c.l.b16 %v513
  %v2234 = vunpack.c.h.b16 %v513
  %v2235 = vunpack.c.l.b16 %v514
  %v2236 = vunpack.c.h.b16 %v514
  %v2237 = vunpack.c.l.b16 %v515
  %v2238 = vunpack.c.h.b16 %v515
  %v2239 = vunpack.c.l.b16 %v516
  %v2240 = vunpack.c.h.b16 %v516
  %v2241 = vunpack.c.l.b16 %v517
  %v2242 = vunpack.c.h.b16 %v517
  %v2243 = vunpack.c.l.b16 %v518
  %v2244 = vunpack.c.h.b16 %v518
  %v2245 = vunpack.c.l.b16 %v519
  %v2246 = vunpack.c.h.b16 %v519
  %v2247 = vunpack.c.l.b16 %v520
  %v2248 = vunpack.c.h.b16 %v520
  %v2249 = vunpack.c.l.b16 %v521
  %v2250 = vunpack.c.h.b16 %v521
  %v2251 = vunpack.c.l.b16 %v522
  %v2252 = vunpack.c.h.b16 %v522
  %v2253 = vunpack.c.l.b16 %v523
  %v2254 = vunpack.c.h.b16 %v523
  %v2255 = vunpack.c.l.b16 %v524
  %v2256 = vunpack.c.h.b16 %v524
  %v2257 = vunpack.c.l.b16 %v525
  %v2258 = vunpack.c.h.b16 %v525
  %v2259 = vunpack.c.l.b16 %v526
  %v2260 = vunpack.c.h.b16 %v526
  %v2261 = vunpack.c.l.b16 %v527
  %v2262 = vunpack.c.h.b16 %v527
  %v2263 = vunpack.c.l.b16 %v528
  %v2264 = vunpack.c.h.b16 %v528
  %v2265 = vunpack.c.l.b16 %v529
  %v2266 = vunpack.c.h.b16 %v529
  %v2267 = vunpack.c.l.b16 %v530
  %v2268 = vunpack.c.h.b16 %v530
  %v2269 = vunpack.c.l.b16 %v531
  %v2270 = vunpack.c.h.b16 %v531
  %v2271 = vunpack.c.l.b16 %v532
  %v2272 = vunpack.c.h.b16 %v532
  %v2273 = vunpack.c.l.b16 %v533
  %v2274 = vunpack.c.h.b16 %v533
  %v2275 = vunpack.c.l.b16 %v534
  %v2276 = vunpack.c.h.b16 %v534
  %v2277 = vunpack.c.l.b16 %v535
  %v2278 = vunpack.c.h.b16 %v535
  %v2279 = vunpack.c.l.b16 %v536
  %v2280 = vunpack.c.h.b16 %v536
  %v2281 = vunpack.c.l.b16 %v537
  %v2282 = vunpack.c.h.b16 %v537
  %v2283 = vunpack.c.l.b16 %v538
  %v2284 = vunpack.c.h.b16 %v538
  %v2285 = vunpack.c.l.b16 %v539
  %v2286 = vunpack.c.h.b16 %v539
  %v2287 = vunpack.c.l.b16 %v540
  %v2288 = vunpack.c.h.b16 %v540
  %v2289 = vunpack.c.l.b16 %v541
  %v2290 = vunpack.c.h.b16 %v541
  %v2291 = vunpack.c.l.b16 %v542
  %v2292 = vunpack.c.h.b16 %v542
  %v2293 = vunpack.c.l.b16 %v543
  %v2294 = vunpack.c.h.b16 %v543
  %v2295 = vunpack.c.l.b16 %v544
  %v2296 = vunpack.c.h.b16 %v544
  %v2297 = vunpack.c.l.b16 %v545
  %v2298 = vunpack.c.h.b16 %v545
  %v2299 = vunpack.c.l.b16 %v546
  %v2300 = vunpack.c.h.b16 %v546
  %v2301 = vunpack.c.l.b16 %v547
  %v2302 = vunpack.c.h.b16 %v547
  %v2303 = vunpack.c.l.b16 %v548
  %v2304 = vunpack.c.h.b16 %v548
  %v2305 = vunpack.c.l.b16 %v549
  %v2306 = vunpack.c.h.b16 %v549
  %v2307 = vunpack.c.l.b16 %v550
  %v2308 = vunpack.c.h.b16 %v550
  %v2309 = vunpack.c.l.b16 %v551
  %v2310 = vunpack.c.h.b16 %v551
  %v2311 = vunpack.c.l.b16 %v552
  %v2312 = vunpack.c.h.b16 %v552
  %v2313 = vunpack.c.l.b16 %v553
  %v2314 = vunpack.c.h.b16 %v553
  %v2315 = vunpack.c.l.b16 %v554
  %v2316 = vunpack.c.h.b16 %v554
  %v2317 = vunpack.c.l.b16 %v555
  %v2318 = vunpack.c.h.b16 %v555
  %v2319 = vunpack.c.l.b16 %v556
  %v2320 = vunpack.c.h.b16 %v556
  %v2321 = vunpack.c.l.b16 %v557
  %v2322 = vunpack.c.h.b16 %v557
  %v2323 = vunpack.c.l.b16 %v558
  %v2324 = vunpack.c.h.b16 %v558
  %v2325 = vunpack.c.l.b16 %v559
  %v2326 = vunpack.c.h.b16 %v559
  %v2327 = vunpack.c.l.b16 %v560
  %v2328 = vunpack.c.h.b16 %v560
  %v2329 = vunpack.c.l.b16 %v561
  %v2330 = vunpack.c.h.b16 %v561
  %v2331 = vunpack.c.l.b16 %v562
  %v2332 = vunpack.c.h.b16 %v562
  %v2333 = vunpack.c.l.b16 %v563
  %v2334 = vunpack.c.h.b16 %v563
  %v2335 = vunpack.c.l.b16 %v564
  %v2336 = vunpack.c.h.b16 %v564
  %v2337 = vunpack.c.l.b16 %v565
  %v2338 = vunpack.c.h.b16 %v565
  %v2339 = vunpack.c.l.b16 %v566
  %v2340 = vunpack.c.h.b16 %v566
  %v2341 = vunpack.c.l.b16 %v567
  %v2342 = vunpack.c.h.b16 %v567
  %v2343 = vunpack.c.l.b16 %v568
  %v2344 = vunpack.c.h.b16 %v568
  %v2345 = vunpack.c.l.b16 %v569
  %v2346 = vunpack.c.h.b16 %v569
  %v2347 = vunpack.c.l.b16 %v570
  %v2348 = vunpack.c.h.b16 %v570
  %v2349 = vunpack.c.l.b16 %v571
  %v2350 = vunpack.c.h.b16 %v571
  %v2351 = vunpack.c.l.b16 %v572
  %v2352 = vunpack.c.h.b16 %v572
  %v2353 = vunpack.c.l.b16 %v573
  %v2354 = vunpack.c.h.b16 %v573
  %v2355 = vunpack.c.l.b16 %v574
  %v2356 = vunpack.c.h.b16 %v574
  %v2357 = vunpack.c.l.b16 %v575
  %v2358 = vunpack.c.h.b16 %v575
  %v2359 = vunpack.c.l.b16 %v576
  %v2360 = vunpack.c.h.b16 %v576
  %v2361 = vunpack.c.l.b16 %v577
  %v2362 = vunpack.c.h.b16 %v577
  %v2363 = vunpack.c.l.b16 %v578
  %v2364 = vunpack.c.h.b16 %v578
  %v2365 = vunpack.c.l.b16 %v579
  %v2366 = vunpack.c.h.b16 %v579
  %v2367 = vunpack.c.l.b16 %v580
  %v2368 = vunpack.c.h.b16 %v580
  %v2369 = vunpack.c.l.b16 %v581
  %v2370 = vunpack.c.h.b16 %v581
  %v2371 = vunpack.c.l.b16 %v582
  %v2372 = vunpack.c.h.b16 %v582
  %v2373 = vunpack.c.l.b16 %v583
  %v2374 = vunpack.c.h.b16 %v583
  %v2375 = vunpack.c.l.b16 %v584
  %v2376 = vunpack.c.h.b16 %v584
  %v2377 = vunpack.c.l.b16 %v585
  %v2378 = vunpack.c.h.b16 %v585
  %v2379 = vunpack.c.l.b16 %v586
  %v2380 = vunpack.c.h.b16 %v586
  %v2381 = vunpack.c.l.b16 %v587
  %v2382 = vunpack.c.h.b16 %v587
  %v2383 = vunpack.c.l.b16 %v588
  %v2384 = vunpack.c.h.b16 %v588
  %v2385 = vunpack.c.l.b16 %v589
  %v2386 = vunpack.c.h.b16 %v589
  %v2387 = vunpack.c.l.b16 %v590
  %v2388 = vunpack.c.h.b16 %v590
  %v2389 = vunpack.c.l.b16 %v591
  %v2390 = vunpack.c.h.b16 %v591
  %v2391 = vunpack.c.l.b16 %v592
  %v2392 = vunpack.c.h.b16 %v592
  %v2393 = vunpack.c.l.b16 %v593
  %v2394 = vunpack.c.h.b16 %v593
  %v2395 = vunpack.c.l.b16 %v594
  %v2396 = vunpack.c.h.b16 %v594
  %v2397 = vunpack.c.l.b16 %v595
  %v2398 = vunpack.c.h.b16 %v595
  %v2399 = vunpack.c.l.b16 %v596
  %v2400 = vunpack.c.h.b16 %v596
  %v2401 = vunpack.c.l.b16 %v597
  %v2402 = vunpack.c.h.b16 %v597
  %v2403 = vunpack.c.l.b16 %v598
  %v2404 = vunpack.c.h.b16 %v598
  %v2405 = vunpack.c.l.b16 %v599
  %v2406 = vunpack.c.h.b16 %v599
  %v2407 = vunpack.c.l.b16 %v600
  %v2408 = vunpack.c.h.b16 %v600
  %v2409 = vunpack.c.l.b16 %v601
  %v2410 = vunpack.c.h.b16 %v601
  %v2411 = vunpack.c.l.b16 %v602
  %v2412 = vunpack.c.h.b16 %v602
  %v2413 = vunpack.c.l.b16 %v603
  %v2414 = vunpack.c.h.b16 %v603
  %v2415 = vunpack.c.l.b16 %v604
  %v2416 = vunpack.c.h.b16 %v604
  %v2417 = vunpack.c.l.b16 %v605
  %v2418 = vunpack.c.h.b16 %v605
  %v2419 = vpack.c.b16 %v1271, %v1267
  %v2420 = vpack.c.b16 %v1272, %v1268
  %v2421 = vpack.c.b16 %v1273, %v1269
  %v2422 = vpack.c.b16 %v1274, %v1270
  %v2423 = vpack.c.b16 %v1279, %v1275
  %v2424 = vpack.c.b16 %v1280, %v1276
  %v2425 = vpack.c.b16 %v1281, %v1277
  %v2426 = vpack.c.b16 %v1282, %v1278
  %v2427 = vpack.c.b16 %v1287, %v1283
  %v2428 = vpack.c.b16 %v1288, %v1284
  %v2429 = vpack.c.b16 %v1289, %v1285
  %v2430 = vpack.c.b16 %v1290, %v1286
  %v2431 = vpack.c.b16 %v1295, %v1291
  %v2432 = vpack.c.b16 %v1296, %v1292
  %v2433 = vpack.c.b16 %v1297, %v1293
  %v2434 = vpack.c.b16 %v1298, %v1294
  %v2435 = vpack.c.b16 %v1303, %v1299
  %v2436 = vpack.c.b16 %v1304, %v1300
  %v2437 = vpack.c.b16 %v1305, %v1301
  %v2438 = vpack.c.b16 %v1306, %v1302
  %v2439 = vpack.c.b16 %v1311, %v1307
  %v2440 = vpack.c.b16 %v1312, %v1308
  %v2441 = vpack.c.b16 %v1313, %v1309
  %v2442 = vpack.c.b16 %v1314, %v1310
  %v2443 = vpack.c.b16 %v1319, %v1315
  %v2444 = vpack.c.b16 %v1320, %v1316
  %v2445 = vpack.c.b16 %v1321, %v1317
  %v2446 = vpack.c.b16 %v1322, %v1318
  %v2447 = vpack.c.b16 %v1327, %v1323
  %v2448 = vpack.c.b16 %v1328, %v1324
  %v2449 = vpack.c.b16 %v1329, %v1325
  %v2450 = vpack.c.b16 %v1330, %v1326
  %v2451 = vpack.c.b16 %v1335, %v1331
  %v2452 = vpack.c.b16 %v1336, %v1332
  %v2453 = vpack.c.b16 %v1337, %v1333
  %v2454 = vpack.c.b16 %v1338, %v1334
  %v2455 = vpack.c.b16 %v1343, %v1339
  %v2456 = vpack.c.b16 %v1344, %v1340
  %v2457 = vpack.c.b16 %v1345, %v1341
  %v2458 = vpack.c.b16 %v1346, %v1342
  %v2459 = vpack.c.b16 %v1351, %v1347
  %v2460 = vpack.c.b16 %v1352, %v1348
  %v2461 = vpack.c.b16 %v1353, %v1349
  %v2462 = vpack.c.b16 %v1354, %v1350
  %v2463 = vpack.c.b16 %v1359, %v1355
  %v2464 = vpack.c.b16 %v1360, %v1356
  %v2465 = vpack.c.b16 %v1361, %v1357
  %v2466 = vpack.c.b16 %v1362, %v1358
  %v2467 = vpack.c.b16 %v1367, %v1363
  %v2468 = vpack.c.b16 %v1368, %v1364
  %v2469 = vpack.c.b16 %v1369, %v1365
  %v2470 = vpack.c.b16 %v1370, %v1366
  %v2471 = vpack.c.b16 %v1375, %v1371
  %v2472 = vpack.c.b16 %v1376, %v1372
  %v2473 = vpack.c.b16 %v1377, %v1373
  %v2474 = vpack.c.b16 %v1378, %v1374
  %v2475 = vpack.c.b16 %v1383, %v1379
  %v2476 = vpack.c.b16 %v1384, %v1380
  %v2477 = vpack.c.b16 %v1385, %v1381
  %v2478 = vpack.c.b16 %v1386, %v1382
  %v2479 = vpack.c.b16 %v1391, %v1387
  %v2480 = vpack.c.b16 %v1392, %v1388
  %v2481 = vpack.c.b16 %v1393, %v1389
  %v2482 = vpack.c.b16 %v1394, %v1390
  %v2483 = vpack.c.b16 %v1399, %v1395
  %v2484 = vpack.c.b16 %v1400, %v1396
  %v2485 = vpack.c.b16 %v1401, %v1397
  %v2486 = vpack.c.b16 %v1402, %v1398
  %v2487 = vpack.c.b16 %v1407, %v1403
  %v2488 = vpack.c.b16 %v1408, %v1404
  %v2489 = vpack.c.b16 %v1409, %v1405
  %v2490 = vpack.c.b16 %v1410, %v1406
  %v2491 = vpack.c.b16 %v1415, %v1411
  %v2492 = vpack.c.b16 %v1416, %v1412
  %v2493 = vpack.c.b16 %v1417, %v1413
  %v2494 = vpack.c.b16 %v1418, %v1414
  %v2495 = vpack.c.b16 %v1423, %v1419
  %v2496 = vpack.c.b16 %v1424, %v1420
  %v2497 = vpack.c.b16 %v1425, %v1421
  %v2498 = vpack.c.b16 %v1426, %v1422
  %v2499 = vpack.c.b16 %v1431, %v1427
  %v2500 = vpack.c.b16 %v1432, %v1428
  %v2501 = vpack.c.b16 %v1433, %v1429
  %v2502 = vpack.c.b16 %v1434, %v1430
  %v2503 = vpack.c.b16 %v1439, %v1435
  %v2504 = vpack.c.b16 %v1440, %v1436
  %v2505 = vpack.c.b16 %v1441, %v1437
  %v2506 = vpack.c.b16 %v1442, %v1438
  %v2507 = vpack.c.b16 %v1447, %v1443
  %v2508 = vpack.c.b16 %v1448, %v1444
  %v2509 = vpack.c.b16 %v1449, %v1445
  %v2510 = vpack.c.b16 %v1450, %v1446
  %v2511 = vpack.c.b16 %v1455, %v1451
  %v2512 = vpack.c.b16 %v1456, %v1452
  %v2513 = vpack.c.b16 %v1457, %v1453
  %v2514 = vpack.c.b16 %v1458, %v1454
  %v2515 = vpack.c.b16 %v1463, %v1459
  %v2516 = vpack.c.b16 %v1464, %v1460
  %v2517 = vpack.c.b16 %v1465, %v1461
  %v2518 = vpack.c.b16 %v1466, %v1462
  %v2519 = vpack.c.b16 %v1471, %v1467
  %v2520 = vpack.c.b16 %v1472, %v1468
  %v2521 = vpack.c.b16 %v1473, %v1469
  %v2522 = vpack.c.b16 %v1474, %v1470
  %v2523 = vpack.c.b16 %v1479, %v1475
  %v2524 = vpack.c.b16 %v1480, %v1476
  %v2525 = vpack.c.b16 %v1481, %v1477
  %v2526 = vpack.c.b16 %v1482, %v1478
  %v2527 = vpack.c.b16 %v1487, %v1483
  %v2528 = vpack.c.b16 %v1488, %v1484
  %v2529 = vpack.c.b16 %v1489, %v1485
  %v2530 = vpack.c.b16 %v1490, %v1486
  %v2531 = vpack.c.b16 %v1495, %v1491
  %v2532 = vpack.c.b16 %v1496, %v1492
  %v2533 = vpack.c.b16 %v1497, %v1493
  %v2534 = vpack.c.b16 %v1498, %v1494
  %v2535 = vpack.c.b16 %v1503, %v1499
  %v2536 = vpack.c.b16 %v1504, %v1500
  %v2537 = vpack.c.b16 %v1505, %v1501
  %v2538 = vpack.c.b16 %v1506, %v1502
  %v2539 = vpack.c.b16 %v1511, %v1507
  %v2540 = vpack.c.b16 %v1512, %v1508
  %v2541 = vpack.c.b16 %v1513, %v1509
  %v2542 = vpack.c.b16 %v1514, %v1510
  %v2543 = vpack.c.b16 %v1519, %v1515
  %v2544 = vpack.c.b16 %v1520, %v1516
  %v2545 = vpack.c.b16 %v1521, %v1517
  %v2546 = vpack.c.b16 %v1522, %v1518
  %v2547 = vpack.c.b16 %v1527, %v1523
  %v2548 = vpack.c.b16 %v1528, %v1524
  %v2549 = vpack.c.b16 %v1529, %v1525
  %v2550 = vpack.c.b16 %v1530, %v1526
  %v2551 = vpack.c.b16 %v1535, %v1531
  %v2552 = vpack.c.b16 %v1536, %v1532
  %v2553 = vpack.c.b16 %v1537, %v1533
  %v2554 = vpack.c.b16 %v1538, %v1534
  %v2555 = vpack.c.b16 %v1543, %v1539
  %v2556 = vpack.c.b16 %v1544, %v1540
  %v2557 = vpack.c.b16 %v1545, %v1541
  %v2558 = vpack.c.b16 %v1546, %v1542
  %v2559 = vpack.c.b16 %v1551, %v1547
  %v2560 = vpack.c.b16 %v1552, %v1548
  %v2561 = vpack.c.b16 %v1553, %v1549
  %v2562 = vpack.c.b16 %v1554, %v1550
  %v2563 = vpack.c.b16 %v1559, %v1555
  %v2564 = vpack.c.b16 %v1560, %v1556
  %v2565 = vpack.c.b16 %v1561, %v1557
  %v2566 = vpack.c.b16 %v1562, %v1558
  %v2567 = vpack.c.b16 %v1567, %v1563
  %v2568 = vpack.c.b16 %v1568, %v1564
  %v2569 = vpack.c.b16 %v1569, %v1565
  %v2570 = vpack.c.b16 %v1570, %v1566
  %v2571 = vpack.c.b16 %v1575, %v1571
  %v2572 = vpack.c.b16 %v1576, %v1572
  %v2573 = vpack.c.b16 %v1577, %v1573
  %v2574 = vpack.c.b16 %v1578, %v1574
  %v2575 = vpack.c.b16 %v1583, %v1579
  %v2576 = vpack.c.b16 %v1584, %v1580
  %v2577 = vpack.c.b16 %v1585, %v1581
  %v2578 = vpack.c.b16 %v1586, %v1582
  %v2579 = vpack.c.b16 %v1591, %v1587
  %v2580 = vpack.c.b16 %v1592, %v1588
  %v2581 = vpack.c.b16 %v1593, %v1589
  %v2582 = vpack.c.b16 %v1594, %v1590
  %v2583 = vpack.c.b16 %v1599, %v1595
  %v2584 = vpack.c.b16 %v1600, %v1596
  %v2585 = vpack.c.b16 %v1601, %v1597
  %v2586 = vpack.c.b16 %v1602, %v1598
  %v2587 = vpack.c.b16 %v1607, %v1603
  %v2588 = vpack.c.b16 %v1608, %v1604
  %v2589 = vpack.c.b16 %v1609, %v1605
  %v2590 = vpack.c.b16 %v1610, %v1606
  %v2591 = vpack.c.b16 %v1615, %v1611
  %v2592 = vpack.c.b16 %v1616, %v1612
  %v2593 = vpack.c.b16 %v1617, %v1613
  %v2594 = vpack.c.b16 %v1618, %v1614
  %v2595 = vpack.c.b16 %v1623, %v1619
  %v2596 = vpack.c.b16 %v1624, %v1620
  %v2597 = vpack.c.b16 %v1625, %v1621
  %v2598 = vpack.c.b16 %v1626, %v1622
  %v2599 = vpack.c.b16 %v1631, %v1627
  %v2600 = vpack.c.b16 %v1632, %v1628
  %v2601 = vpack.c.b16 %v1633, %v1629
  %v2602 = vpack.c.b16 %v1634, %v1630
  %v2603 = vpack.c.b16 %v1639, %v1635
  %v2604 = vpack.c.b16 %v1640, %v1636
  %v2605 = vpack.c.b16 %v1641, %v1637
  %v2606 = vpack.c.b16 %v1642, %v1638
  %v2607 = vpack.c.b16 %v1647, %v1643
  %v2608 = vpack.c.b16 %v1648, %v1644
  %v2609 = vpack.c.b16 %v1649, %v1645
  %v2610 = vpack.c.b16 %v1650, %v1646
  %v2611 = vpack.c.b16 %v1655, %v1651
  %v2612 = vpack.c.b16 %v1656, %v1652
  %v2613 = vpack.c.b16 %v1657, %v1653
  %v2614 = vpack.c.b16 %v1658, %v1654
  %v2615 = vpack.c.b16 %v1663, %v1659
  %v2616 = vpack.c.b16 %v1664, %v1660
  %v2617 = vpack.c.b16 %v1665, %v1661
  %v2618 = vpack.c.b16 %v1666, %v1662
  %v2619 = vpack.c.b16 %v1671, %v1667
  %v2620 = vpack.c.b16 %v1672, %v1668
  %v2621 = vpack.c.b16 %v1673, %v1669
  %v2622 = vpack.c.b16 %v1674, %v1670
  %v2623 = vpack.c.b16 %v1679, %v1675
  %v2624 = vpack.c.b16 %v1680, %v1676
  %v2625 = vpack.c.b16 %v1681, %v1677
  %v2626 = vpack.c.b16 %v1682, %v1678
  %v2627 = vpack.c.b16 %v1687, %v1683
  %v2628 = vpack.c.b16 %v1688, %v1684
  %v2629 = vpack.c.b16 %v1689, %v1685
  %v2630 = vpack.c.b16 %v1690, %v1686
  %v2631 = vpack.c.b16 %v1695, %v1691
  %v2632 = vpack.c.b16 %v1696, %v1692
  %v2633 = vpack.c.b16 %v1697, %v1693
  %v2634 = vpack.c.b16 %v1698, %v1694
  %v2635 = vpack.c.b16 %v1703, %v1699
  %v2636 = vpack.c.b16 %v1704, %v1700
  %v2637 = vpack.c.b16 %v1705, %v1701
  %v2638 = vpack.c.b16 %v1706, %v1702
  %v2639 = vpack.c.b16 %v1711, %v1707
  %v2640 = vpack.c.b16 %v1712, %v1708
  %v2641 = vpack.c.b16 %v1713, %v1709
  %v2642 = vpack.c.b16 %v1714, %v1710
  %v2643 = vpack.c.b16 %v1719, %v1715
  %v2644 = vpack.c.b16 %v1720, %v1716
  %v2645 = vpack.c.b16 %v1721, %v1717
  %v2646 = vpack.c.b16 %v1722, %v1718
  %v2647 = vpack.c.b16 %v1727, %v1723
  %v2648 = vpack.c.b16 %v1728, %v1724
  %v2649 = vpack.c.b16 %v1729, %v1725
  %v2650 = vpack.c.b16 %v1730, %v1726
  %v2651 = vpack.c.b16 %v1735, %v1731
  %v2652 = vpack.c.b16 %v1736, %v1732
  %v2653 = vpack.c.b16 %v1737, %v1733
  %v2654 = vpack.c.b16 %v1738, %v1734
  %v2655 = vpack.c.b16 %v1743, %v1739
  %v2656 = vpack.c.b16 %v1744, %v1740
  %v2657 = vpack.c.b16 %v1745, %v1741
  %v2658 = vpack.c.b16 %v1746, %v1742
  %v2659 = vpack.c.b16 %v1751, %v1747
  %v2660 = vpack.c.b16 %v1752, %v1748
  %v2661 = vpack.c.b16 %v1753, %v1749
  %v2662 = vpack.c.b16 %v1754, %v1750
  %v2663 = vpack.c.b16 %v1759, %v1755
  %v2664 = vpack.c.b16 %v1760, %v1756
  %v2665 = vpack.c.b16 %v1761, %v1757
  %v2666 = vpack.c.b16 %v1762, %v1758
  %v2667 = vpack.c.b16 %v1767, %v1763
  %v2668 = vpack.c.b16 %v1768, %v1764
  %v2669 = vpack.c.b16 %v1769, %v1765
  %v2670 = vpack.c.b16 %v1770, %v1766
  %v2671 = vpack.c.b16 %v1775, %v1771
  %v2672 = vpack.c.b16 %v1776, %v1772
  %v2673 = vpack.c.b16 %v1777, %v1773
  %v2674 = vpack.c.b16 %v1778, %v1774
  %v2675 = vpack.c.b16 %v1783, %v1779
  %v2676 = vpack.c.b16 %v1784, %v1780
  %v2677 = vpack.c.b16 %v1785, %v1781
  %v2678 = vpack.c.b16 %v1786, %v1782
  %v2679 = vpack.c.b16 %v1791, %v1787
  %v2680 = vpack.c.b16 %v1792, %v1788
  %v2681 = vpack.c.b16 %v1793, %v1789
  %v2682 = vpack.c.b16 %v1794, %v1790
  %v2683 = vpack.c.b16 %v1799, %v1795
  %v2684 = vpack.c.b16 %v1800, %v1796
  %v2685 = vpack.c.b16 %v1801, %v1797
  %v2686 = vpack.c.b16 %v1802, %v1798
  %v2687 = vpack.c.b16 %v1807, %v1803
  %v2688 = vpack.c.b16 %v1808, %v1804
  %v2689 = vpack.c.b16 %v1809, %v1805
  %v2690 = vpack.c.b16 %v1810, %v1806
  %v2691 = vpack.c.b16 %v1815, %v1811
  %v2692 = vpack.c.b16 %v1816, %v1812
  %v2693 = vpack.c.b16 %v1817, %v1813
  %v2694 = vpack.c.b16 %v1818, %v1814
  %v2695 = vpack.c.b16 %v1823, %v1819
  %v2696 = vpack.c.b16 %v1824, %v1820
  %v2697 = vpack.c.b16 %v1825, %v1821
  %v2698 = vpack.c.b16 %v1826, %v1822
  %v2699 = vpack.c.b16 %v1831, %v1827
  %v2700 = vpack.c.b16 %v1832, %v1828
  %v2701 = vpack.c.b16 %v1833, %v1829
  %v2702 = vpack.c.b16 %v1834, %v1830
  %v2703 = vpack.c.b16 %v1839, %v1835
  %v2704 = vpack.c.b16 %v1840, %v1836
  %v2705 = vpack.c.b16 %v1841, %v1837
  %v2706 = vpack.c.b16 %v1842, %v1838
  %v2707 = vpack.c.b16 %v1847, %v1843
  %v2708 = vpack.c.b16 %v1848, %v1844
  %v2709 = vpack.c.b16 %v1849, %v1845
  %v2710 = vpack.c.b16 %v1850, %v1846
  %v2711 = vpack.c.b16 %v1855, %v1851
  %v2712 = vpack.c.b16 %v1856, %v1852
  %v2713 = vpack.c.b16 %v1857, %v1853
  %v2714 = vpack.c.b16 %v1858, %v1854
  %v2715 = vpack.c.b16 %v1863, %v1859
  %v2716 = vpack.c.b16 %v1864, %v1860
  %v2717 = vpack.c.b16 %v1865, %v1861
  %v2718 = vpack.c.b16 %v1866, %v1862
  %v2719 = vpack.c.b16 %v1871, %v1867
  %v2720 = vpack.c.b16 %v1872, %v1868
  %v2721 = vpack.c.b16 %v1873, %v1869
  %v2722 = vpack.c.b16 %v1874, %v1870
  %v2723 = vpack.c.b16 %v1879, %v1875
  %v2724 = vpack.c.b16 %v1880, %v1876
  %v2725 = vpack.c.b16 %v1881, %v1877
  %v2726 = vpack.c.b16 %v1882, %v1878
  %v2727 = vpack.c.b16 %v1887, %v1883
  %v2728 = vpack.c.b16 %v1888, %v1884
  %v2729 = vpack.c.b16 %v1889, %v1885
  %v2730 = vpack.c.b16 %v1890, %v1886
  %v2731 = vpack.c.b16 %v1895, %v1891
  %v2732 = vpack.c.b16 %v1896, %v1892
  %v2733 = vpack.c.b16 %v1897, %v1893
  %v2734 = vpack.c.b16 %v1898, %v1894
  %v2735 = vpack.c.b16 %v1903, %v1899
  %v2736 = vpack.c.b16 %v1904, %v1900
  %v2737 = vpack.c.b16 %v1905, %v1901
  %v2738 = vpack.c.b16 %v1906, %v1902
  %v2739 = vpack.c.b16 %v1911, %v1907
  %v2740 = vpack.c.b16 %v1912, %v1908
  %v2741 = vpack.c.b16 %v1913, %v1909
  %v2742 = vpack.c.b16 %v1914, %v1910
  %v2743 = vpack.c.b16 %v1919, %v1915
  %v2744 = vpack.c.b16 %v1920, %v1916
  %v2745 = vpack.c.b16 %v1921, %v1917
  %v2746 = vpack.c.b16 %v1922, %v1918
  %v2747 = vpack.c.b16 %v1927, %v1923
  %v2748 = vpack.c.b16 %v1928, %v1924
  %v2749 = vpack.c.b16 %v1929, %v1925
  %v2750 = vpack.c.b16 %v1930, %v1926
  %v2751 = vpack.c.b16 %v1935, %v1931
  %v2752 = vpack.c.b16 %v1936, %v1932
  %v2753 = vpack.c.b16 %v1937, %v1933
  %v2754 = vpack.c.b16 %v1938, %v1934
  %v2755 = vpack.c.b16 %v1943, %v1939
  %v2756 = vpack.c.b16 %v1944, %v1940
  %v2757 = vpack.c.b16 %v1945, %v1941
  %v2758 = vpack.c.b16 %v1946, %v1942
  %v2759 = vpack.c.b16 %v1951, %v1947
  %v2760 = vpack.c.b16 %v1952, %v1948
  %v2761 = vpack.c.b16 %v1953, %v1949
  %v2762 = vpack.c.b16 %v1954, %v1950
  %v2763 = vpack.c.b16 %v1959, %v1955
  %v2764 = vpack.c.b16 %v1960, %v1956
  %v2765 = vpack.c.b16 %v1961, %v1957
  %v2766 = vpack.c.b16 %v1962, %v1958
  %v2767 = vpack.c.b16 %v1967, %v1963
  %v2768 = vpack.c.b16 %v1968, %v1964
  %v2769 = vpack.c.b16 %v1969, %v1965
  %v2770 = vpack.c.b16 %v1970, %v1966
  %v2771 = vpack.c.b16 %v1975, %v1971
  %v2772 = vpack.c.b16 %v1976, %v1972
  %v2773 = vpack.c.b16 %v1977, %v1973
  %v2774 = vpack.c.b16 %v1978, %v1974
  %v2775 = vpack.c.b16 %v1983, %v1979
  %v2776 = vpack.c.b16 %v1984, %v1980
  %v2777 = vpack.c.b16 %v1985, %v1981
  %v2778 = vpack.c.b16 %v1986, %v1982
  %v2779 = vpack.c.b16 %v1991, %v1987
  %v2780 = vpack.c.b16 %v1992, %v1988
  %v2781 = vpack.c.b16 %v1993, %v1989
  %v2782 = vpack.c.b16 %v1994, %v1990
  %v2783 = vpack.c.b16 %v1999, %v1995
  %v2784 = vpack.c.b16 %v2000, %v1996
  %v2785 = vpack.c.b16 %v2001, %v1997
  %v2786 = vpack.c.b16 %v2002, %v1998
  %v2787 = vpack.c.b16 %v2007, %v2003
  %v2788 = vpack.c.b16 %v2008, %v2004
  %v2789 = vpack.c.b16 %v2009, %v2005
  %v2790 = vpack.c.b16 %v2010, %v2006
  %v2791 = vpack.c.b16 %v2015, %v2011
  %v2792 = vpack.c.b16 %v2016, %v2012
  %v2793 = vpack.c.b16 %v2017, %v2013
  %v2794 = vpack.c.b16 %v2018, %v2014
  %v2795 = vpack.c.b16 %v2023, %v2019
  %v2796 = vpack.c.b16 %v2024, %v2020
  %v2797 = vpack.c.b16 %v2025, %v2021
  %v2798 = vpack.c.b16 %v2026, %v2022
  %v2799 = vpack.c.b16 %v2031, %v2027
  %v2800 = vpack.c.b16 %v2032, %v2028
  %v2801 = vpack.c.b16 %v2033, %v2029
  %v2802 = vpack.c.b16 %v2034, %v2030
  %v2803 = vpack.c.b16 %v2039, %v2035
  %v2804 = vpack.c.b16 %v2040, %v2036
  %v2805 = vpack.c.b16 %v2041, %v2037
  %v2806 = vpack.c.b16 %v2042, %v2038
  %v2807 = vpack.c.b16 %v2047, %v2043
  %v2808 = vpack.c.b16 %v2048, %v2044
  %v2809 = vpack.c.b16 %v2049, %v2045
  %v2810 = vpack.c.b16 %v2050, %v2046
  %v2811 = vpack.c.b16 %v2055, %v2051
  %v2812 = vpack.c.b16 %v2056, %v2052
  %v2813 = vpack.c.b16 %v2057, %v2053
  %v2814 = vpack.c.b16 %v2058, %v2054
  %v2815 = vpack.c.b16 %v2063, %v2059
  %v2816 = vpack.c.b16 %v2064, %v2060
  %v2817 = vpack.c.b16 %v2065, %v2061
  %v2818 = vpack.c.b16 %v2066, %v2062
  %v2819 = vpack.c.b16 %v2071, %v2067
  %v2820 = vpack.c.b16 %v2072, %v2068
  %v2821 = vpack.c.b16 %v2073, %v2069
  %v2822 = vpack.c.b16 %v2074, %v2070
  %v2823 = vpack.c.b16 %v2079, %v2075
  %v2824 = vpack.c.b16 %v2080, %v2076
  %v2825 = vpack.c.b16 %v2081, %v2077
  %v2826 = vpack.c.b16 %v2082, %v2078
  %v2827 = vpack.c.b16 %v2087, %v2083
  %v2828 = vpack.c.b16 %v2088, %v2084
  %v2829 = vpack.c.b16 %v2089, %v2085
  %v2830 = vpack.c.b16 %v2090, %v2086
  %v2831 = vpack.c.b16 %v2095, %v2091
  %v2832 = vpack.c.b16 %v2096, %v2092
  %v2833 = vpack.c.b16 %v2097, %v2093
  %v2834 = vpack.c.b16 %v2098, %v2094
  %v2835 = vpack.c.b16 %v2103, %v2099
  %v2836 = vpack.c.b16 %v2104, %v2100
  %v2837 = vpack.c.b16 %v2105, %v2101
  %v2838 = vpack.c.b16 %v2106, %v2102
  %v2839 = vpack.c.b16 %v2111, %v2107
  %v2840 = vpack.c.b16 %v2112, %v2108
  %v2841 = vpack.c.b16 %v2113, %v2109
  %v2842 = vpack.c.b16 %v2114, %v2110
  %v2843 = vpack.c.b16 %v2119, %v2115
  %v2844 = vpack.c.b16 %v2120, %v2116
  %v2845 = vpack.c.b16 %v2121, %v2117
  %v2846 = vpack.c.b16 %v2122, %v2118
  %v2847 = vpack.c.b16 %v2127, %v2123
  %v2848 = vpack.c.b16 %v2128, %v2124
  %v2849 = vpack.c.b16 %v2129, %v2125
  %v2850 = vpack.c.b16 %v2130, %v2126
  %v2851 = vpack.c.b16 %v2135, %v2131
  %v2852 = vpack.c.b16 %v2136, %v2132
  %v2853 = vpack.c.b16 %v2137, %v2133
  %v2854 = vpack.c.b16 %v2138, %v2134
  %v2855 = vpack.c.b16 %v2143, %v2139
  %v2856 = vpack.c.b16 %v2144, %v2140
  %v2857 = vpack.c.b16 %v2145, %v2141
  %v2858 = vpack.c.b16 %v2146, %v2142
  %v2859 = vpack.c.b16 %v2151, %v2147
  %v2860 = vpack.c.b16 %v2152, %v2148
  %v2861 = vpack.c.b16 %v2153, %v2149
  %v2862 = vpack.c.b16 %v2154, %v2150
  %v2863 = vpack.c.b16 %v2159, %v2155
  %v2864 = vpack.c.b16 %v2160, %v2156
  %v2865 = vpack.c.b16 %v2161, %v2157
  %v2866 = vpack.c.b16 %v2162, %v2158
  %v2867 = vpack.c.b16 %v2167, %v2163
  %v2868 = vpack.c.b16 %v2168, %v2164
  %v2869 = vpack.c.b16 %v2169, %v2165
  %v2870 = vpack.c.b16 %v2170, %v2166
  %v2871 = vpack.c.b16 %v2175, %v2171
  %v2872 = vpack.c.b16 %v2176, %v2172
  %v2873 = vpack.c.b16 %v2177, %v2173
  %v2874 = vpack.c.b16 %v2178, %v2174
  %v2875 = vpack.c.b16 %v2183, %v2179
  %v2876 = vpack.c.b16 %v2184, %v2180
  %v2877 = vpack.c.b16 %v2185, %v2181
  %v2878 = vpack.c.b16 %v2186, %v2182
  %v2879 = vpack.c.b16 %v2191, %v2187
  %v2880 = vpack.c.b16 %v2192, %v2188
  %v2881 = vpack.c.b16 %v2193, %v2189
  %v2882 = vpack.c.b16 %v2194, %v2190
  %v2883 = vpack.c.b16 %v2199, %v2195
  %v2884 = vpack.c.b16 %v2200, %v2196
  %v2885 = vpack.c.b16 %v2201, %v2197
  %v2886 = vpack.c.b16 %v2202, %v2198
  %v2887 = vpack.c.b16 %v2207, %v2203
  %v2888 = vpack.c.b16 %v2208, %v2204
  %v2889 = vpack.c.b16 %v2209, %v2205
  %v2890 = vpack.c.b16 %v2210, %v2206
  %v2891 = vpack.c.b16 %v2215, %v2211
  %v2892 = vpack.c.b16 %v2216, %v2212
  %v2893 = vpack.c.b16 %v2217, %v2213
  %v2894 = vpack.c.b16 %v2218, %v2214
  %v2895 = vpack.c.b16 %v2223, %v2219
  %v2896 = vpack.c.b16 %v2224, %v2220
  %v2897 = vpack.c.b16 %v2225, %v2221
  %v2898 = vpack.c.b16 %v2226, %v2222
  %v2899 = vpack.c.b16 %v2231, %v2227
  %v2900 = vpack.c.b16 %v2232, %v2228
  %v2901 = vpack.c.b16 %v2233, %v2229
  %v2902 = vpack.c.b16 %v2234, %v2230
  %v2903 = vpack.c.b16 %v2239, %v2235
  %v2904 = vpack.c.b16 %v2240, %v2236
  %v2905 = vpack.c.b16 %v2241, %v2237
  %v2906 = vpack.c.b16 %v2242, %v2238
  %v2907 = vpack.c.b16 %v2247, %v2243
  %v2908 = vpack.c.b16 %v2248, %v2244
  %v2909 = vpack.c.b16 %v2249, %v2245
  %v2910 = vpack.c.b16 %v2250, %v2246
  %v2911 = vpack.c.b16 %v2255, %v2251
  %v2912 = vpack.c.b16 %v2256, %v2252
  %v2913 = vpack.c.b16 %v2257, %v2253
  %v2914 = vpack.c.b16 %v2258, %v2254
  %v2915 = vpack.c.b16 %v2263, %v2259
  %v2916 = vpack.c.b16 %v2264, %v2260
  %v2917 = vpack.c.b16 %v2265, %v2261
  %v2918 = vpack.c.b16 %v2266, %v2262
  %v2919 = vpack.c.b16 %v2271, %v2267
  %v2920 = vpack.c.b16 %v2272, %v2268
  %v2921 = vpack.c.b16 %v2273, %v2269
  %v2922 = vpack.c.b16 %v2274, %v2270
  %v2923 = vpack.c.b16 %v2279, %v2275
  %v2924 = vpack.c.b16 %v2280, %v2276
  %v2925 = vpack.c.b16 %v2281, %v2277
  %v2926 = vpack.c.b16 %v2282, %v2278
  %v2927 = vpack.c.b16 %v2287, %v2283
  %v2928 = vpack.c.b16 %v2288, %v2284
  %v2929 = vpack.c.b16 %v2289, %v2285
  %v2930 = vpack.c.b16 %v2290, %v2286
  %v2931 = vpack.c.b16 %v2295, %v2291
  %v2932 = vpack.c.b16 %v2296, %v2292
  %v2933 = vpack.c.b16 %v2297, %v2293
  %v2934 = vpack.c.b16 %v2298, %v2294
  %v2935 = vpack.c.b16 %v2303, %v2299
  %v2936 = vpack.c.b16 %v2304, %v2300
  %v2937 = vpack.c.b16 %v2305, %v2301
  %v2938 = vpack.c.b16 %v2306, %v2302
  %v2939 = vpack.c.b16 %v2311, %v2307
  %v2940 = vpack.c.b16 %v2312, %v2308
  %v2941 = vpack.c.b16 %v2313, %v2309
  %v2942 = vpack.c.b16 %v2314, %v2310
  %v2943 = vpack.c.b16 %v2319, %v2315
  %v2944 = vpack.c.b16 %v2320, %v2316
  %v2945 = vpack.c.b16 %v2321, %v2317
  %v2946 = vpack.c.b16 %v2322, %v2318
  %v2947 = vpack.c.b16 %v2327, %v2323
  %v2948 = vpack.c.b16 %v2328, %v2324
  %v2949 = vpack.c.b16 %v2329, %v2325
  %v2950 = vpack.c.b16 %v2330, %v2326
  %v2951 = vpack.c.b16 %v2335, %v2331
  %v2952 = vpack.c.b16 %v2336, %v2332
  %v2953 = vpack.c.b16 %v2337, %v2333
  %v2954 = vpack.c.b16 %v2338, %v2334
  %v2955 = vpack.c.b16 %v2343, %v2339
  %v2956 = vpack.c.b16 %v2344, %v2340
  %v2957 = vpack.c.b16 %v2345, %v2341
  %v2958 = vpack.c.b16 %v2346, %v2342
  %v2959 = vpack.c.b16 %v2351, %v2347
  %v2960 = vpack.c.b16 %v2352, %v2348
  %v2961 = vpack.c.b16 %v2353, %v2349
  %v2962 = vpack.c.b16 %v2354, %v2350
  %v2963 = vpack.c.b16 %v2359, %v2355
  %v2964 = vpack.c.b16 %v2360, %v2356
  %v2965 = vpack.c.b16 %v2361, %v2357
  %v2966 = vpack.c.b16 %v2362, %v2358
  %v2967 = vpack.c.b16 %v2367, %v2363
  %v2968 = vpack.c.b16 %v2368, %v2364
  %v2969 = vpack.c.b16 %v2369, %v2365
  %v2970 = vpack.c.b16 %v2370, %v2366
  %v2971 = vpack.c.b16 %v2375, %v2371
  %v2972 = vpack.c.b16 %v2376, %v2372
  %v2973 = vpack.c.b16 %v2377, %v2373
  %v2974 = vpack.c.b16 %v2378, %v2374
  %v2975 = vpack.c.b16 %v2383, %v2379
  %v2976 = vpack.c.b16 %v2384, %v2380
  %v2977 = vpack.c.b16 %v2385, %v2381
  %v2978 = vpack.c.b16 %v2386, %v2382
  %v2979 = vpack.c.b16 %v2391, %v2387
  %v2980 = vpack.c.b16 %v2392, %v2388
  %v2981 = vpack.c.b16 %v2393, %v2389
  %v2982 = vpack.c.b16 %v2394, %v2390
  %v2983 = vpack.c.b16 %v2399, %v2395
  %v2984 = vpack.c.b16 %v2400, %v2396
  %v2985 = vpack.c.b16 %v2401, %v2397
  %v2986 = vpack.c.b16 %v2402, %v2398
  %v2987 = vpack.c.b16 %v2407, %v2403
  %v2988 = vpack.c.b16 %v2408, %v2404
  %v2989 = vpack.c.b16 %v2409, %v2405
  %v2990 = vpack.c.b16 %v2410, %v2406
  %v2991 = vpack.c.b16 %v2415, %v2411
  %v2992 = vpack.c.b16 %v2416, %v2412
  %v2993 = vpack.c.b16 %v2417, %v2413
  %v2994 = vpack.c.b16 %v2418, %v2414
  %3571 = vmatprep.subr.bf16.mxu0 %v2448
  %3572 = vmatpush1.bf16.msra.mxu0 %v2447
  %3573 = vmatprep.subr.bf16.mxu0 %v2444
  %3574 = vmatpush1.bf16.msra.mxu0 %v2443
  %3575 = vmatprep.subr.bf16.mxu0 %v2440
  %3576 = vmatpush1.bf16.msra.mxu0 %v2439
  %3577 = vmatprep.subr.bf16.mxu0 %v2436
  %3578 = vmatpush1.bf16.msra.mxu0 %v2435
  %3579 = vmatprep.subr.bf16.mxu0 %v2432
  %3580 = vmatpush1.bf16.msra.mxu0 %v2431
  %3581 = vmatprep.subr.bf16.mxu0 %v2428
  %3582 = vmatpush1.bf16.msra.mxu0 %v2427
  %3583 = vmatprep.subr.bf16.mxu0 %v2424
  %3584 = vmatpush1.bf16.msra.mxu0 %v2423
  %3585 = vmatprep.subr.bf16.mxu0 %v2420
  %3586 = vmatpush1.bf16.msra.mxu0 %v2419
  %3587 = vmatprep.subr.bf16.mxu0 %v2480
  %3588 = vmatpush2.bf16.msra.mxu0 %v2479
  %3589 = vmatprep.subr.bf16.mxu0 %v2476
  %3590 = vmatpush2.bf16.msra.mxu0 %v2475
  %3591 = vmatprep.subr.bf16.mxu0 %v2472
  %3592 = vmatpush2.bf16.msra.mxu0 %v2471
  %3593 = vmatprep.subr.bf16.mxu0 %v2468
  %3594 = vmatpush2.bf16.msra.mxu0 %v2467
  %3595 = vmatprep.subr.bf16.mxu0 %v2464
  %3596 = vmatpush2.bf16.msra.mxu0 %v2463
  %3597 = vmatprep.subr.bf16.mxu0 %v2460
  %3598 = vmatpush2.bf16.msra.mxu0 %v2459
  %3599 = vmatprep.subr.bf16.mxu0 %v2456
  %3600 = vmatpush2.bf16.msra.mxu0 %v2455
  %3601 = vmatprep.subr.bf16.mxu0 %v2452
  %3602 = vmatpush2.bf16.msra.mxu0 %v2451
  %3603 = vmatprep.mubr.bf16.mxu0 %v656
  %3604 = vmatmul.mubr.bf16.gmra.mxu0 %v655
  %v3605 = vpop.f32.mrf.mxu0
  %v3606 = vadd.f32 %v611, %v3605
  %v3607 = vpop.f32.mrf.mxu0
  %v3608 = vadd.f32 %v615, %v3607
  %v3609 = vpop.f32.mrf.mxu0
  %v3610 = vpop.f32.mrf.mxu0
  %3611 = vdwg.mxu0
  %3612 = vmatprep.subr.bf16.mxu0 %v2512
  %3613 = vmatpush1.bf16.msra.mxu0 %v2511
  %3614 = vmatprep.subr.bf16.mxu0 %v2508
  %3615 = vmatpush1.bf16.msra.mxu0 %v2507
  %3616 = vmatprep.subr.bf16.mxu0 %v2504
  %3617 = vmatpush1.bf16.msra.mxu0 %v2503
  %3618 = vmatprep.subr.bf16.mxu0 %v2500
  %3619 = vmatpush1.bf16.msra.mxu0 %v2499
  %3620 = vmatprep.subr.bf16.mxu0 %v2496
  %3621 = vmatpush1.bf16.msra.mxu0 %v2495
  %3622 = vmatprep.subr.bf16.mxu0 %v2492
  %3623 = vmatpush1.bf16.msra.mxu0 %v2491
  %3624 = vmatprep.subr.bf16.mxu0 %v2488
  %3625 = vmatpush1.bf16.msra.mxu0 %v2487
  %3626 = vmatprep.subr.bf16.mxu0 %v2484
  %3627 = vmatpush1.bf16.msra.mxu0 %v2483
  %3628 = vmatprep.subr.bf16.mxu0 %v2544
  %3629 = vmatpush2.bf16.msra.mxu0 %v2543
  %3630 = vmatprep.subr.bf16.mxu0 %v2540
  %3631 = vmatpush2.bf16.msra.mxu0 %v2539
  %3632 = vmatprep.subr.bf16.mxu0 %v2536
  %3633 = vmatpush2.bf16.msra.mxu0 %v2535
  %3634 = vmatprep.subr.bf16.mxu0 %v2532
  %3635 = vmatpush2.bf16.msra.mxu0 %v2531
  %3636 = vmatprep.subr.bf16.mxu0 %v2528
  %3637 = vmatpush2.bf16.msra.mxu0 %v2527
  %3638 = vmatprep.subr.bf16.mxu0 %v2524
  %3639 = vmatpush2.bf16.msra.mxu0 %v2523
  %3640 = vmatprep.subr.bf16.mxu0 %v2520
  %3641 = vmatpush2.bf16.msra.mxu0 %v2519
  %3642 = vmatprep.subr.bf16.mxu0 %v2516
  %3643 = vmatpush2.bf16.msra.mxu0 %v2515
  %3644 = vmatprep.mubr.bf16.mxu0 %v658
  %3645 = vmatmul.mubr.bf16.gmra.mxu0 %v657
  %v3646 = vpop.f32.mrf.mxu0
  %v3647 = vadd.f32 %v3606, %v3646
  %v3648 = vpop.f32.mrf.mxu0
  %v3649 = vadd.f32 %v3608, %v3648
  %v3650 = vpop.f32.mrf.mxu0
  %v3651 = vpop.f32.mrf.mxu0
  %3652 = vdwg.mxu0
  %3653 = vmatprep.subr.bf16.mxu0 %v2576
  %3654 = vmatpush1.bf16.msra.mxu0 %v2575
  %3655 = vmatprep.subr.bf16.mxu0 %v2572
  %3656 = vmatpush1.bf16.msra.mxu0 %v2571
  %3657 = vmatprep.subr.bf16.mxu0 %v2568
  %3658 = vmatpush1.bf16.msra.mxu0 %v2567
  %3659 = vmatprep.subr.bf16.mxu0 %v2564
  %3660 = vmatpush1.bf16.msra.mxu0 %v2563
  %3661 = vmatprep.subr.bf16.mxu0 %v2560
  %3662 = vmatpush1.bf16.msra.mxu0 %v2559
  %3663 = vmatprep.subr.bf16.mxu0 %v2556
  %3664 = vmatpush1.bf16.msra.mxu0 %v2555
  %3665 = vmatprep.subr.bf16.mxu0 %v2552
  %3666 = vmatpush1.bf16.msra.mxu0 %v2551
  %3667 = vmatprep.subr.bf16.mxu0 %v2548
  %3668 = vmatpush1.bf16.msra.mxu0 %v2547
  %3669 = vmatprep.subr.bf16.mxu0 %v2608
  %3670 = vmatpush2.bf16.msra.mxu0 %v2607
  %3671 = vmatprep.subr.bf16.mxu0 %v2604
  %3672 = vmatpush2.bf16.msra.mxu0 %v2603
  %3673 = vmatprep.subr.bf16.mxu0 %v2600
  %3674 = vmatpush2.bf16.msra.mxu0 %v2599
  %3675 = vmatprep.subr.bf16.mxu0 %v2596
  %3676 = vmatpush2.bf16.msra.mxu0 %v2595
  %3677 = vmatprep.subr.bf16.mxu0 %v2592
  %3678 = vmatpush2.bf16.msra.mxu0 %v2591
  %3679 = vmatprep.subr.bf16.mxu0 %v2588
  %3680 = vmatpush2.bf16.msra.mxu0 %v2587
  %3681 = vmatprep.subr.bf16.mxu0 %v2584
  %3682 = vmatpush2.bf16.msra.mxu0 %v2583
  %3683 = vmatprep.subr.bf16.mxu0 %v2580
  %3684 = vmatpush2.bf16.msra.mxu0 %v2579
  %3685 = vmatprep.mubr.bf16.mxu0 %v660
  %3686 = vmatmul.mubr.bf16.gmra.mxu0 %v659
  %v3687 = vpop.f32.mrf.mxu0
  %v3688 = vadd.f32 %v3647, %v3687
  %v3689 = vpop.f32.mrf.mxu0
  %v3690 = vadd.f32 %v3649, %v3689
  %v3691 = vpop.f32.mrf.mxu0
  %v3692 = vpop.f32.mrf.mxu0
  %3693 = vdwg.mxu0
  %3694 = vmatprep.subr.bf16.mxu0 %v2640
  %3695 = vmatpush1.bf16.msra.mxu0 %v2639
  %3696 = vmatprep.subr.bf16.mxu0 %v2636
  %3697 = vmatpush1.bf16.msra.mxu0 %v2635
  %3698 = vmatprep.subr.bf16.mxu0 %v2632
  %3699 = vmatpush1.bf16.msra.mxu0 %v2631
  %3700 = vmatprep.subr.bf16.mxu0 %v2628
  %3701 = vmatpush1.bf16.msra.mxu0 %v2627
  %3702 = vmatprep.subr.bf16.mxu0 %v2624
  %3703 = vmatpush1.bf16.msra.mxu0 %v2623
  %3704 = vmatprep.subr.bf16.mxu0 %v2620
  %3705 = vmatpush1.bf16.msra.mxu0 %v2619
  %3706 = vmatprep.subr.bf16.mxu0 %v2616
  %3707 = vmatpush1.bf16.msra.mxu0 %v2615
  %3708 = vmatprep.subr.bf16.mxu0 %v2612
  %3709 = vmatpush1.bf16.msra.mxu0 %v2611
  %3710 = vmatprep.subr.bf16.mxu0 %v2672
  %3711 = vmatpush2.bf16.msra.mxu0 %v2671
  %3712 = vmatprep.subr.bf16.mxu0 %v2668
  %3713 = vmatpush2.bf16.msra.mxu0 %v2667
  %3714 = vmatprep.subr.bf16.mxu0 %v2664
  %3715 = vmatpush2.bf16.msra.mxu0 %v2663
  %3716 = vmatprep.subr.bf16.mxu0 %v2660
  %3717 = vmatpush2.bf16.msra.mxu0 %v2659
  %3718 = vmatprep.subr.bf16.mxu0 %v2656
  %3719 = vmatpush2.bf16.msra.mxu0 %v2655
  %3720 = vmatprep.subr.bf16.mxu0 %v2652
  %3721 = vmatpush2.bf16.msra.mxu0 %v2651
  %3722 = vmatprep.subr.bf16.mxu0 %v2648
  %3723 = vmatpush2.bf16.msra.mxu0 %v2647
  %3724 = vmatprep.subr.bf16.mxu0 %v2644
  %3725 = vmatpush2.bf16.msra.mxu0 %v2643
  %3726 = vmatprep.mubr.bf16.mxu0 %v662
  %3727 = vmatmul.mubr.bf16.gmra.mxu0 %v661
  %v3728 = vpop.f32.mrf.mxu0
  %v3729 = vadd.f32 %v3688, %v3728
  %v3730 = vpop.f32.mrf.mxu0
  %v3731 = vadd.f32 %v3690, %v3730
  %v3732 = vpop.f32.mrf.mxu0
  %v3733 = vpop.f32.mrf.mxu0
  %3734 = vdwg.mxu0
  %3735 = vmatprep.subr.bf16.mxu0 %v2704
  %3736 = vmatpush1.bf16.msra.mxu0 %v2703
  %3737 = vmatprep.subr.bf16.mxu0 %v2700
  %3738 = vmatpush1.bf16.msra.mxu0 %v2699
  %3739 = vmatprep.subr.bf16.mxu0 %v2696
  %3740 = vmatpush1.bf16.msra.mxu0 %v2695
  %3741 = vmatprep.subr.bf16.mxu0 %v2692
  %3742 = vmatpush1.bf16.msra.mxu0 %v2691
  %3743 = vmatprep.subr.bf16.mxu0 %v2688
  %3744 = vmatpush1.bf16.msra.mxu0 %v2687
  %3745 = vmatprep.subr.bf16.mxu0 %v2684
  %3746 = vmatpush1.bf16.msra.mxu0 %v2683
  %3747 = vmatprep.subr.bf16.mxu0 %v2680
  %3748 = vmatpush1.bf16.msra.mxu0 %v2679
  %3749 = vmatprep.subr.bf16.mxu0 %v2676
  %3750 = vmatpush1.bf16.msra.mxu0 %v2675
  %3751 = vmatprep.subr.bf16.mxu0 %v2736
  %3752 = vmatpush2.bf16.msra.mxu0 %v2735
  %3753 = vmatprep.subr.bf16.mxu0 %v2732
  %3754 = vmatpush2.bf16.msra.mxu0 %v2731
  %3755 = vmatprep.subr.bf16.mxu0 %v2728
  %3756 = vmatpush2.bf16.msra.mxu0 %v2727
  %3757 = vmatprep.subr.bf16.mxu0 %v2724
  %3758 = vmatpush2.bf16.msra.mxu0 %v2723
  %3759 = vmatprep.subr.bf16.mxu0 %v2720
  %3760 = vmatpush2.bf16.msra.mxu0 %v2719
  %3761 = vmatprep.subr.bf16.mxu0 %v2716
  %3762 = vmatpush2.bf16.msra.mxu0 %v2715
  %3763 = vmatprep.subr.bf16.mxu0 %v2712
  %3764 = vmatpush2.bf16.msra.mxu0 %v2711
  %3765 = vmatprep.subr.bf16.mxu0 %v2708
  %3766 = vmatpush2.bf16.msra.mxu0 %v2707
  %3767 = vmatprep.mubr.bf16.mxu0 %v664
  %3768 = vmatmul.mubr.bf16.gmra.mxu0 %v663
  %v3769 = vpop.f32.mrf.mxu0
  %v3770 = vadd.f32 %v3729, %v3769
  %v3771 = vpop.f32.mrf.mxu0
  %v3772 = vadd.f32 %v3731, %v3771
  %v3773 = vpop.f32.mrf.mxu0
  %v3774 = vpop.f32.mrf.mxu0
  %3775 = vdwg.mxu0
  %3776 = vmatprep.subr.bf16.mxu0 %v2768
  %3777 = vmatpush1.bf16.msra.mxu0 %v2767
  %3778 = vmatprep.subr.bf16.mxu0 %v2764
  %3779 = vmatpush1.bf16.msra.mxu0 %v2763
  %3780 = vmatprep.subr.bf16.mxu0 %v2760
  %3781 = vmatpush1.bf16.msra.mxu0 %v2759
  %3782 = vmatprep.subr.bf16.mxu0 %v2756
  %3783 = vmatpush1.bf16.msra.mxu0 %v2755
  %3784 = vmatprep.subr.bf16.mxu0 %v2752
  %3785 = vmatpush1.bf16.msra.mxu0 %v2751
  %3786 = vmatprep.subr.bf16.mxu0 %v2748
  %3787 = vmatpush1.bf16.msra.mxu0 %v2747
  %3788 = vmatprep.subr.bf16.mxu0 %v2744
  %3789 = vmatpush1.bf16.msra.mxu0 %v2743
  %3790 = vmatprep.subr.bf16.mxu0 %v2740
  %3791 = vmatpush1.bf16.msra.mxu0 %v2739
  %3792 = vmatprep.subr.bf16.mxu0 %v2800
  %3793 = vmatpush2.bf16.msra.mxu0 %v2799
  %3794 = vmatprep.subr.bf16.mxu0 %v2796
  %3795 = vmatpush2.bf16.msra.mxu0 %v2795
  %3796 = vmatprep.subr.bf16.mxu0 %v2792
  %3797 = vmatpush2.bf16.msra.mxu0 %v2791
  %3798 = vmatprep.subr.bf16.mxu0 %v2788
  %3799 = vmatpush2.bf16.msra.mxu0 %v2787
  %3800 = vmatprep.subr.bf16.mxu0 %v2784
  %3801 = vmatpush2.bf16.msra.mxu0 %v2783
  %3802 = vmatprep.subr.bf16.mxu0 %v2780
  %3803 = vmatpush2.bf16.msra.mxu0 %v2779
  %3804 = vmatprep.subr.bf16.mxu0 %v2776
  %3805 = vmatpush2.bf16.msra.mxu0 %v2775
  %3806 = vmatprep.subr.bf16.mxu0 %v2772
  %3807 = vmatpush2.bf16.msra.mxu0 %v2771
  %3808 = vmatprep.mubr.bf16.mxu0 %v666
  %3809 = vmatmul.mubr.bf16.gmra.mxu0 %v665
  %v3810 = vpop.f32.mrf.mxu0
  %v3811 = vadd.f32 %v3770, %v3810
  %v3812 = vpop.f32.mrf.mxu0
  %v3813 = vadd.f32 %v3772, %v3812
  %v3814 = vpop.f32.mrf.mxu0
  %v3815 = vpop.f32.mrf.mxu0
  %3816 = vdwg.mxu0
  %3817 = vmatprep.subr.bf16.mxu0 %v2832
  %3818 = vmatpush1.bf16.msra.mxu0 %v2831
  %3819 = vmatprep.subr.bf16.mxu0 %v2828
  %3820 = vmatpush1.bf16.msra.mxu0 %v2827
  %3821 = vmatprep.subr.bf16.mxu0 %v2824
  %3822 = vmatpush1.bf16.msra.mxu0 %v2823
  %3823 = vmatprep.subr.bf16.mxu0 %v2820
  %3824 = vmatpush1.bf16.msra.mxu0 %v2819
  %3825 = vmatprep.subr.bf16.mxu0 %v2816
  %3826 = vmatpush1.bf16.msra.mxu0 %v2815
  %3827 = vmatprep.subr.bf16.mxu0 %v2812
  %3828 = vmatpush1.bf16.msra.mxu0 %v2811
  %3829 = vmatprep.subr.bf16.mxu0 %v2808
  %3830 = vmatpush1.bf16.msra.mxu0 %v2807
  %3831 = vmatprep.subr.bf16.mxu0 %v2804
  %3832 = vmatpush1.bf16.msra.mxu0 %v2803
  %3833 = vmatprep.subr.bf16.mxu0 %v2864
  %3834 = vmatpush2.bf16.msra.mxu0 %v2863
  %3835 = vmatprep.subr.bf16.mxu0 %v2860
  %3836 = vmatpush2.bf16.msra.mxu0 %v2859
  %3837 = vmatprep.subr.bf16.mxu0 %v2856
  %3838 = vmatpush2.bf16.msra.mxu0 %v2855
  %3839 = vmatprep.subr.bf16.mxu0 %v2852
  %3840 = vmatpush2.bf16.msra.mxu0 %v2851
  %3841 = vmatprep.subr.bf16.mxu0 %v2848
  %3842 = vmatpush2.bf16.msra.mxu0 %v2847
  %3843 = vmatprep.subr.bf16.mxu0 %v2844
  %3844 = vmatpush2.bf16.msra.mxu0 %v2843
  %3845 = vmatprep.subr.bf16.mxu0 %v2840
  %3846 = vmatpush2.bf16.msra.mxu0 %v2839
  %3847 = vmatprep.subr.bf16.mxu0 %v2836
  %3848 = vmatpush2.bf16.msra.mxu0 %v2835
  %3849 = vmatprep.mubr.bf16.mxu0 %v668
  %3850 = vmatmul.mubr.bf16.gmra.mxu0 %v667
  %v3851 = vpop.f32.mrf.mxu0
  %v3852 = vadd.f32 %v3811, %v3851
  %v3853 = vpop.f32.mrf.mxu0
  %v3854 = vadd.f32 %v3813, %v3853
  %v3855 = vpop.f32.mrf.mxu0
  %v3856 = vpop.f32.mrf.mxu0
  %3857 = vdwg.mxu0
  %3858 = vmatprep.subr.bf16.mxu0 %v2896
  %3859 = vmatpush1.bf16.msra.mxu0 %v2895
  %3860 = vmatprep.subr.bf16.mxu0 %v2892
  %3861 = vmatpush1.bf16.msra.mxu0 %v2891
  %3862 = vmatprep.subr.bf16.mxu0 %v2888
  %3863 = vmatpush1.bf16.msra.mxu0 %v2887
  %3864 = vmatprep.subr.bf16.mxu0 %v2884
  %3865 = vmatpush1.bf16.msra.mxu0 %v2883
  %3866 = vmatprep.subr.bf16.mxu0 %v2880
  %3867 = vmatpush1.bf16.msra.mxu0 %v2879
  %3868 = vmatprep.subr.bf16.mxu0 %v2876
  %3869 = vmatpush1.bf16.msra.mxu0 %v2875
  %3870 = vmatprep.subr.bf16.mxu0 %v2872
  %3871 = vmatpush1.bf16.msra.mxu0 %v2871
  %3872 = vmatprep.subr.bf16.mxu0 %v2868
  %3873 = vmatpush1.bf16.msra.mxu0 %v2867
  %3874 = vmatprep.subr.bf16.mxu0 %v2928
  %3875 = vmatpush2.bf16.msra.mxu0 %v2927
  %3876 = vmatprep.subr.bf16.mxu0 %v2924
  %3877 = vmatpush2.bf16.msra.mxu0 %v2923
  %3878 = vmatprep.subr.bf16.mxu0 %v2920
  %3879 = vmatpush2.bf16.msra.mxu0 %v2919
  %3880 = vmatprep.subr.bf16.mxu0 %v2916
  %3881 = vmatpush2.bf16.msra.mxu0 %v2915
  %3882 = vmatprep.subr.bf16.mxu0 %v2912
  %3883 = vmatpush2.bf16.msra.mxu0 %v2911
  %3884 = vmatprep.subr.bf16.mxu0 %v2908
  %3885 = vmatpush2.bf16.msra.mxu0 %v2907
  %3886 = vmatprep.subr.bf16.mxu0 %v2904
  %3887 = vmatpush2.bf16.msra.mxu0 %v2903
  %3888 = vmatprep.subr.bf16.mxu0 %v2900
  %3889 = vmatpush2.bf16.msra.mxu0 %v2899
  %3890 = vmatprep.mubr.bf16.mxu0 %v670
  %3891 = vmatmul.mubr.bf16.gmra.mxu0 %v669
  %v3892 = vpop.f32.mrf.mxu0
  %v3893 = vadd.f32 %v3852, %v3892
  %v3894 = vpop.f32.mrf.mxu0
  %v3895 = vadd.f32 %v3854, %v3894
  %v3896 = vpop.f32.mrf.mxu0
  %v3897 = vpop.f32.mrf.mxu0
  %3898 = vdwg.mxu0
  %3899 = vmatprep.subr.bf16.mxu0 %v2960
  %3900 = vmatpush1.bf16.msra.mxu0 %v2959
  %3901 = vmatprep.subr.bf16.mxu0 %v2956
  %3902 = vmatpush1.bf16.msra.mxu0 %v2955
  %3903 = vmatprep.subr.bf16.mxu0 %v2952
  %3904 = vmatpush1.bf16.msra.mxu0 %v2951
  %3905 = vmatprep.subr.bf16.mxu0 %v2948
  %3906 = vmatpush1.bf16.msra.mxu0 %v2947
  %3907 = vmatprep.subr.bf16.mxu0 %v2944
  %3908 = vmatpush1.bf16.msra.mxu0 %v2943
  %3909 = vmatprep.subr.bf16.mxu0 %v2940
  %3910 = vmatpush1.bf16.msra.mxu0 %v2939
  %3911 = vmatprep.subr.bf16.mxu0 %v2936
  %3912 = vmatpush1.bf16.msra.mxu0 %v2935
  %3913 = vmatprep.subr.bf16.mxu0 %v2932
  %3914 = vmatpush1.bf16.msra.mxu0 %v2931
  %3915 = vmatprep.subr.bf16.mxu0 %v2992
  %3916 = vmatpush2.bf16.msra.mxu0 %v2991
  %3917 = vmatprep.subr.bf16.mxu0 %v2988
  %3918 = vmatpush2.bf16.msra.mxu0 %v2987
  %3919 = vmatprep.subr.bf16.mxu0 %v2984
  %3920 = vmatpush2.bf16.msra.mxu0 %v2983
  %3921 = vmatprep.subr.bf16.mxu0 %v2980
  %3922 = vmatpush2.bf16.msra.mxu0 %v2979
  %3923 = vmatprep.subr.bf16.mxu0 %v2976
  %3924 = vmatpush2.bf16.msra.mxu0 %v2975
  %3925 = vmatprep.subr.bf16.mxu0 %v2972
  %3926 = vmatpush2.bf16.msra.mxu0 %v2971
  %3927 = vmatprep.subr.bf16.mxu0 %v2968
  %3928 = vmatpush2.bf16.msra.mxu0 %v2967
  %3929 = vmatprep.subr.bf16.mxu0 %v2964
  %3930 = vmatpush2.bf16.msra.mxu0 %v2963
  %3931 = vmatprep.mubr.bf16.mxu0 %v672
  %3932 = vmatmul.mubr.bf16.gmra.mxu0 %v671
  %v3933 = vpop.f32.mrf.mxu0
  %v3934 = vadd.f32 %v3893, %v3933
  %v3935 = vpop.f32.mrf.mxu0
  %v3936 = vadd.f32 %v3895, %v3935
  %v3937 = vpop.f32.mrf.mxu0
  %v3938 = vpop.f32.mrf.mxu0
  %3939 = vdwg.mxu0
  %3940 = vmatprep.subr.bf16.mxu0 %v2450
  %3941 = vmatpush1.bf16.msra.mxu0 %v2449
  %3942 = vmatprep.subr.bf16.mxu0 %v2446
  %3943 = vmatpush1.bf16.msra.mxu0 %v2445
  %3944 = vmatprep.subr.bf16.mxu0 %v2442
  %3945 = vmatpush1.bf16.msra.mxu0 %v2441
  %3946 = vmatprep.subr.bf16.mxu0 %v2438
  %3947 = vmatpush1.bf16.msra.mxu0 %v2437
  %3948 = vmatprep.subr.bf16.mxu0 %v2434
  %3949 = vmatpush1.bf16.msra.mxu0 %v2433
  %3950 = vmatprep.subr.bf16.mxu0 %v2430
  %3951 = vmatpush1.bf16.msra.mxu0 %v2429
  %3952 = vmatprep.subr.bf16.mxu0 %v2426
  %3953 = vmatpush1.bf16.msra.mxu0 %v2425
  %3954 = vmatprep.subr.bf16.mxu0 %v2422
  %3955 = vmatpush1.bf16.msra.mxu0 %v2421
  %3956 = vmatprep.subr.bf16.mxu0 %v2482
  %3957 = vmatpush2.bf16.msra.mxu0 %v2481
  %3958 = vmatprep.subr.bf16.mxu0 %v2478
  %3959 = vmatpush2.bf16.msra.mxu0 %v2477
  %3960 = vmatprep.subr.bf16.mxu0 %v2474
  %3961 = vmatpush2.bf16.msra.mxu0 %v2473
  %3962 = vmatprep.subr.bf16.mxu0 %v2470
  %3963 = vmatpush2.bf16.msra.mxu0 %v2469
  %3964 = vmatprep.subr.bf16.mxu0 %v2466
  %3965 = vmatpush2.bf16.msra.mxu0 %v2465
  %3966 = vmatprep.subr.bf16.mxu0 %v2462
  %3967 = vmatpush2.bf16.msra.mxu0 %v2461
  %3968 = vmatprep.subr.bf16.mxu0 %v2458
  %3969 = vmatpush2.bf16.msra.mxu0 %v2457
  %3970 = vmatprep.subr.bf16.mxu0 %v2454
  %3971 = vmatpush2.bf16.msra.mxu0 %v2453
  %3972 = vmatprep.mubr.bf16.mxu0 %v656
  %3973 = vmatmul.mubr.bf16.gmra.mxu0 %v655
  %v3974 = vpop.f32.mrf.mxu0
  %v3975 = vadd.f32 %v619, %v3974
  %v3976 = vpop.f32.mrf.mxu0
  %v3977 = vadd.f32 %v623, %v3976
  %v3978 = vpop.f32.mrf.mxu0
  %v3979 = vpop.f32.mrf.mxu0
  %3980 = vdwg.mxu0
  %3981 = vmatprep.subr.bf16.mxu0 %v2514
  %3982 = vmatpush1.bf16.msra.mxu0 %v2513
  %3983 = vmatprep.subr.bf16.mxu0 %v2510
  %3984 = vmatpush1.bf16.msra.mxu0 %v2509
  %3985 = vmatprep.subr.bf16.mxu0 %v2506
  %3986 = vmatpush1.bf16.msra.mxu0 %v2505
  %3987 = vmatprep.subr.bf16.mxu0 %v2502
  %3988 = vmatpush1.bf16.msra.mxu0 %v2501
  %3989 = vmatprep.subr.bf16.mxu0 %v2498
  %3990 = vmatpush1.bf16.msra.mxu0 %v2497
  %3991 = vmatprep.subr.bf16.mxu0 %v2494
  %3992 = vmatpush1.bf16.msra.mxu0 %v2493
  %3993 = vmatprep.subr.bf16.mxu0 %v2490
  %3994 = vmatpush1.bf16.msra.mxu0 %v2489
  %3995 = vmatprep.subr.bf16.mxu0 %v2486
  %3996 = vmatpush1.bf16.msra.mxu0 %v2485
  %3997 = vmatprep.subr.bf16.mxu0 %v2546
  %3998 = vmatpush2.bf16.msra.mxu0 %v2545
  %3999 = vmatprep.subr.bf16.mxu0 %v2542
  %4000 = vmatpush2.bf16.msra.mxu0 %v2541
  %4001 = vmatprep.subr.bf16.mxu0 %v2538
  %4002 = vmatpush2.bf16.msra.mxu0 %v2537
  %4003 = vmatprep.subr.bf16.mxu0 %v2534
  %4004 = vmatpush2.bf16.msra.mxu0 %v2533
  %4005 = vmatprep.subr.bf16.mxu0 %v2530
  %4006 = vmatpush2.bf16.msra.mxu0 %v2529
  %4007 = vmatprep.subr.bf16.mxu0 %v2526
  %4008 = vmatpush2.bf16.msra.mxu0 %v2525
  %4009 = vmatprep.subr.bf16.mxu0 %v2522
  %4010 = vmatpush2.bf16.msra.mxu0 %v2521
  %4011 = vmatprep.subr.bf16.mxu0 %v2518
  %4012 = vmatpush2.bf16.msra.mxu0 %v2517
  %4013 = vmatprep.mubr.bf16.mxu0 %v658
  %4014 = vmatmul.mubr.bf16.gmra.mxu0 %v657
  %v4015 = vpop.f32.mrf.mxu0
  %v4016 = vadd.f32 %v3975, %v4015
  %v4017 = vpop.f32.mrf.mxu0
  %v4018 = vadd.f32 %v3977, %v4017
  %v4019 = vpop.f32.mrf.mxu0
  %v4020 = vpop.f32.mrf.mxu0
  %4021 = vdwg.mxu0
  %4022 = vmatprep.subr.bf16.mxu0 %v2578
  %4023 = vmatpush1.bf16.msra.mxu0 %v2577
  %4024 = vmatprep.subr.bf16.mxu0 %v2574
  %4025 = vmatpush1.bf16.msra.mxu0 %v2573
  %4026 = vmatprep.subr.bf16.mxu0 %v2570
  %4027 = vmatpush1.bf16.msra.mxu0 %v2569
  %4028 = vmatprep.subr.bf16.mxu0 %v2566
  %4029 = vmatpush1.bf16.msra.mxu0 %v2565
  %4030 = vmatprep.subr.bf16.mxu0 %v2562
  %4031 = vmatpush1.bf16.msra.mxu0 %v2561
  %4032 = vmatprep.subr.bf16.mxu0 %v2558
  %4033 = vmatpush1.bf16.msra.mxu0 %v2557
  %4034 = vmatprep.subr.bf16.mxu0 %v2554
  %4035 = vmatpush1.bf16.msra.mxu0 %v2553
  %4036 = vmatprep.subr.bf16.mxu0 %v2550
  %4037 = vmatpush1.bf16.msra.mxu0 %v2549
  %4038 = vmatprep.subr.bf16.mxu0 %v2610
  %4039 = vmatpush2.bf16.msra.mxu0 %v2609
  %4040 = vmatprep.subr.bf16.mxu0 %v2606
  %4041 = vmatpush2.bf16.msra.mxu0 %v2605
  %4042 = vmatprep.subr.bf16.mxu0 %v2602
  %4043 = vmatpush2.bf16.msra.mxu0 %v2601
  %4044 = vmatprep.subr.bf16.mxu0 %v2598
  %4045 = vmatpush2.bf16.msra.mxu0 %v2597
  %4046 = vmatprep.subr.bf16.mxu0 %v2594
  %4047 = vmatpush2.bf16.msra.mxu0 %v2593
  %4048 = vmatprep.subr.bf16.mxu0 %v2590
  %4049 = vmatpush2.bf16.msra.mxu0 %v2589
  %4050 = vmatprep.subr.bf16.mxu0 %v2586
  %4051 = vmatpush2.bf16.msra.mxu0 %v2585
  %4052 = vmatprep.subr.bf16.mxu0 %v2582
  %4053 = vmatpush2.bf16.msra.mxu0 %v2581
  %4054 = vmatprep.mubr.bf16.mxu0 %v660
  %4055 = vmatmul.mubr.bf16.gmra.mxu0 %v659
  %v4056 = vpop.f32.mrf.mxu0
  %v4057 = vadd.f32 %v4016, %v4056
  %v4058 = vpop.f32.mrf.mxu0
  %v4059 = vadd.f32 %v4018, %v4058
  %v4060 = vpop.f32.mrf.mxu0
  %v4061 = vpop.f32.mrf.mxu0
  %4062 = vdwg.mxu0
  %4063 = vmatprep.subr.bf16.mxu0 %v2642
  %4064 = vmatpush1.bf16.msra.mxu0 %v2641
  %4065 = vmatprep.subr.bf16.mxu0 %v2638
  %4066 = vmatpush1.bf16.msra.mxu0 %v2637
  %4067 = vmatprep.subr.bf16.mxu0 %v2634
  %4068 = vmatpush1.bf16.msra.mxu0 %v2633
  %4069 = vmatprep.subr.bf16.mxu0 %v2630
  %4070 = vmatpush1.bf16.msra.mxu0 %v2629
  %4071 = vmatprep.subr.bf16.mxu0 %v2626
  %4072 = vmatpush1.bf16.msra.mxu0 %v2625
  %4073 = vmatprep.subr.bf16.mxu0 %v2622
  %4074 = vmatpush1.bf16.msra.mxu0 %v2621
  %4075 = vmatprep.subr.bf16.mxu0 %v2618
  %4076 = vmatpush1.bf16.msra.mxu0 %v2617
  %4077 = vmatprep.subr.bf16.mxu0 %v2614
  %4078 = vmatpush1.bf16.msra.mxu0 %v2613
  %4079 = vmatprep.subr.bf16.mxu0 %v2674
  %4080 = vmatpush2.bf16.msra.mxu0 %v2673
  %4081 = vmatprep.subr.bf16.mxu0 %v2670
  %4082 = vmatpush2.bf16.msra.mxu0 %v2669
  %4083 = vmatprep.subr.bf16.mxu0 %v2666
  %4084 = vmatpush2.bf16.msra.mxu0 %v2665
  %4085 = vmatprep.subr.bf16.mxu0 %v2662
  %4086 = vmatpush2.bf16.msra.mxu0 %v2661
  %4087 = vmatprep.subr.bf16.mxu0 %v2658
  %4088 = vmatpush2.bf16.msra.mxu0 %v2657
  %4089 = vmatprep.subr.bf16.mxu0 %v2654
  %4090 = vmatpush2.bf16.msra.mxu0 %v2653
  %4091 = vmatprep.subr.bf16.mxu0 %v2650
  %4092 = vmatpush2.bf16.msra.mxu0 %v2649
  %4093 = vmatprep.subr.bf16.mxu0 %v2646
  %4094 = vmatpush2.bf16.msra.mxu0 %v2645
  %4095 = vmatprep.mubr.bf16.mxu0 %v662
  %4096 = vmatmul.mubr.bf16.gmra.mxu0 %v661
  %v4097 = vpop.f32.mrf.mxu0
  %v4098 = vadd.f32 %v4057, %v4097
  %v4099 = vpop.f32.mrf.mxu0
  %v4100 = vadd.f32 %v4059, %v4099
  %v4101 = vpop.f32.mrf.mxu0
  %v4102 = vpop.f32.mrf.mxu0
  %4103 = vdwg.mxu0
  %4104 = vmatprep.subr.bf16.mxu0 %v2706
  %4105 = vmatpush1.bf16.msra.mxu0 %v2705
  %4106 = vmatprep.subr.bf16.mxu0 %v2702
  %4107 = vmatpush1.bf16.msra.mxu0 %v2701
  %4108 = vmatprep.subr.bf16.mxu0 %v2698
  %4109 = vmatpush1.bf16.msra.mxu0 %v2697
  %4110 = vmatprep.subr.bf16.mxu0 %v2694
  %4111 = vmatpush1.bf16.msra.mxu0 %v2693
  %4112 = vmatprep.subr.bf16.mxu0 %v2690
  %4113 = vmatpush1.bf16.msra.mxu0 %v2689
  %4114 = vmatprep.subr.bf16.mxu0 %v2686
  %4115 = vmatpush1.bf16.msra.mxu0 %v2685
  %4116 = vmatprep.subr.bf16.mxu0 %v2682
  %4117 = vmatpush1.bf16.msra.mxu0 %v2681
  %4118 = vmatprep.subr.bf16.mxu0 %v2678
  %4119 = vmatpush1.bf16.msra.mxu0 %v2677
  %4120 = vmatprep.subr.bf16.mxu0 %v2738
  %4121 = vmatpush2.bf16.msra.mxu0 %v2737
  %4122 = vmatprep.subr.bf16.mxu0 %v2734
  %4123 = vmatpush2.bf16.msra.mxu0 %v2733
  %4124 = vmatprep.subr.bf16.mxu0 %v2730
  %4125 = vmatpush2.bf16.msra.mxu0 %v2729
  %4126 = vmatprep.subr.bf16.mxu0 %v2726
  %4127 = vmatpush2.bf16.msra.mxu0 %v2725
  %4128 = vmatprep.subr.bf16.mxu0 %v2722
  %4129 = vmatpush2.bf16.msra.mxu0 %v2721
  %4130 = vmatprep.subr.bf16.mxu0 %v2718
  %4131 = vmatpush2.bf16.msra.mxu0 %v2717
  %4132 = vmatprep.subr.bf16.mxu0 %v2714
  %4133 = vmatpush2.bf16.msra.mxu0 %v2713
  %4134 = vmatprep.subr.bf16.mxu0 %v2710
  %4135 = vmatpush2.bf16.msra.mxu0 %v2709
  %4136 = vmatprep.mubr.bf16.mxu0 %v664
  %4137 = vmatmul.mubr.bf16.gmra.mxu0 %v663
  %v4138 = vpop.f32.mrf.mxu0
  %v4139 = vadd.f32 %v4098, %v4138
  %v4140 = vpop.f32.mrf.mxu0
  %v4141 = vadd.f32 %v4100, %v4140
  %v4142 = vpop.f32.mrf.mxu0
  %v4143 = vpop.f32.mrf.mxu0
  %4144 = vdwg.mxu0
  %4145 = vmatprep.subr.bf16.mxu0 %v2770
  %4146 = vmatpush1.bf16.msra.mxu0 %v2769
  %4147 = vmatprep.subr.bf16.mxu0 %v2766
  %4148 = vmatpush1.bf16.msra.mxu0 %v2765
  %4149 = vmatprep.subr.bf16.mxu0 %v2762
  %4150 = vmatpush1.bf16.msra.mxu0 %v2761
  %4151 = vmatprep.subr.bf16.mxu0 %v2758
  %4152 = vmatpush1.bf16.msra.mxu0 %v2757
  %4153 = vmatprep.subr.bf16.mxu0 %v2754
  %4154 = vmatpush1.bf16.msra.mxu0 %v2753
  %4155 = vmatprep.subr.bf16.mxu0 %v2750
  %4156 = vmatpush1.bf16.msra.mxu0 %v2749
  %4157 = vmatprep.subr.bf16.mxu0 %v2746
  %4158 = vmatpush1.bf16.msra.mxu0 %v2745
  %4159 = vmatprep.subr.bf16.mxu0 %v2742
  %4160 = vmatpush1.bf16.msra.mxu0 %v2741
  %4161 = vmatprep.subr.bf16.mxu0 %v2802
  %4162 = vmatpush2.bf16.msra.mxu0 %v2801
  %4163 = vmatprep.subr.bf16.mxu0 %v2798
  %4164 = vmatpush2.bf16.msra.mxu0 %v2797
  %4165 = vmatprep.subr.bf16.mxu0 %v2794
  %4166 = vmatpush2.bf16.msra.mxu0 %v2793
  %4167 = vmatprep.subr.bf16.mxu0 %v2790
  %4168 = vmatpush2.bf16.msra.mxu0 %v2789
  %4169 = vmatprep.subr.bf16.mxu0 %v2786
  %4170 = vmatpush2.bf16.msra.mxu0 %v2785
  %4171 = vmatprep.subr.bf16.mxu0 %v2782
  %4172 = vmatpush2.bf16.msra.mxu0 %v2781
  %4173 = vmatprep.subr.bf16.mxu0 %v2778
  %4174 = vmatpush2.bf16.msra.mxu0 %v2777
  %4175 = vmatprep.subr.bf16.mxu0 %v2774
  %4176 = vmatpush2.bf16.msra.mxu0 %v2773
  %4177 = vmatprep.mubr.bf16.mxu0 %v666
  %4178 = vmatmul.mubr.bf16.gmra.mxu0 %v665
  %v4179 = vpop.f32.mrf.mxu0
  %v4180 = vadd.f32 %v4139, %v4179
  %v4181 = vpop.f32.mrf.mxu0
  %v4182 = vadd.f32 %v4141, %v4181
  %v4183 = vpop.f32.mrf.mxu0
  %v4184 = vpop.f32.mrf.mxu0
  %4185 = vdwg.mxu0
  %4186 = vmatprep.subr.bf16.mxu0 %v2834
  %4187 = vmatpush1.bf16.msra.mxu0 %v2833
  %4188 = vmatprep.subr.bf16.mxu0 %v2830
  %4189 = vmatpush1.bf16.msra.mxu0 %v2829
  %4190 = vmatprep.subr.bf16.mxu0 %v2826
  %4191 = vmatpush1.bf16.msra.mxu0 %v2825
  %4192 = vmatprep.subr.bf16.mxu0 %v2822
  %4193 = vmatpush1.bf16.msra.mxu0 %v2821
  %4194 = vmatprep.subr.bf16.mxu0 %v2818
  %4195 = vmatpush1.bf16.msra.mxu0 %v2817
  %4196 = vmatprep.subr.bf16.mxu0 %v2814
  %4197 = vmatpush1.bf16.msra.mxu0 %v2813
  %4198 = vmatprep.subr.bf16.mxu0 %v2810
  %4199 = vmatpush1.bf16.msra.mxu0 %v2809
  %4200 = vmatprep.subr.bf16.mxu0 %v2806
  %4201 = vmatpush1.bf16.msra.mxu0 %v2805
  %4202 = vmatprep.subr.bf16.mxu0 %v2866
  %4203 = vmatpush2.bf16.msra.mxu0 %v2865
  %4204 = vmatprep.subr.bf16.mxu0 %v2862
  %4205 = vmatpush2.bf16.msra.mxu0 %v2861
  %4206 = vmatprep.subr.bf16.mxu0 %v2858
  %4207 = vmatpush2.bf16.msra.mxu0 %v2857
  %4208 = vmatprep.subr.bf16.mxu0 %v2854
  %4209 = vmatpush2.bf16.msra.mxu0 %v2853
  %4210 = vmatprep.subr.bf16.mxu0 %v2850
  %4211 = vmatpush2.bf16.msra.mxu0 %v2849
  %4212 = vmatprep.subr.bf16.mxu0 %v2846
  %4213 = vmatpush2.bf16.msra.mxu0 %v2845
  %4214 = vmatprep.subr.bf16.mxu0 %v2842
  %4215 = vmatpush2.bf16.msra.mxu0 %v2841
  %4216 = vmatprep.subr.bf16.mxu0 %v2838
  %4217 = vmatpush2.bf16.msra.mxu0 %v2837
  %4218 = vmatprep.mubr.bf16.mxu0 %v668
  %4219 = vmatmul.mubr.bf16.gmra.mxu0 %v667
  %v4220 = vpop.f32.mrf.mxu0
  %v4221 = vadd.f32 %v4180, %v4220
  %v4222 = vpop.f32.mrf.mxu0
  %v4223 = vadd.f32 %v4182, %v4222
  %v4224 = vpop.f32.mrf.mxu0
  %v4225 = vpop.f32.mrf.mxu0
  %4226 = vdwg.mxu0
  %4227 = vmatprep.subr.bf16.mxu0 %v2898
  %4228 = vmatpush1.bf16.msra.mxu0 %v2897
  %4229 = vmatprep.subr.bf16.mxu0 %v2894
  %4230 = vmatpush1.bf16.msra.mxu0 %v2893
  %4231 = vmatprep.subr.bf16.mxu0 %v2890
  %4232 = vmatpush1.bf16.msra.mxu0 %v2889
  %4233 = vmatprep.subr.bf16.mxu0 %v2886
  %4234 = vmatpush1.bf16.msra.mxu0 %v2885
  %4235 = vmatprep.subr.bf16.mxu0 %v2882
  %4236 = vmatpush1.bf16.msra.mxu0 %v2881
  %4237 = vmatprep.subr.bf16.mxu0 %v2878
  %4238 = vmatpush1.bf16.msra.mxu0 %v2877
  %4239 = vmatprep.subr.bf16.mxu0 %v2874
  %4240 = vmatpush1.bf16.msra.mxu0 %v2873
  %4241 = vmatprep.subr.bf16.mxu0 %v2870
  %4242 = vmatpush1.bf16.msra.mxu0 %v2869
  %4243 = vmatprep.subr.bf16.mxu0 %v2930
  %4244 = vmatpush2.bf16.msra.mxu0 %v2929
  %4245 = vmatprep.subr.bf16.mxu0 %v2926
  %4246 = vmatpush2.bf16.msra.mxu0 %v2925
  %4247 = vmatprep.subr.bf16.mxu0 %v2922
  %4248 = vmatpush2.bf16.msra.mxu0 %v2921
  %4249 = vmatprep.subr.bf16.mxu0 %v2918
  %4250 = vmatpush2.bf16.msra.mxu0 %v2917
  %4251 = vmatprep.subr.bf16.mxu0 %v2914
  %4252 = vmatpush2.bf16.msra.mxu0 %v2913
  %4253 = vmatprep.subr.bf16.mxu0 %v2910
  %4254 = vmatpush2.bf16.msra.mxu0 %v2909
  %4255 = vmatprep.subr.bf16.mxu0 %v2906
  %4256 = vmatpush2.bf16.msra.mxu0 %v2905
  %4257 = vmatprep.subr.bf16.mxu0 %v2902
  %4258 = vmatpush2.bf16.msra.mxu0 %v2901
  %4259 = vmatprep.mubr.bf16.mxu0 %v670
  %4260 = vmatmul.mubr.bf16.gmra.mxu0 %v669
  %v4261 = vpop.f32.mrf.mxu0
  %v4262 = vadd.f32 %v4221, %v4261
  %v4263 = vpop.f32.mrf.mxu0
  %v4264 = vadd.f32 %v4223, %v4263
  %v4265 = vpop.f32.mrf.mxu0
  %v4266 = vpop.f32.mrf.mxu0
  %4267 = vdwg.mxu0
  %4268 = vmatprep.subr.bf16.mxu0 %v2962
  %4269 = vmatpush1.bf16.msra.mxu0 %v2961
  %4270 = vmatprep.subr.bf16.mxu0 %v2958
  %4271 = vmatpush1.bf16.msra.mxu0 %v2957
  %4272 = vmatprep.subr.bf16.mxu0 %v2954
  %4273 = vmatpush1.bf16.msra.mxu0 %v2953
  %4274 = vmatprep.subr.bf16.mxu0 %v2950
  %4275 = vmatpush1.bf16.msra.mxu0 %v2949
  %4276 = vmatprep.subr.bf16.mxu0 %v2946
  %4277 = vmatpush1.bf16.msra.mxu0 %v2945
  %4278 = vmatprep.subr.bf16.mxu0 %v2942
  %4279 = vmatpush1.bf16.msra.mxu0 %v2941
  %4280 = vmatprep.subr.bf16.mxu0 %v2938
  %4281 = vmatpush1.bf16.msra.mxu0 %v2937
  %4282 = vmatprep.subr.bf16.mxu0 %v2934
  %4283 = vmatpush1.bf16.msra.mxu0 %v2933
  %4284 = vmatprep.subr.bf16.mxu0 %v2994
  %4285 = vmatpush2.bf16.msra.mxu0 %v2993
  %4286 = vmatprep.subr.bf16.mxu0 %v2990
  %4287 = vmatpush2.bf16.msra.mxu0 %v2989
  %4288 = vmatprep.subr.bf16.mxu0 %v2986
  %4289 = vmatpush2.bf16.msra.mxu0 %v2985
  %4290 = vmatprep.subr.bf16.mxu0 %v2982
  %4291 = vmatpush2.bf16.msra.mxu0 %v2981
  %4292 = vmatprep.subr.bf16.mxu0 %v2978
  %4293 = vmatpush2.bf16.msra.mxu0 %v2977
  %4294 = vmatprep.subr.bf16.mxu0 %v2974
  %4295 = vmatpush2.bf16.msra.mxu0 %v2973
  %4296 = vmatprep.subr.bf16.mxu0 %v2970
  %4297 = vmatpush2.bf16.msra.mxu0 %v2969
  %4298 = vmatprep.subr.bf16.mxu0 %v2966
  %4299 = vmatpush2.bf16.msra.mxu0 %v2965
  %4300 = vmatprep.mubr.bf16.mxu0 %v672
  %4301 = vmatmul.mubr.bf16.gmra.mxu0 %v671
  %v4302 = vpop.f32.mrf.mxu0
  %v4303 = vadd.f32 %v4262, %v4302
  %v4304 = vpop.f32.mrf.mxu0
  %v4305 = vadd.f32 %v4264, %v4304
  %v4306 = vpop.f32.mrf.mxu0
  %v4307 = vpop.f32.mrf.mxu0
  %4308 = vdwg.mxu0
  %v4309 = vmax.f32 %v3934, 0.0
  %v4310 = vmax.f32 %v3936, 0.0
  %v4311 = vmax.f32 %v4303, 0.0
  %v4312 = vmax.f32 %v4305, 0.0
  %v4313 = vpack.c.bf16 %v4309, %v4309
  %v4314 = vpack.c.bf16 %v4310, %v4310
  %v4315 = vpack.c.bf16 %v4311, %v4311
  %v4316 = vpack.c.bf16 %v4312, %v4312
  %v4317 = vld [vmem:[%s3] sm:$0xf]
  %v4318 = vld [vmem:[%s3 + $0x4] sm:$0xf]
  %v4319 = vld [vmem:[%s3 + $0x8] sm:$0xf]
  %v4320 = vld [vmem:[%s3 + $0xc] sm:$0xf]
  %v4321 = vld [vmem:[%s3 + $0x10] sm:$0xf]
  %v4322 = vld [vmem:[%s3 + $0x14] sm:$0xf]
  %v4323 = vld [vmem:[%s3 + $0x18] sm:$0xf]
  %v4324 = vld [vmem:[%s3 + $0x1c] sm:$0xf]
  %v4325 = vld [vmem:[%s3 + $0x20] sm:$0xf]
  %v4326 = vld [vmem:[%s3 + $0x24] sm:$0xf]
  %v4327 = vld [vmem:[%s3 + $0x28] sm:$0xf]
  %v4328 = vld [vmem:[%s3 + $0x2c] sm:$0xf]
  %v4329 = vld [vmem:[%s3 + $0x30] sm:$0xf]
  %v4330 = vld [vmem:[%s3 + $0x34] sm:$0xf]
  %v4331 = vld [vmem:[%s3 + $0x38] sm:$0xf]
  %v4332 = vld [vmem:[%s3 + $0x3c] sm:$0xf]
  %v4333 = vld [vmem:[%s3 + $0x40] sm:$0xf]
  %v4334 = vld [vmem:[%s3 + $0x44] sm:$0xf]
  %v4335 = vld [vmem:[%s3 + $0x48] sm:$0xf]
  %v4336 = vld [vmem:[%s3 + $0x4c] sm:$0xf]
  %v4337 = vld [vmem:[%s3 + $0x50] sm:$0xf]
  %v4338 = vld [vmem:[%s3 + $0x54] sm:$0xf]
  %v4339 = vld [vmem:[%s3 + $0x58] sm:$0xf]
  %v4340 = vld [vmem:[%s3 + $0x5c] sm:$0xf]
  %v4341 = vld [vmem:[%s3 + $0x60] sm:$0xf]
  %v4342 = vld [vmem:[%s3 + $0x64] sm:$0xf]
  %v4343 = vld [vmem:[%s3 + $0x68] sm:$0xf]
  %v4344 = vld [vmem:[%s3 + $0x6c] sm:$0xf]
  %v4345 = vld [vmem:[%s3 + $0x70] sm:$0xf]
  %v4346 = vld [vmem:[%s3 + $0x74] sm:$0xf]
  %v4347 = vld [vmem:[%s3 + $0x78] sm:$0xf]
  %v4348 = vld [vmem:[%s3 + $0x7c] sm:$0xf]
  %v4349 = vld [vmem:[%s3 + $0x80] sm:$0xf]
  %v4350 = vld [vmem:[%s3 + $0x84] sm:$0xf]
  %v4351 = vld [vmem:[%s3 + $0x88] sm:$0xf]
  %v4352 = vld [vmem:[%s3 + $0x8c] sm:$0xf]
  %v4353 = vld [vmem:[%s3 + $0x90] sm:$0xf]
  %v4354 = vld [vmem:[%s3 + $0x94] sm:$0xf]
  %v4355 = vld [vmem:[%s3 + $0x98] sm:$0xf]
  %v4356 = vld [vmem:[%s3 + $0x9c] sm:$0xf]
  %v4357 = vld [vmem:[%s3 + $0xa0] sm:$0xf]
  %v4358 = vld [vmem:[%s3 + $0xa4] sm:$0xf]
  %v4359 = vld [vmem:[%s3 + $0xa8] sm:$0xf]
  %v4360 = vld [vmem:[%s3 + $0xac] sm:$0xf]
  %v4361 = vld [vmem:[%s3 + $0xb0] sm:$0xf]
  %v4362 = vld [vmem:[%s3 + $0xb4] sm:$0xf]
  %v4363 = vld [vmem:[%s3 + $0xb8] sm:$0xf]
  %v4364 = vld [vmem:[%s3 + $0xbc] sm:$0xf]
  %v4365 = vld [vmem:[%s3 + $0xc0] sm:$0xf]
  %v4366 = vld [vmem:[%s3 + $0xc4] sm:$0xf]
  %v4367 = vld [vmem:[%s3 + $0xc8] sm:$0xf]
  %v4368 = vld [vmem:[%s3 + $0xcc] sm:$0xf]
  %v4369 = vld [vmem:[%s3 + $0xd0] sm:$0xf]
  %v4370 = vld [vmem:[%s3 + $0xd4] sm:$0xf]
  %v4371 = vld [vmem:[%s3 + $0xd8] sm:$0xf]
  %v4372 = vld [vmem:[%s3 + $0xdc] sm:$0xf]
  %v4373 = vld [vmem:[%s3 + $0xe0] sm:$0xf]
  %v4374 = vld [vmem:[%s3 + $0xe4] sm:$0xf]
  %v4375 = vld [vmem:[%s3 + $0xe8] sm:$0xf]
  %v4376 = vld [vmem:[%s3 + $0xec] sm:$0xf]
  %v4377 = vld [vmem:[%s3 + $0xf0] sm:$0xf]
  %v4378 = vld [vmem:[%s3 + $0xf4] sm:$0xf]
  %v4379 = vld [vmem:[%s3 + $0xf8] sm:$0xf]
  %v4380 = vld [vmem:[%s3 + $0xfc] sm:$0xf]
  %v4381 = vld [vmem:[%s4] sm:$0x1]
  %v4383 = vlaneseq
  %v4384 = vshrl.u32 %v4383, 7
  %v4385 = vsub.s32 0, %v4384
  %v4386 = vrot.slane %v4381, %v4385
  %v4452 = vunpack.c.l.b16 %v4317
  %v4453 = vunpack.c.l.b16 %v4318
  %v4454 = vunpack.c.l.b16 %v4319
  %v4455 = vunpack.c.l.b16 %v4320
  %v4456 = vunpack.c.l.b16 %v4321
  %v4457 = vunpack.c.l.b16 %v4322
  %v4458 = vunpack.c.l.b16 %v4323
  %v4459 = vunpack.c.l.b16 %v4324
  %v4460 = vunpack.c.l.b16 %v4325
  %v4461 = vunpack.c.l.b16 %v4326
  %v4462 = vunpack.c.l.b16 %v4327
  %v4463 = vunpack.c.l.b16 %v4328
  %v4464 = vunpack.c.l.b16 %v4329
  %v4465 = vunpack.c.l.b16 %v4330
  %v4466 = vunpack.c.l.b16 %v4331
  %v4467 = vunpack.c.l.b16 %v4332
  %v4468 = vunpack.c.l.b16 %v4333
  %v4469 = vunpack.c.l.b16 %v4334
  %v4470 = vunpack.c.l.b16 %v4335
  %v4471 = vunpack.c.l.b16 %v4336
  %v4472 = vunpack.c.l.b16 %v4337
  %v4473 = vunpack.c.l.b16 %v4338
  %v4474 = vunpack.c.l.b16 %v4339
  %v4475 = vunpack.c.l.b16 %v4340
  %v4476 = vunpack.c.l.b16 %v4341
  %v4477 = vunpack.c.l.b16 %v4342
  %v4478 = vunpack.c.l.b16 %v4343
  %v4479 = vunpack.c.l.b16 %v4344
  %v4480 = vunpack.c.l.b16 %v4345
  %v4481 = vunpack.c.l.b16 %v4346
  %v4482 = vunpack.c.l.b16 %v4347
  %v4483 = vunpack.c.l.b16 %v4348
  %v4484 = vunpack.c.l.b16 %v4349
  %v4485 = vunpack.c.l.b16 %v4350
  %v4486 = vunpack.c.l.b16 %v4351
  %v4487 = vunpack.c.l.b16 %v4352
  %v4488 = vunpack.c.l.b16 %v4353
  %v4489 = vunpack.c.l.b16 %v4354
  %v4490 = vunpack.c.l.b16 %v4355
  %v4491 = vunpack.c.l.b16 %v4356
  %v4492 = vunpack.c.l.b16 %v4357
  %v4493 = vunpack.c.l.b16 %v4358
  %v4494 = vunpack.c.l.b16 %v4359
  %v4495 = vunpack.c.l.b16 %v4360
  %v4496 = vunpack.c.l.b16 %v4361
  %v4497 = vunpack.c.l.b16 %v4362
  %v4498 = vunpack.c.l.b16 %v4363
  %v4499 = vunpack.c.l.b16 %v4364
  %v4500 = vunpack.c.l.b16 %v4365
  %v4501 = vunpack.c.l.b16 %v4366
  %v4502 = vunpack.c.l.b16 %v4367
  %v4503 = vunpack.c.l.b16 %v4368
  %v4504 = vunpack.c.l.b16 %v4369
  %v4505 = vunpack.c.l.b16 %v4370
  %v4506 = vunpack.c.l.b16 %v4371
  %v4507 = vunpack.c.l.b16 %v4372
  %v4508 = vunpack.c.l.b16 %v4373
  %v4509 = vunpack.c.l.b16 %v4374
  %v4510 = vunpack.c.l.b16 %v4375
  %v4511 = vunpack.c.l.b16 %v4376
  %v4512 = vunpack.c.l.b16 %v4377
  %v4513 = vunpack.c.l.b16 %v4378
  %v4514 = vunpack.c.l.b16 %v4379
  %v4515 = vunpack.c.l.b16 %v4380
  %v4516 = vpack.c.b16 %v4453, %v4452
  %v4517 = vpack.c.b16 %v4455, %v4454
  %v4518 = vpack.c.b16 %v4457, %v4456
  %v4519 = vpack.c.b16 %v4459, %v4458
  %v4520 = vpack.c.b16 %v4461, %v4460
  %v4521 = vpack.c.b16 %v4463, %v4462
  %v4522 = vpack.c.b16 %v4465, %v4464
  %v4523 = vpack.c.b16 %v4467, %v4466
  %v4524 = vpack.c.b16 %v4469, %v4468
  %v4525 = vpack.c.b16 %v4471, %v4470
  %v4526 = vpack.c.b16 %v4473, %v4472
  %v4527 = vpack.c.b16 %v4475, %v4474
  %v4528 = vpack.c.b16 %v4477, %v4476
  %v4529 = vpack.c.b16 %v4479, %v4478
  %v4530 = vpack.c.b16 %v4481, %v4480
  %v4531 = vpack.c.b16 %v4483, %v4482
  %v4532 = vpack.c.b16 %v4485, %v4484
  %v4533 = vpack.c.b16 %v4487, %v4486
  %v4534 = vpack.c.b16 %v4489, %v4488
  %v4535 = vpack.c.b16 %v4491, %v4490
  %v4536 = vpack.c.b16 %v4493, %v4492
  %v4537 = vpack.c.b16 %v4495, %v4494
  %v4538 = vpack.c.b16 %v4497, %v4496
  %v4539 = vpack.c.b16 %v4499, %v4498
  %v4540 = vpack.c.b16 %v4501, %v4500
  %v4541 = vpack.c.b16 %v4503, %v4502
  %v4542 = vpack.c.b16 %v4505, %v4504
  %v4543 = vpack.c.b16 %v4507, %v4506
  %v4544 = vpack.c.b16 %v4509, %v4508
  %v4545 = vpack.c.b16 %v4511, %v4510
  %v4546 = vpack.c.b16 %v4513, %v4512
  %v4547 = vpack.c.b16 %v4515, %v4514
  %4580 = vmatprep.subr.bf16.mxu0 0
  %4581 = vmatpush1.bf16.msra.mxu0 %v4523
  %4582 = vmatprep.subr.bf16.mxu0 0
  %4583 = vmatpush1.bf16.msra.mxu0 %v4522
  %4584 = vmatprep.subr.bf16.mxu0 0
  %4585 = vmatpush1.bf16.msra.mxu0 %v4521
  %4586 = vmatprep.subr.bf16.mxu0 0
  %4587 = vmatpush1.bf16.msra.mxu0 %v4520
  %4588 = vmatprep.subr.bf16.mxu0 0
  %4589 = vmatpush1.bf16.msra.mxu0 %v4519
  %4590 = vmatprep.subr.bf16.mxu0 0
  %4591 = vmatpush1.bf16.msra.mxu0 %v4518
  %4592 = vmatprep.subr.bf16.mxu0 0
  %4593 = vmatpush1.bf16.msra.mxu0 %v4517
  %4594 = vmatprep.subr.bf16.mxu0 0
  %4595 = vmatpush1.bf16.msra.mxu0 %v4516
  %4596 = vmatprep.subr.bf16.mxu0 0
  %4597 = vmatpush2.bf16.msra.mxu0 %v4531
  %4598 = vmatprep.subr.bf16.mxu0 0
  %4599 = vmatpush2.bf16.msra.mxu0 %v4530
  %4600 = vmatprep.subr.bf16.mxu0 0
  %4601 = vmatpush2.bf16.msra.mxu0 %v4529
  %4602 = vmatprep.subr.bf16.mxu0 0
  %4603 = vmatpush2.bf16.msra.mxu0 %v4528
  %4604 = vmatprep.subr.bf16.mxu0 0
  %4605 = vmatpush2.bf16.msra.mxu0 %v4527
  %4606 = vmatprep.subr.bf16.mxu0 0
  %4607 = vmatpush2.bf16.msra.mxu0 %v4526
  %4608 = vmatprep.subr.bf16.mxu0 0
  %4609 = vmatpush2.bf16.msra.mxu0 %v4525
  %4610 = vmatprep.subr.bf16.mxu0 0
  %4611 = vmatpush2.bf16.msra.mxu0 %v4524
  %4612 = vmatprep.mubr.bf16.mxu0 %v4314
  %4613 = vmatmul.mubr.bf16.gmra.mxu0 %v4313
  %v4614 = vpop.f32.mrf.mxu0
  %v4615 = vadd.f32 %v4386, %v4614
  %v4616 = vpop.f32.mrf.mxu0
  %v4617 = vpop.f32.mrf.mxu0
  %v4618 = vpop.f32.mrf.mxu0
  %4619 = vdwg.mxu0
  %4620 = vmatprep.subr.bf16.mxu0 0
  %4621 = vmatpush1.bf16.msra.mxu0 %v4539
  %4622 = vmatprep.subr.bf16.mxu0 0
  %4623 = vmatpush1.bf16.msra.mxu0 %v4538
  %4624 = vmatprep.subr.bf16.mxu0 0
  %4625 = vmatpush1.bf16.msra.mxu0 %v4537
  %4626 = vmatprep.subr.bf16.mxu0 0
  %4627 = vmatpush1.bf16.msra.mxu0 %v4536
  %4628 = vmatprep.subr.bf16.mxu0 0
  %4629 = vmatpush1.bf16.msra.mxu0 %v4535
  %4630 = vmatprep.subr.bf16.mxu0 0
  %4631 = vmatpush1.bf16.msra.mxu0 %v4534
  %4632 = vmatprep.subr.bf16.mxu0 0
  %4633 = vmatpush1.bf16.msra.mxu0 %v4533
  %4634 = vmatprep.subr.bf16.mxu0 0
  %4635 = vmatpush1.bf16.msra.mxu0 %v4532
  %4636 = vmatprep.subr.bf16.mxu0 0
  %4637 = vmatpush2.bf16.msra.mxu0 %v4547
  %4638 = vmatprep.subr.bf16.mxu0 0
  %4639 = vmatpush2.bf16.msra.mxu0 %v4546
  %4640 = vmatprep.subr.bf16.mxu0 0
  %4641 = vmatpush2.bf16.msra.mxu0 %v4545
  %4642 = vmatprep.subr.bf16.mxu0 0
  %4643 = vmatpush2.bf16.msra.mxu0 %v4544
  %4644 = vmatprep.subr.bf16.mxu0 0
  %4645 = vmatpush2.bf16.msra.mxu0 %v4543
  %4646 = vmatprep.subr.bf16.mxu0 0
  %4647 = vmatpush2.bf16.msra.mxu0 %v4542
  %4648 = vmatprep.subr.bf16.mxu0 0
  %4649 = vmatpush2.bf16.msra.mxu0 %v4541
  %4650 = vmatprep.subr.bf16.mxu0 0
  %4651 = vmatpush2.bf16.msra.mxu0 %v4540
  %4652 = vmatprep.mubr.bf16.mxu0 %v4316
  %4653 = vmatmul.mubr.bf16.gmra.mxu0 %v4315
  %v4654 = vpop.f32.mrf.mxu0
  %v4655 = vadd.f32 %v4615, %v4654
  %v4656 = vpop.f32.mrf.mxu0
  %v4657 = vpop.f32.mrf.mxu0
  %v4658 = vpop.f32.mrf.mxu0
  %4659 = vdwg.mxu0
  %4660 = vmax.xlane.f32.xlu0 %v4655
  %v4661 = vpop.xlane.xlu0 %4660
  %v4662 = vsub.f32 %v4655, %v4661
  %v4663 = vmul.f32 %v4662, 1.442695
  %v4664 = vpow.pop %v4663
  %4665 = vadd.xlane.f32.xlu0 %v4664
  %v4666 = vpop.xlane.xlu0 %4665
  %v4667 = vrcp.pop %v4666
  %v4668 = vmul.f32 %v4666, %v4667
  %v4669 = vsub.f32 2.0, %v4668
  %v4670 = vmul.f32 %v4667, %v4669
  %v4671 = vmul.f32 %v4664, %v4670
  %4672 = vst [vmem:[%s5] sm:$0xff] %v4671
  // Predicated region
  $region22: #{cnn_policy_forward.7} parent=0 // pred_check
    _
  $region23: #{cnn_policy_forward.7} parent=0 // pred_check_branch
    %4674 = sbr.rel (0) target = $region25
  $region24: #{cnn_policy_forward.7} parent=0 // pred_region
    _
  $region25: #{cnn_policy_forward.7} parent=0 // pred_fallthru
    _
  // Predicated region
  $region26: #{cnn_policy_forward.7} parent=0 // pred_check
    _
  $region27: #{cnn_policy_forward.7} parent=0 // pred_check_branch
    %4676 = sbr.rel (0) target = $region29
  $region28: #{cnn_policy_forward.7} parent=0 // pred_region
    _
  $region29: #{cnn_policy_forward.7} parent=0 // pred_fallthru
    _

</llo_original>
